<compile_context>
chip_gen: v6e
topology: v6e:2x2x1
jax: 0.10.0
libtpu: 0.0.40
codegen_flags: <defaults>
</compile_context>

<pallas_src>
import jax
import jax.numpy as jnp
from jax.experimental import pallas as pl
from jax.experimental.pallas import tpu as pltpu

EPS = 1e-5


def _relu6(x):
    return jnp.clip(x, 0.0, 6.0)


def _round_up(v, m):
    return -(-v // m) * m


# ----------------------------------------------------------------------------
# Pallas kernel (one grid step == Nb images)
# ----------------------------------------------------------------------------
def _make_kernel(Nb, H, W, Cin, Cmid, Cpad, stride, has_expand, use_res,
                 Ho, Wo, mxu_dtype):
    def kernel(*refs):
        i = 0
        x_ref = refs[i]; i += 1
        if has_expand:
            w1_ref, b1_ref = refs[i], refs[i + 1]; i += 2
        wdw_ref, b2_ref, w3_ref, b3_ref, out_ref, pad_ref = refs[i:i + 6]
        i += 6
        if stride == 2:
            de_ref, do_ref = refs[i], refs[i + 1]

        rows_in = Nb * H * W
        x = x_ref[...]                                    # (Nb, H, W, Cin) f32
        xm = x.reshape(rows_in, Cin)

        # ---- pointwise expand 1x1 (BN1 folded into weights) + ReLU6 : MXU ----
        if has_expand:
            y = jnp.dot(xm.astype(mxu_dtype), w1_ref[...],
                        preferred_element_type=jnp.float32)
            y4 = _relu6(y + b1_ref[...]).reshape(Nb, H, W, Cmid)
        else:
            y4 = x                                        # Cmid == Cin

        # ---- depthwise 3x3, pad=1: zero only border strips, write interior ---
        pad_ref[:, 0:1, :, :] = jnp.zeros((Nb, 1, W + 2, Cmid), jnp.float32)
        pad_ref[:, H + 1:H + 2, :, :] = jnp.zeros((Nb, 1, W + 2, Cmid), jnp.float32)
        pad_ref[:, 1:H + 1, 0:1, :] = jnp.zeros((Nb, H, 1, Cmid), jnp.float32)
        pad_ref[:, 1:H + 1, W + 1:W + 2, :] = jnp.zeros((Nb, H, 1, Cmid), jnp.float32)
        pad_ref[:, 1:H + 1, 1:W + 1, :] = y4

        wdw = wdw_ref[...]                                # (9, Cmid), BN2 folded

        if stride == 1:
            def tap(di, dj):
                return pad_ref[:, di:di + Ho, dj:dj + Wo, :]
        else:
            # De-interleave even/odd padded columns once per step so all 9 taps
            # read contiguous sublane slices (no per-tap sublane-strided loads).
            Wh = W // 2 + 1
            de_ref[...] = pad_ref[:, :, pl.ds(0, Wh, 2), :]
            do_ref[...] = pad_ref[:, :, pl.ds(1, Wh, 2), :]

            def tap(di, dj):
                src = de_ref if dj % 2 == 0 else do_ref
                c0 = dj // 2
                return src[:, pl.ds(di, Ho, 2), c0:c0 + Wo, :]

        # TODO(synk): at real MobileNetV2 hidden sizes (>=384ch) restructure to
        # a rolling 3-row window so each padded row is loaded once, not ~3x.
        acc = tap(0, 0) * wdw[0:1, :]                     # init from first tap
        for k in range(1, 9):
            acc = acc + tap(k // 3, k % 3) * wdw[k:k + 1, :]
        z = _relu6(acc + b2_ref[...])                     # BN2 bias + ReLU6

        # ---- pointwise project 1x1 (BN3 folded), no activation : MXU ---------
        zm = z.reshape(Nb * Ho * Wo, Cmid)
        o = jnp.dot(zm.astype(mxu_dtype), w3_ref[...],
                    preferred_element_type=jnp.float32)
        o = o + b3_ref[...]

        if use_res:                                       # identity residual
            o = o + xm                                    # Cin == Cpad here

        # Store is lane-dense and unmasked: last dim is already a 128-multiple,
        # and this reshape only splits the sublane (row) axis -> no relayout.
        out_ref[...] = o.reshape(Nb, Ho * Wo, Cpad)

    return kernel


# ----------------------------------------------------------------------------
# Wrapper helpers
# ----------------------------------------------------------------------------
def _fold_bn(g, b, m, v):
    s = g / jnp.sqrt(v + EPS)
    return s, b - m * s


def _pad_last(a, size):
    if a.shape[-1] == size:
        return a
    pads = [(0, 0)] * (a.ndim - 1) + [(0, size - a.shape[-1])]
    return jnp.pad(a, pads)


def _pad_axis0(a, size):
    if a.shape[0] == size:
        return a
    pads = [(0, size - a.shape[0])] + [(0, 0)] * (a.ndim - 1)
    return jnp.pad(a, pads)


def _vmem_capacity_bytes():
    try:
        return int(pltpu.get_tpu_info().vmem_capacity_bytes)
    except Exception:
        return 64 << 20            # conservative: v7x per-TensorCore VMEM


def _vmem_need_bytes(Nb, H, W, Cin, Cmid, Cpad, Ho, Wo, stride, has_expand,
                     mxu_bytes):
    lane = lambda c: _round_up(c, 128)
    sub = lambda s: _round_up(s, 8)
    B = 4
    x_b = Nb * H * sub(W) * lane(Cin) * B
    o_b = Nb * sub(Ho * Wo) * lane(Cpad) * B
    pad_b = Nb * (H + 2) * sub(W + 2) * lane(Cmid) * B
    dei_b = (2 * Nb * (H + 2) * sub(W // 2 + 1) * lane(Cmid) * B
             if stride == 2 else 0)
    y_b = Nb * H * sub(W) * lane(Cmid) * B
    tmp_b = 6 * Nb * Ho * sub(Wo) * lane(Cmid) * B        # live values / spill
    w_b = ((sub(Cin) * lane(Cmid) * mxu_bytes if has_expand else 0)
           + sub(9) * lane(Cmid) * B
           + sub(Cmid) * lane(Cpad) * mxu_bytes
           + 3 * 8 * lane(max(Cmid, Cpad)) * B)
    return 2 * (x_b + o_b) + w_b + pad_b + dei_b + y_b + tmp_b   # x/out dbl-buf


def _inverted_residual_nhwc(x_nhwc, p, inp, oup, stride, expand_ratio,
                            mxu_dtype, single_buffer_weights):
    N, H, W, C = x_nhwc.shape
    assert C == inp and stride in (1, 2)
    if stride == 2:
        assert H % 2 == 0 and W % 2 == 0
    hidden = int(round(expand_ratio * inp))
    has_expand = (expand_ratio != 1)
    use_res = (stride == 1 and inp == oup)
    Ho = (H - 1) // stride + 1
    Wo = (W - 1) // stride + 1

    # Pad the projection output channels to a 128-multiple (lane-dense,
    # unmasked store, no in-kernel relayout); pad the input channels too when
    # the identity residual needs matching lane counts.
    Cpad = _round_up(oup, 128)
    Cin_k = Cpad if use_res else inp
    Cmid = hidden if has_expand else Cin_k

    x = x_nhwc.astype(jnp.float32)
    if Cin_k != inp:
        x = _pad_last(x, Cin_k)
    # TODO(synk): when chaining blocks (esp. v5e) keep activations bf16 and in
    # padded NHWC form in HBM to skip the pad/slice passes and halve I/O bytes.

    mxu_bytes = jnp.dtype(mxu_dtype).itemsize

    # Fold BN scales into conv weights; only bias adds remain in-kernel.
    s2, b2 = _fold_bn(p['g2'], p['b2'], p['m2'], p['v2'])
    s3, b3 = _fold_bn(p['g3'], p['b3'], p['m3'], p['v3'])
    wdwf = (jnp.transpose(p['w2'][:, 0, :, :], (1, 2, 0)).reshape(9, hidden)
            * s2[None, :])
    wdwf = _pad_last(wdwf.astype(jnp.float32), Cmid)
    b2v = _pad_last(b2.reshape(1, -1).astype(jnp.float32), Cmid)
    w3f = (p['w3'][:, :, 0, 0] * s3[:, None]).T                    # (hidden, oup)
    w3f = _pad_last(_pad_axis0(w3f, Cmid), Cpad).astype(mxu_dtype)
    b3v = _pad_last(b3.reshape(1, -1).astype(jnp.float32), Cpad)

    # --- VMEM budget and Nb (images per grid step) ---------------------------
    vmem_cap = _vmem_capacity_bytes()
    budget = max(min(int(vmem_cap * 0.75), vmem_cap - (16 << 20), 96 << 20),
                 24 << 20)

    def need(nb):
        return _vmem_need_bytes(nb, H, W, Cin_k, Cmid, Cpad, Ho, Wo, stride,
                                has_expand, mxu_bytes)

    if need(1) > budget:
        # TODO(synk): add H-row tiling with a 1-row halo for configs whose
        # per-image footprint exceeds the per-core VMEM budget (v7x: 64 MiB).
        raise NotImplementedError("per-image tile exceeds VMEM budget")

    # Amortize the ~0.35us/step overhead and tiny per-image DMAs, but keep
    # >= ~6 grid steps so each of v7x's two TensorCores still pipelines.
    nb_cap = min(32, max(1, N // 6))
    Nb = 1
    for cand in range(nb_cap, 0, -1):
        if N % cand == 0 and need(cand) <= budget:
            Nb = cand
            break
    vmem_limit = int(min(budget, need(Nb) + (8 << 20)))

    # --- specs / args ---------------------------------------------------------
    def cspec(shape):
        idx_map = lambda n: (0,) * len(shape)
        if single_buffer_weights:
            return pl.BlockSpec(shape, idx_map, pipeline_mode=pl.Buffered(1))
        return pl.BlockSpec(shape, idx_map)

    args = [x]
    in_specs = [pl.BlockSpec((Nb, H, W, Cin_k), lambda n: (n, 0, 0, 0))]
    if has_expand:
        s1, b1 = _fold_bn(p['g1'], p['b1'], p['m1'], p['v1'])
        w1f = (p['w1'][:, :, 0, 0] * s1[:, None]).T                # (inp, hidden)
        w1f = _pad_axis0(w1f, Cin_k).astype(mxu_dtype)
        args += [w1f, b1.reshape(1, -1).astype(jnp.float32)]
        in_specs += [cspec((Cin_k, hidden)), cspec((1, hidden))]
    args += [wdwf, b2v, w3f, b3v]
    in_specs += [cspec((9, Cmid)), cspec((1, Cmid)),
                 cspec((Cmid, Cpad)), cspec((1, Cpad))]

    scratch = [pltpu.VMEM((Nb, H + 2, W + 2, Cmid), jnp.float32)]
    if stride == 2:
        Wh = W // 2 + 1
        scratch += [pltpu.VMEM((Nb, H + 2, Wh, Cmid), jnp.float32),
                    pltpu.VMEM((Nb, H + 2, Wh, Cmid), jnp.float32)]

    kernel = _make_kernel(Nb, H, W, Cin_k, Cmid, Cpad, stride, has_expand,
                          use_res, Ho, Wo, mxu_dtype)

    out = pl.pallas_call(
        kernel,
        out_shape=jax.ShapeDtypeStruct((N, Ho * Wo, Cpad), jnp.float32),
        grid_spec=pltpu.PrefetchScalarGridSpec(
            num_scalar_prefetch=0,
            grid=(N // Nb,),
            in_specs=in_specs,
            out_specs=pl.BlockSpec((Nb, Ho * Wo, Cpad), lambda n: (n, 0, 0)),
            scratch_shapes=scratch),
        compiler_params=pltpu.CompilerParams(
            dimension_semantics=("parallel",),
            vmem_limit_bytes=vmem_limit),
    )(*args)

    out = out.reshape(N, Ho, Wo, Cpad)
    return out[..., :oup] if Cpad != oup else out


def inverted_residual_pallas_nhwc(x_nhwc, p, inp, oup, stride, expand_ratio,
                                  mxu_dtype=jnp.bfloat16):
    """InvertedResidual forward, NHWC in -> NHWC out (inference-mode BN)."""
    try:
        return _inverted_residual_nhwc(x_nhwc, p, inp, oup, stride,
                                       expand_ratio, mxu_dtype, True)
    except Exception:
        # Fallback for JAX builds without BlockSpec(pipeline_mode=pl.Buffered(1));
        # any unrelated error re-raises identically from this second attempt.
        return _inverted_residual_nhwc(x_nhwc, p, inp, oup, stride,
                                       expand_ratio, mxu_dtype, False)


def inverted_residual_pallas(x_nchw, p, inp, oup, stride, expand_ratio,
                             mxu_dtype=jnp.bfloat16):
    # NCHW adapter for PyTorch parity.  Prefer the NHWC entry point when
    # chaining blocks to avoid the two extra HBM transpose passes.
    x_nhwc = jnp.transpose(x_nchw, (0, 2, 3, 1))
    out = inverted_residual_pallas_nhwc(x_nhwc, p, inp, oup, stride,
                                        expand_ratio, mxu_dtype)
    return jnp.transpose(out, (0, 3, 1, 2))


# ----------------------------------------------------------------------------
# Deterministic parameter init (shapes follow the PyTorch __init__)
# ----------------------------------------------------------------------------
def init_params(key, inp, oup, expand_ratio):
    hidden = int(round(expand_ratio * inp))
    keys = iter(jax.random.split(key, 24))
    nrm = lambda shape, s=0.5: s * jax.random.normal(next(keys), shape, jnp.float32)
    uni = lambda shape: jax.random.uniform(next(keys), shape, jnp.float32, 0.5, 1.5)
    p = {}
    if expand_ratio != 1:
        p.update({'w1': nrm((hidden, inp, 1, 1)),
                  'g1': 1.0 + nrm((hidden,), 0.1), 'b1': nrm((hidden,), 0.1),
                  'm1': nrm((hidden,), 0.1), 'v1': uni((hidden,))})
    p.update({'w2': nrm((hidden, 1, 3, 3)),
              'g2': 1.0 + nrm((hidden,), 0.1), 'b2': nrm((hidden,), 0.1),
              'm2': nrm((hidden,), 0.1), 'v2': uni((hidden,)),
              'w3': nrm((oup, hidden, 1, 1)),
              'g3': 1.0 + nrm((oup,), 0.1), 'b3': nrm((oup,), 0.1),
              'm3': nrm((oup,), 0.1), 'v3': uni((oup,))})
    return p


# ----------------------------------------------------------------------------
# Pure-JAX reference (mirrors the PyTorch forward, inference-mode BN)
# ----------------------------------------------------------------------------
def ref_forward(x, p, inp, oup, stride, expand_ratio):
    hidden = int(round(expand_ratio * inp))

    def conv(x, w, s=1, pad=0, groups=1):
        return jax.lax.conv_general_dilated(
            x, w, window_strides=(s, s), padding=[(pad, pad), (pad, pad)],
            dimension_numbers=('NCHW', 'OIHW', 'NCHW'),
            feature_group_count=groups)

    def bn(x, g, b, m, v):
        sc = (g / jnp.sqrt(v + EPS))[None, :, None, None]
        return (x - m[None, :, None, None]) * sc + b[None, :, None, None]

    y = x
    if expand_ratio != 1:
        y = _relu6(bn(conv(y, p['w1']), p['g1'], p['b1'], p['m1'], p['v1']))
    y = _relu6(bn(conv(y, p['w2'], s=stride, pad=1, groups=hidden),
                  p['g2'], p['b2'], p['m2'], p['v2']))
    y = bn(conv(y, p['w3']), p['g3'], p['b3'], p['m3'], p['v3'])
    if stride == 1 and inp == oup:
        y = x + y
    return y


# ----------------------------------------------------------------------------
if __name__ == "__main__":
    key = jax.random.PRNGKey(0)
    configs = [
        dict(inp=4, oup=4, stride=1, expand_ratio=4),   # identity residual
        dict(inp=4, oup=8, stride=1, expand_ratio=4),   # no residual (inp != oup)
        dict(inp=4, oup=8, stride=2, expand_ratio=4),   # stride-2 downsample
        dict(inp=8, oup=8, stride=1, expand_ratio=1),   # no expand conv + residual
    ]
    for i, cfg in enumerate(configs):
        key, kp, kx = jax.random.split(key, 3)
        p = init_params(kp, cfg['inp'], cfg['oup'], cfg['expand_ratio'])
        x = jax.random.normal(kx, (2, cfg['inp'], 16, 16), jnp.float32)

        ref = ref_forward(x, p, **cfg)

        # default path: bf16 MXU matmuls (f32 accumulate, f32 VPU math)
        out = jax.block_until_ready(inverted_residual_pallas(x, p, **cfg))
        assert out.shape == ref.shape, (out.shape, ref.shape)
        rel = float(jnp.max(jnp.abs(out - ref)) / (jnp.max(jnp.abs(ref)) + 1e-6))
        assert rel < 5e-2, f"config {i} (bf16 mxu): relative error too large: {rel}"

        # f32 MXU path (tighter tolerance)
        out32 = jax.block_until_ready(
            inverted_residual_pallas(x, p, mxu_dtype=jnp.float32, **cfg))
        rel32 = float(jnp.max(jnp.abs(out32 - ref)) / (jnp.max(jnp.abs(ref)) + 1e-6))
        assert rel32 < 1e-2, f"config {i} (f32 mxu): relative error too large: {rel32}"

    # Multi-image blocking path (Nb > 1, several grid steps).
    cfg = configs[0]
    key, kp, kx = jax.random.split(key, 3)
    p = init_params(kp, cfg['inp'], cfg['oup'], cfg['expand_ratio'])
    x = jax.random.normal(kx, (16, cfg['inp'], 16, 16), jnp.float32)
    ref = ref_forward(x, p, **cfg)
    out = jax.block_until_ready(inverted_residual_pallas(x, p, **cfg))
    rel = float(jnp.max(jnp.abs(out - ref)) / (jnp.max(jnp.abs(ref)) + 1e-6))
    assert rel < 5e-2, f"batched (Nb>1) run: relative error too large: {rel}"

    print("KERNEL_OK")
</pallas_src>

<mosaic_0001>
module attributes {stable_mosaic.version = 11 : i64} {
  func.func @kernel(%arg0: i32, %arg1: memref<1x16x16x128xf32, #tpu.memory_space<vmem>>, %arg2: memref<128x16xbf16, #tpu.memory_space<vmem>>, %arg3: memref<1x16xf32, #tpu.memory_space<vmem>>, %arg4: memref<9x16xf32, #tpu.memory_space<vmem>>, %arg5: memref<1x16xf32, #tpu.memory_space<vmem>>, %arg6: memref<16x128xbf16, #tpu.memory_space<vmem>>, %arg7: memref<1x128xf32, #tpu.memory_space<vmem>>, %arg8: memref<1x256x128xf32, #tpu.memory_space<vmem>>, %arg9: memref<1x18x18x16xf32, #tpu.memory_space<vmem>>) attributes {dimension_semantics = [#tpu.dimension_semantics<parallel>], iteration_bounds = array<i64: 2>, scalar_prefetch = 0 : i64, scratch_operands = 1 : i64, tpu.core_type = #tpu.core_type<tc>, window_params = [{transform_indices = @transform_0, window_bounds = array<i64: 1, 16, 16, 128>}, {pipeline_mode = #tpu.pipeline_mode<synchronous>, transform_indices = @transform_1, window_bounds = array<i64: 128, 16>}, {pipeline_mode = #tpu.pipeline_mode<synchronous>, transform_indices = @transform_2, window_bounds = array<i64: 1, 16>}, {pipeline_mode = #tpu.pipeline_mode<synchronous>, transform_indices = @transform_3, window_bounds = array<i64: 9, 16>}, {pipeline_mode = #tpu.pipeline_mode<synchronous>, transform_indices = @transform_4, window_bounds = array<i64: 1, 16>}, {pipeline_mode = #tpu.pipeline_mode<synchronous>, transform_indices = @transform_5, window_bounds = array<i64: 16, 128>}, {pipeline_mode = #tpu.pipeline_mode<synchronous>, transform_indices = @transform_6, window_bounds = array<i64: 1, 128>}, {transform_indices = @transform_7, window_bounds = array<i64: 1, 256, 128>}]} {
    %c0 = arith.constant 0 : index
    %c0_0 = arith.constant 0 : index
    %c0_1 = arith.constant 0 : index
    %c0_2 = arith.constant 0 : index
    %0 = vector.load %arg1[%c0, %c0_0, %c0_1, %c0_2] : memref<1x16x16x128xf32, #tpu.memory_space<vmem>>, vector<1x16x16x128xf32>
    %1 = vector.shape_cast %0 : vector<1x16x16x128xf32> to vector<256x128xf32>
    %2 = arith.truncf %1 : vector<256x128xf32> to vector<256x128xbf16>
    %c0_3 = arith.constant 0 : index
    %c0_4 = arith.constant 0 : index
    %3 = vector.load %arg2[%c0_3, %c0_4] : memref<128x16xbf16, #tpu.memory_space<vmem>>, vector<128x16xbf16>
    %cst = arith.constant dense<0.000000e+00> : vector<256x16xf32>
    %4 = tpu.matmul %2, %3, %cst {dimension_numbers = #tpu.dot_dimension_numbers<[1], [0], [0], [1], [0, 0, 1, 1], [], []>} : vector<256x128xbf16>, vector<128x16xbf16>, vector<256x16xf32> -> vector<256x16xf32>
    %c0_5 = arith.constant 0 : index
    %c0_6 = arith.constant 0 : index
    %5 = vector.load %arg3[%c0_5, %c0_6] : memref<1x16xf32, #tpu.memory_space<vmem>>, vector<1x16xf32>
    %6 = vector.broadcast %5 : vector<1x16xf32> to vector<256x16xf32>
    %7 = arith.addf %4, %6 : vector<256x16xf32>
    %cst_7 = arith.constant 0.000000e+00 : f32
    %cst_8 = arith.constant 6.000000e+00 : f32
    %8 = vector.broadcast %cst_7 : f32 to vector<256x16xf32>
    %9 = arith.maximumf %8, %7 : vector<256x16xf32>
    %10 = vector.broadcast %cst_8 : f32 to vector<256x16xf32>
    %11 = arith.minimumf %10, %9 : vector<256x16xf32>
    %12 = vector.shape_cast %11 : vector<256x16xf32> to vector<1x16x16x16xf32>
    %cst_9 = arith.constant 0.000000e+00 : f32
    %13 = vector.broadcast %cst_9 : f32 to vector<1x1x18x16xf32>
    %c0_10 = arith.constant 0 : index
    %c0_11 = arith.constant 0 : index
    %c0_12 = arith.constant 0 : index
    %c0_13 = arith.constant 0 : index
    %14 = vector.load %arg9[%c0_10, %c0_11, %c0_12, %c0_13] : memref<1x18x18x16xf32, #tpu.memory_space<vmem>>, vector<1x1x18x16xf32>
    tpu.vector_store %arg9[%c0_10, %c0_11, %c0_12, %c0_13], %13 {strides = array<i32>} : memref<1x18x18x16xf32, #tpu.memory_space<vmem>>, vector<1x1x18x16xf32>,
    %cst_14 = arith.constant 0.000000e+00 : f32
    %15 = vector.broadcast %cst_14 : f32 to vector<1x1x18x16xf32>
    %c0_15 = arith.constant 0 : index
    %c17 = arith.constant 17 : index
    %c0_16 = arith.constant 0 : index
    %c0_17 = arith.constant 0 : index
    %16 = vector.load %arg9[%c0_15, %c17, %c0_16, %c0_17] : memref<1x18x18x16xf32, #tpu.memory_space<vmem>>, vector<1x1x18x16xf32>
    tpu.vector_store %arg9[%c0_15, %c17, %c0_16, %c0_17], %15 {strides = array<i32>} : memref<1x18x18x16xf32, #tpu.memory_space<vmem>>, vector<1x1x18x16xf32>,
    %cst_18 = arith.constant 0.000000e+00 : f32
    %17 = vector.broadcast %cst_18 : f32 to vector<1x16x1x16xf32>
    %c0_19 = arith.constant 0 : index
    %c1 = arith.constant 1 : index
    %c0_20 = arith.constant 0 : index
    %c0_21 = arith.constant 0 : index
    %18 = vector.load %arg9[%c0_19, %c1, %c0_20, %c0_21] : memref<1x18x18x16xf32, #tpu.memory_space<vmem>>, vector<1x16x1x16xf32>
    tpu.vector_store %arg9[%c0_19, %c1, %c0_20, %c0_21], %17 {strides = array<i32>} : memref<1x18x18x16xf32, #tpu.memory_space<vmem>>, vector<1x16x1x16xf32>,
    %cst_22 = arith.constant 0.000000e+00 : f32
    %19 = vector.broadcast %cst_22 : f32 to vector<1x16x1x16xf32>
    %c0_23 = arith.constant 0 : index
    %c1_24 = arith.constant 1 : index
    %c17_25 = arith.constant 17 : index
    %c0_26 = arith.constant 0 : index
    %20 = vector.load %arg9[%c0_23, %c1_24, %c17_25, %c0_26] : memref<1x18x18x16xf32, #tpu.memory_space<vmem>>, vector<1x16x1x16xf32>
    tpu.vector_store %arg9[%c0_23, %c1_24, %c17_25, %c0_26], %19 {strides = array<i32>} : memref<1x18x18x16xf32, #tpu.memory_space<vmem>>, vector<1x16x1x16xf32>,
    %c0_27 = arith.constant 0 : index
    %c1_28 = arith.constant 1 : index
    %c1_29 = arith.constant 1 : index
    %c0_30 = arith.constant 0 : index
    %21 = vector.load %arg9[%c0_27, %c1_28, %c1_29, %c0_30] : memref<1x18x18x16xf32, #tpu.memory_space<vmem>>, vector<1x16x16x16xf32>
    tpu.vector_store %arg9[%c0_27, %c1_28, %c1_29, %c0_30], %12 {strides = array<i32>} : memref<1x18x18x16xf32, #tpu.memory_space<vmem>>, vector<1x16x16x16xf32>,
    %c0_31 = arith.constant 0 : index
    %c0_32 = arith.constant 0 : index
    %22 = vector.load %arg4[%c0_31, %c0_32] : memref<9x16xf32, #tpu.memory_space<vmem>>, vector<9x16xf32>
    %c0_33 = arith.constant 0 : index
    %c0_34 = arith.constant 0 : index
    %c0_35 = arith.constant 0 : index
    %c0_36 = arith.constant 0 : index
    %23 = vector.load %arg9[%c0_33, %c0_34, %c0_35, %c0_36] : memref<1x18x18x16xf32, #tpu.memory_space<vmem>>, vector<1x16x16x16xf32>
    %24 = vector.extract_strided_slice %22 {offsets = [0, 0], sizes = [1, 16], strides = [1, 1]} : vector<9x16xf32> to vector<1x16xf32>
    %25 = vector.shape_cast %24 : vector<1x16xf32> to vector<1x1x1x16xf32>
    %26 = vector.broadcast %25 : vector<1x1x1x16xf32> to vector<1x16x16x16xf32>
    %27 = arith.mulf %23, %26 : vector<1x16x16x16xf32>
    %c0_37 = arith.constant 0 : index
    %c0_38 = arith.constant 0 : index
    %c1_39 = arith.constant 1 : index
    %c0_40 = arith.constant 0 : index
    %28 = vector.load %arg9[%c0_37, %c0_38, %c1_39, %c0_40] : memref<1x18x18x16xf32, #tpu.memory_space<vmem>>, vector<1x16x16x16xf32>
    %29 = vector.extract_strided_slice %22 {offsets = [1, 0], sizes = [1, 16], strides = [1, 1]} : vector<9x16xf32> to vector<1x16xf32>
    %30 = vector.shape_cast %29 : vector<1x16xf32> to vector<1x1x1x16xf32>
    %31 = vector.broadcast %30 : vector<1x1x1x16xf32> to vector<1x16x16x16xf32>
    %32 = arith.mulf %28, %31 : vector<1x16x16x16xf32>
    %33 = arith.addf %27, %32 : vector<1x16x16x16xf32>
    %c0_41 = arith.constant 0 : index
    %c0_42 = arith.constant 0 : index
    %c2 = arith.constant 2 : index
    %c0_43 = arith.constant 0 : index
    %34 = vector.load %arg9[%c0_41, %c0_42, %c2, %c0_43] : memref<1x18x18x16xf32, #tpu.memory_space<vmem>>, vector<1x16x16x16xf32>
    %35 = vector.extract_strided_slice %22 {offsets = [2, 0], sizes = [1, 16], strides = [1, 1]} : vector<9x16xf32> to vector<1x16xf32>
    %36 = vector.shape_cast %35 : vector<1x16xf32> to vector<1x1x1x16xf32>
    %37 = vector.broadcast %36 : vector<1x1x1x16xf32> to vector<1x16x16x16xf32>
    %38 = arith.mulf %34, %37 : vector<1x16x16x16xf32>
    %39 = arith.addf %33, %38 : vector<1x16x16x16xf32>
    %c0_44 = arith.constant 0 : index
    %c1_45 = arith.constant 1 : index
    %c0_46 = arith.constant 0 : index
    %c0_47 = arith.constant 0 : index
    %40 = vector.load %arg9[%c0_44, %c1_45, %c0_46, %c0_47] : memref<1x18x18x16xf32, #tpu.memory_space<vmem>>, vector<1x16x16x16xf32>
    %41 = vector.extract_strided_slice %22 {offsets = [3, 0], sizes = [1, 16], strides = [1, 1]} : vector<9x16xf32> to vector<1x16xf32>
    %42 = vector.shape_cast %41 : vector<1x16xf32> to vector<1x1x1x16xf32>
    %43 = vector.broadcast %42 : vector<1x1x1x16xf32> to vector<1x16x16x16xf32>
    %44 = arith.mulf %40, %43 : vector<1x16x16x16xf32>
    %45 = arith.addf %39, %44 : vector<1x16x16x16xf32>
    %c0_48 = arith.constant 0 : index
    %c1_49 = arith.constant 1 : index
    %c1_50 = arith.constant 1 : index
    %c0_51 = arith.constant 0 : index
    %46 = vector.load %arg9[%c0_48, %c1_49, %c1_50, %c0_51] : memref<1x18x18x16xf32, #tpu.memory_space<vmem>>, vector<1x16x16x16xf32>
    %47 = vector.extract_strided_slice %22 {offsets = [4, 0], sizes = [1, 16], strides = [1, 1]} : vector<9x16xf32> to vector<1x16xf32>
    %48 = vector.shape_cast %47 : vector<1x16xf32> to vector<1x1x1x16xf32>
    %49 = vector.broadcast %48 : vector<1x1x1x16xf32> to vector<1x16x16x16xf32>
    %50 = arith.mulf %46, %49 : vector<1x16x16x16xf32>
    %51 = arith.addf %45, %50 : vector<1x16x16x16xf32>
    %c0_52 = arith.constant 0 : index
    %c1_53 = arith.constant 1 : index
    %c2_54 = arith.constant 2 : index
    %c0_55 = arith.constant 0 : index
    %52 = vector.load %arg9[%c0_52, %c1_53, %c2_54, %c0_55] : memref<1x18x18x16xf32, #tpu.memory_space<vmem>>, vector<1x16x16x16xf32>
    %53 = vector.extract_strided_slice %22 {offsets = [5, 0], sizes = [1, 16], strides = [1, 1]} : vector<9x16xf32> to vector<1x16xf32>
    %54 = vector.shape_cast %53 : vector<1x16xf32> to vector<1x1x1x16xf32>
    %55 = vector.broadcast %54 : vector<1x1x1x16xf32> to vector<1x16x16x16xf32>
    %56 = arith.mulf %52, %55 : vector<1x16x16x16xf32>
    %57 = arith.addf %51, %56 : vector<1x16x16x16xf32>
    %c0_56 = arith.constant 0 : index
    %c2_57 = arith.constant 2 : index
    %c0_58 = arith.constant 0 : index
    %c0_59 = arith.constant 0 : index
    %58 = vector.load %arg9[%c0_56, %c2_57, %c0_58, %c0_59] : memref<1x18x18x16xf32, #tpu.memory_space<vmem>>, vector<1x16x16x16xf32>
    %59 = vector.extract_strided_slice %22 {offsets = [6, 0], sizes = [1, 16], strides = [1, 1]} : vector<9x16xf32> to vector<1x16xf32>
    %60 = vector.shape_cast %59 : vector<1x16xf32> to vector<1x1x1x16xf32>
    %61 = vector.broadcast %60 : vector<1x1x1x16xf32> to vector<1x16x16x16xf32>
    %62 = arith.mulf %58, %61 : vector<1x16x16x16xf32>
    %63 = arith.addf %57, %62 : vector<1x16x16x16xf32>
    %c0_60 = arith.constant 0 : index
    %c2_61 = arith.constant 2 : index
    %c1_62 = arith.constant 1 : index
    %c0_63 = arith.constant 0 : index
    %64 = vector.load %arg9[%c0_60, %c2_61, %c1_62, %c0_63] : memref<1x18x18x16xf32, #tpu.memory_space<vmem>>, vector<1x16x16x16xf32>
    %65 = vector.extract_strided_slice %22 {offsets = [7, 0], sizes = [1, 16], strides = [1, 1]} : vector<9x16xf32> to vector<1x16xf32>
    %66 = vector.shape_cast %65 : vector<1x16xf32> to vector<1x1x1x16xf32>
    %67 = vector.broadcast %66 : vector<1x1x1x16xf32> to vector<1x16x16x16xf32>
    %68 = arith.mulf %64, %67 : vector<1x16x16x16xf32>
    %69 = arith.addf %63, %68 : vector<1x16x16x16xf32>
    %c0_64 = arith.constant 0 : index
    %c2_65 = arith.constant 2 : index
    %c2_66 = arith.constant 2 : index
    %c0_67 = arith.constant 0 : index
    %70 = vector.load %arg9[%c0_64, %c2_65, %c2_66, %c0_67] : memref<1x18x18x16xf32, #tpu.memory_space<vmem>>, vector<1x16x16x16xf32>
    %71 = vector.extract_strided_slice %22 {offsets = [8, 0], sizes = [1, 16], strides = [1, 1]} : vector<9x16xf32> to vector<1x16xf32>
    %72 = vector.shape_cast %71 : vector<1x16xf32> to vector<1x1x1x16xf32>
    %73 = vector.broadcast %72 : vector<1x1x1x16xf32> to vector<1x16x16x16xf32>
    %74 = arith.mulf %70, %73 : vector<1x16x16x16xf32>
    %75 = arith.addf %69, %74 : vector<1x16x16x16xf32>
    %c0_68 = arith.constant 0 : index
    %c0_69 = arith.constant 0 : index
    %76 = vector.load %arg5[%c0_68, %c0_69] : memref<1x16xf32, #tpu.memory_space<vmem>>, vector<1x16xf32>
    %77 = vector.shape_cast %76 : vector<1x16xf32> to vector<1x1x1x16xf32>
    %78 = vector.broadcast %77 : vector<1x1x1x16xf32> to vector<1x16x16x16xf32>
    %79 = arith.addf %75, %78 : vector<1x16x16x16xf32>
    %cst_70 = arith.constant 0.000000e+00 : f32
    %cst_71 = arith.constant 6.000000e+00 : f32
    %80 = vector.broadcast %cst_70 : f32 to vector<1x16x16x16xf32>
    %81 = arith.maximumf %80, %79 : vector<1x16x16x16xf32>
    %82 = vector.broadcast %cst_71 : f32 to vector<1x16x16x16xf32>
    %83 = arith.minimumf %82, %81 : vector<1x16x16x16xf32>
    %84 = vector.shape_cast %83 : vector<1x16x16x16xf32> to vector<256x16xf32>
    %85 = arith.truncf %84 : vector<256x16xf32> to vector<256x16xbf16>
    %c0_72 = arith.constant 0 : index
    %c0_73 = arith.constant 0 : index
    %86 = vector.load %arg6[%c0_72, %c0_73] : memref<16x128xbf16, #tpu.memory_space<vmem>>, vector<16x128xbf16>
    %cst_74 = arith.constant dense<0.000000e+00> : vector<256x128xf32>
    %87 = tpu.matmul %85, %86, %cst_74 {dimension_numbers = #tpu.dot_dimension_numbers<[1], [0], [0], [1], [0, 0, 1, 1], [], []>} : vector<256x16xbf16>, vector<16x128xbf16>, vector<256x128xf32> -> vector<256x128xf32>
    %c0_75 = arith.constant 0 : index
    %c0_76 = arith.constant 0 : index
    %88 = vector.load %arg7[%c0_75, %c0_76] : memref<1x128xf32, #tpu.memory_space<vmem>>, vector<1x128xf32>
    %89 = vector.broadcast %88 : vector<1x128xf32> to vector<256x128xf32>
    %90 = arith.addf %87, %89 : vector<256x128xf32>
    %91 = arith.addf %90, %1 : vector<256x128xf32>
    %92 = vector.shape_cast %91 : vector<256x128xf32> to vector<1x256x128xf32>
    %c0_77 = arith.constant 0 : index
    %c0_78 = arith.constant 0 : index
    %c0_79 = arith.constant 0 : index
    %93 = vector.load %arg8[%c0_77, %c0_78, %c0_79] : memref<1x256x128xf32, #tpu.memory_space<vmem>>, vector<1x256x128xf32>
    tpu.vector_store %arg8[%c0_77, %c0_78, %c0_79], %92 {strides = array<i32>} : memref<1x256x128xf32, #tpu.memory_space<vmem>>, vector<1x256x128xf32>,
    return
  }
  func.func @transform_0(%arg0: i32) -> (i32, i32, i32, i32) {
    %c0_i32 = arith.constant 0 : i32
    %c0_i32_0 = arith.constant 0 : i32
    %c0_i32_1 = arith.constant 0 : i32
    %c0_i32_2 = arith.constant 0 : i32
    return %arg0, %c0_i32, %c0_i32_0, %c0_i32_1 : i32, i32, i32, i32
  }
  func.func @transform_1(%arg0: i32) -> (i32, i32) {
    %c0_i32 = arith.constant 0 : i32
    %c0_i32_0 = arith.constant 0 : i32
    %c0_i32_1 = arith.constant 0 : i32
    return %c0_i32, %c0_i32_0 : i32, i32
  }
  func.func @transform_2(%arg0: i32) -> (i32, i32) {
    %c0_i32 = arith.constant 0 : i32
    %c0_i32_0 = arith.constant 0 : i32
    %c0_i32_1 = arith.constant 0 : i32
    return %c0_i32, %c0_i32_0 : i32, i32
  }
  func.func @transform_3(%arg0: i32) -> (i32, i32) {
    %c0_i32 = arith.constant 0 : i32
    %c0_i32_0 = arith.constant 0 : i32
    %c0_i32_1 = arith.constant 0 : i32
    return %c0_i32, %c0_i32_0 : i32, i32
  }
  func.func @transform_4(%arg0: i32) -> (i32, i32) {
    %c0_i32 = arith.constant 0 : i32
    %c0_i32_0 = arith.constant 0 : i32
    %c0_i32_1 = arith.constant 0 : i32
    return %c0_i32, %c0_i32_0 : i32, i32
  }
  func.func @transform_5(%arg0: i32) -> (i32, i32) {
    %c0_i32 = arith.constant 0 : i32
    %c0_i32_0 = arith.constant 0 : i32
    %c0_i32_1 = arith.constant 0 : i32
    return %c0_i32, %c0_i32_0 : i32, i32
  }
  func.func @transform_6(%arg0: i32) -> (i32, i32) {
    %c0_i32 = arith.constant 0 : i32
    %c0_i32_0 = arith.constant 0 : i32
    %c0_i32_1 = arith.constant 0 : i32
    return %c0_i32, %c0_i32_0 : i32, i32
  }
  func.func @transform_7(%arg0: i32) -> (i32, i32, i32) {
    %c0_i32 = arith.constant 0 : i32
    %c0_i32_0 = arith.constant 0 : i32
    %c0_i32_1 = arith.constant 0 : i32
    return %arg0, %c0_i32, %c0_i32_0 : i32, i32, i32
  }
}

module attributes {stable_mosaic.version = 11 : i64} {
  func.func @kernel(%arg0: i32, %arg1: memref<1x16x16x128xf32, #tpu.memory_space<vmem>>, %arg2: memref<128x16xbf16, #tpu.memory_space<vmem>>, %arg3: memref<1x16xf32, #tpu.memory_space<vmem>>, %arg4: memref<9x16xf32, #tpu.memory_space<vmem>>, %arg5: memref<1x16xf32, #tpu.memory_space<vmem>>, %arg6: memref<16x128xbf16, #tpu.memory_space<vmem>>, %arg7: memref<1x128xf32, #tpu.memory_space<vmem>>, %arg8: memref<1x256x128xf32, #tpu.memory_space<vmem>>, %arg9: memref<1x18x18x16xf32, #tpu.memory_space<vmem>>) attributes {dimension_semantics = [#tpu.dimension_semantics<parallel>], iteration_bounds = array<i64: 2>, scalar_prefetch = 0 : i64, scratch_operands = 1 : i64, tpu.core_type = #tpu.core_type<tc>, window_params = [{transform_indices = @transform_0, window_bounds = array<i64: 1, 16, 16, 128>}, {pipeline_mode = #tpu.pipeline_mode<synchronous>, transform_indices = @transform_1, window_bounds = array<i64: 128, 16>}, {pipeline_mode = #tpu.pipeline_mode<synchronous>, transform_indices = @transform_2, window_bounds = array<i64: 1, 16>}, {pipeline_mode = #tpu.pipeline_mode<synchronous>, transform_indices = @transform_3, window_bounds = array<i64: 9, 16>}, {pipeline_mode = #tpu.pipeline_mode<synchronous>, transform_indices = @transform_4, window_bounds = array<i64: 1, 16>}, {pipeline_mode = #tpu.pipeline_mode<synchronous>, transform_indices = @transform_5, window_bounds = array<i64: 16, 128>}, {pipeline_mode = #tpu.pipeline_mode<synchronous>, transform_indices = @transform_6, window_bounds = array<i64: 1, 128>}, {transform_indices = @transform_7, window_bounds = array<i64: 1, 256, 128>}]} {
    %c0 = arith.constant 0 : index
    %c0_0 = arith.constant 0 : index
    %c0_1 = arith.constant 0 : index
    %c0_2 = arith.constant 0 : index
    %0 = vector.load %arg1[%c0, %c0_0, %c0_1, %c0_2] : memref<1x16x16x128xf32, #tpu.memory_space<vmem>>, vector<1x16x16x128xf32>
    %1 = vector.shape_cast %0 : vector<1x16x16x128xf32> to vector<256x128xf32>
    %2 = arith.truncf %1 : vector<256x128xf32> to vector<256x128xbf16>
    %c0_3 = arith.constant 0 : index
    %c0_4 = arith.constant 0 : index
    %3 = vector.load %arg2[%c0_3, %c0_4] : memref<128x16xbf16, #tpu.memory_space<vmem>>, vector<128x16xbf16>
    %cst = arith.constant dense<0.000000e+00> : vector<256x16xf32>
    %4 = tpu.matmul %2, %3, %cst {dimension_numbers = #tpu.dot_dimension_numbers<[1], [0], [0], [1], [0, 0, 1, 1], [], []>} : vector<256x128xbf16>, vector<128x16xbf16>, vector<256x16xf32> -> vector<256x16xf32>
    %c0_5 = arith.constant 0 : index
    %c0_6 = arith.constant 0 : index
    %5 = vector.load %arg3[%c0_5, %c0_6] : memref<1x16xf32, #tpu.memory_space<vmem>>, vector<1x16xf32>
    %6 = vector.broadcast %5 : vector<1x16xf32> to vector<256x16xf32>
    %7 = arith.addf %4, %6 : vector<256x16xf32>
    %cst_7 = arith.constant 0.000000e+00 : f32
    %cst_8 = arith.constant 6.000000e+00 : f32
    %8 = vector.broadcast %cst_7 : f32 to vector<256x16xf32>
    %9 = arith.maximumf %8, %7 : vector<256x16xf32>
    %10 = vector.broadcast %cst_8 : f32 to vector<256x16xf32>
    %11 = arith.minimumf %10, %9 : vector<256x16xf32>
    %12 = vector.shape_cast %11 : vector<256x16xf32> to vector<1x16x16x16xf32>
    %cst_9 = arith.constant 0.000000e+00 : f32
    %13 = vector.broadcast %cst_9 : f32 to vector<1x1x18x16xf32>
    %c0_10 = arith.constant 0 : index
    %c0_11 = arith.constant 0 : index
    %c0_12 = arith.constant 0 : index
    %c0_13 = arith.constant 0 : index
    %14 = vector.load %arg9[%c0_10, %c0_11, %c0_12, %c0_13] : memref<1x18x18x16xf32, #tpu.memory_space<vmem>>, vector<1x1x18x16xf32>
    tpu.vector_store %arg9[%c0_10, %c0_11, %c0_12, %c0_13], %13 {strides = array<i32>} : memref<1x18x18x16xf32, #tpu.memory_space<vmem>>, vector<1x1x18x16xf32>,
    %cst_14 = arith.constant 0.000000e+00 : f32
    %15 = vector.broadcast %cst_14 : f32 to vector<1x1x18x16xf32>
    %c0_15 = arith.constant 0 : index
    %c17 = arith.constant 17 : index
    %c0_16 = arith.constant 0 : index
    %c0_17 = arith.constant 0 : index
    %16 = vector.load %arg9[%c0_15, %c17, %c0_16, %c0_17] : memref<1x18x18x16xf32, #tpu.memory_space<vmem>>, vector<1x1x18x16xf32>
    tpu.vector_store %arg9[%c0_15, %c17, %c0_16, %c0_17], %15 {strides = array<i32>} : memref<1x18x18x16xf32, #tpu.memory_space<vmem>>, vector<1x1x18x16xf32>,
    %cst_18 = arith.constant 0.000000e+00 : f32
    %17 = vector.broadcast %cst_18 : f32 to vector<1x16x1x16xf32>
    %c0_19 = arith.constant 0 : index
    %c1 = arith.constant 1 : index
    %c0_20 = arith.constant 0 : index
    %c0_21 = arith.constant 0 : index
    %18 = vector.load %arg9[%c0_19, %c1, %c0_20, %c0_21] : memref<1x18x18x16xf32, #tpu.memory_space<vmem>>, vector<1x16x1x16xf32>
    tpu.vector_store %arg9[%c0_19, %c1, %c0_20, %c0_21], %17 {strides = array<i32>} : memref<1x18x18x16xf32, #tpu.memory_space<vmem>>, vector<1x16x1x16xf32>,
    %cst_22 = arith.constant 0.000000e+00 : f32
    %19 = vector.broadcast %cst_22 : f32 to vector<1x16x1x16xf32>
    %c0_23 = arith.constant 0 : index
    %c1_24 = arith.constant 1 : index
    %c17_25 = arith.constant 17 : index
    %c0_26 = arith.constant 0 : index
    %20 = vector.load %arg9[%c0_23, %c1_24, %c17_25, %c0_26] : memref<1x18x18x16xf32, #tpu.memory_space<vmem>>, vector<1x16x1x16xf32>
    tpu.vector_store %arg9[%c0_23, %c1_24, %c17_25, %c0_26], %19 {strides = array<i32>} : memref<1x18x18x16xf32, #tpu.memory_space<vmem>>, vector<1x16x1x16xf32>,
    %c0_27 = arith.constant 0 : index
    %c1_28 = arith.constant 1 : index
    %c1_29 = arith.constant 1 : index
    %c0_30 = arith.constant 0 : index
    %21 = vector.load %arg9[%c0_27, %c1_28, %c1_29, %c0_30] : memref<1x18x18x16xf32, #tpu.memory_space<vmem>>, vector<1x16x16x16xf32>
    tpu.vector_store %arg9[%c0_27, %c1_28, %c1_29, %c0_30], %12 {strides = array<i32>} : memref<1x18x18x16xf32, #tpu.memory_space<vmem>>, vector<1x16x16x16xf32>,
    %c0_31 = arith.constant 0 : index
    %c0_32 = arith.constant 0 : index
    %22 = vector.load %arg4[%c0_31, %c0_32] : memref<9x16xf32, #tpu.memory_space<vmem>>, vector<9x16xf32>
    %c0_33 = arith.constant 0 : index
    %c0_34 = arith.constant 0 : index
    %c0_35 = arith.constant 0 : index
    %c0_36 = arith.constant 0 : index
    %23 = vector.load %arg9[%c0_33, %c0_34, %c0_35, %c0_36] : memref<1x18x18x16xf32, #tpu.memory_space<vmem>>, vector<1x16x16x16xf32>
    %24 = vector.extract_strided_slice %22 {offsets = [0, 0], sizes = [1, 16], strides = [1, 1]} : vector<9x16xf32> to vector<1x16xf32>
    %25 = vector.shape_cast %24 : vector<1x16xf32> to vector<1x1x1x16xf32>
    %26 = vector.broadcast %25 : vector<1x1x1x16xf32> to vector<1x16x16x16xf32>
    %27 = arith.mulf %23, %26 : vector<1x16x16x16xf32>
    %c0_37 = arith.constant 0 : index
    %c0_38 = arith.constant 0 : index
    %c1_39 = arith.constant 1 : index
    %c0_40 = arith.constant 0 : index
    %28 = vector.load %arg9[%c0_37, %c0_38, %c1_39, %c0_40] : memref<1x18x18x16xf32, #tpu.memory_space<vmem>>, vector<1x16x16x16xf32>
    %29 = vector.extract_strided_slice %22 {offsets = [1, 0], sizes = [1, 16], strides = [1, 1]} : vector<9x16xf32> to vector<1x16xf32>
    %30 = vector.shape_cast %29 : vector<1x16xf32> to vector<1x1x1x16xf32>
    %31 = vector.broadcast %30 : vector<1x1x1x16xf32> to vector<1x16x16x16xf32>
    %32 = arith.mulf %28, %31 : vector<1x16x16x16xf32>
    %33 = arith.addf %27, %32 : vector<1x16x16x16xf32>
    %c0_41 = arith.constant 0 : index
    %c0_42 = arith.constant 0 : index
    %c2 = arith.constant 2 : index
    %c0_43 = arith.constant 0 : index
    %34 = vector.load %arg9[%c0_41, %c0_42, %c2, %c0_43] : memref<1x18x18x16xf32, #tpu.memory_space<vmem>>, vector<1x16x16x16xf32>
    %35 = vector.extract_strided_slice %22 {offsets = [2, 0], sizes = [1, 16], strides = [1, 1]} : vector<9x16xf32> to vector<1x16xf32>
    %36 = vector.shape_cast %35 : vector<1x16xf32> to vector<1x1x1x16xf32>
    %37 = vector.broadcast %36 : vector<1x1x1x16xf32> to vector<1x16x16x16xf32>
    %38 = arith.mulf %34, %37 : vector<1x16x16x16xf32>
    %39 = arith.addf %33, %38 : vector<1x16x16x16xf32>
    %c0_44 = arith.constant 0 : index
    %c1_45 = arith.constant 1 : index
    %c0_46 = arith.constant 0 : index
    %c0_47 = arith.constant 0 : index
    %40 = vector.load %arg9[%c0_44, %c1_45, %c0_46, %c0_47] : memref<1x18x18x16xf32, #tpu.memory_space<vmem>>, vector<1x16x16x16xf32>
    %41 = vector.extract_strided_slice %22 {offsets = [3, 0], sizes = [1, 16], strides = [1, 1]} : vector<9x16xf32> to vector<1x16xf32>
    %42 = vector.shape_cast %41 : vector<1x16xf32> to vector<1x1x1x16xf32>
    %43 = vector.broadcast %42 : vector<1x1x1x16xf32> to vector<1x16x16x16xf32>
    %44 = arith.mulf %40, %43 : vector<1x16x16x16xf32>
    %45 = arith.addf %39, %44 : vector<1x16x16x16xf32>
    %c0_48 = arith.constant 0 : index
    %c1_49 = arith.constant 1 : index
    %c1_50 = arith.constant 1 : index
    %c0_51 = arith.constant 0 : index
    %46 = vector.load %arg9[%c0_48, %c1_49, %c1_50, %c0_51] : memref<1x18x18x16xf32, #tpu.memory_space<vmem>>, vector<1x16x16x16xf32>
    %47 = vector.extract_strided_slice %22 {offsets = [4, 0], sizes = [1, 16], strides = [1, 1]} : vector<9x16xf32> to vector<1x16xf32>
    %48 = vector.shape_cast %47 : vector<1x16xf32> to vector<1x1x1x16xf32>
    %49 = vector.broadcast %48 : vector<1x1x1x16xf32> to vector<1x16x16x16xf32>
    %50 = arith.mulf %46, %49 : vector<1x16x16x16xf32>
    %51 = arith.addf %45, %50 : vector<1x16x16x16xf32>
    %c0_52 = arith.constant 0 : index
    %c1_53 = arith.constant 1 : index
    %c2_54 = arith.constant 2 : index
    %c0_55 = arith.constant 0 : index
    %52 = vector.load %arg9[%c0_52, %c1_53, %c2_54, %c0_55] : memref<1x18x18x16xf32, #tpu.memory_space<vmem>>, vector<1x16x16x16xf32>
    %53 = vector.extract_strided_slice %22 {offsets = [5, 0], sizes = [1, 16], strides = [1, 1]} : vector<9x16xf32> to vector<1x16xf32>
    %54 = vector.shape_cast %53 : vector<1x16xf32> to vector<1x1x1x16xf32>
    %55 = vector.broadcast %54 : vector<1x1x1x16xf32> to vector<1x16x16x16xf32>
    %56 = arith.mulf %52, %55 : vector<1x16x16x16xf32>
    %57 = arith.addf %51, %56 : vector<1x16x16x16xf32>
    %c0_56 = arith.constant 0 : index
    %c2_57 = arith.constant 2 : index
    %c0_58 = arith.constant 0 : index
    %c0_59 = arith.constant 0 : index
    %58 = vector.load %arg9[%c0_56, %c2_57, %c0_58, %c0_59] : memref<1x18x18x16xf32, #tpu.memory_space<vmem>>, vector<1x16x16x16xf32>
    %59 = vector.extract_strided_slice %22 {offsets = [6, 0], sizes = [1, 16], strides = [1, 1]} : vector<9x16xf32> to vector<1x16xf32>
    %60 = vector.shape_cast %59 : vector<1x16xf32> to vector<1x1x1x16xf32>
    %61 = vector.broadcast %60 : vector<1x1x1x16xf32> to vector<1x16x16x16xf32>
    %62 = arith.mulf %58, %61 : vector<1x16x16x16xf32>
    %63 = arith.addf %57, %62 : vector<1x16x16x16xf32>
    %c0_60 = arith.constant 0 : index
    %c2_61 = arith.constant 2 : index
    %c1_62 = arith.constant 1 : index
    %c0_63 = arith.constant 0 : index
    %64 = vector.load %arg9[%c0_60, %c2_61, %c1_62, %c0_63] : memref<1x18x18x16xf32, #tpu.memory_space<vmem>>, vector<1x16x16x16xf32>
    %65 = vector.extract_strided_slice %22 {offsets = [7, 0], sizes = [1, 16], strides = [1, 1]} : vector<9x16xf32> to vector<1x16xf32>
    %66 = vector.shape_cast %65 : vector<1x16xf32> to vector<1x1x1x16xf32>
    %67 = vector.broadcast %66 : vector<1x1x1x16xf32> to vector<1x16x16x16xf32>
    %68 = arith.mulf %64, %67 : vector<1x16x16x16xf32>
    %69 = arith.addf %63, %68 : vector<1x16x16x16xf32>
    %c0_64 = arith.constant 0 : index
    %c2_65 = arith.constant 2 : index
    %c2_66 = arith.constant 2 : index
    %c0_67 = arith.constant 0 : index
    %70 = vector.load %arg9[%c0_64, %c2_65, %c2_66, %c0_67] : memref<1x18x18x16xf32, #tpu.memory_space<vmem>>, vector<1x16x16x16xf32>
    %71 = vector.extract_strided_slice %22 {offsets = [8, 0], sizes = [1, 16], strides = [1, 1]} : vector<9x16xf32> to vector<1x16xf32>
    %72 = vector.shape_cast %71 : vector<1x16xf32> to vector<1x1x1x16xf32>
    %73 = vector.broadcast %72 : vector<1x1x1x16xf32> to vector<1x16x16x16xf32>
    %74 = arith.mulf %70, %73 : vector<1x16x16x16xf32>
    %75 = arith.addf %69, %74 : vector<1x16x16x16xf32>
    %c0_68 = arith.constant 0 : index
    %c0_69 = arith.constant 0 : index
    %76 = vector.load %arg5[%c0_68, %c0_69] : memref<1x16xf32, #tpu.memory_space<vmem>>, vector<1x16xf32>
    %77 = vector.shape_cast %76 : vector<1x16xf32> to vector<1x1x1x16xf32>
    %78 = vector.broadcast %77 : vector<1x1x1x16xf32> to vector<1x16x16x16xf32>
    %79 = arith.addf %75, %78 : vector<1x16x16x16xf32>
    %cst_70 = arith.constant 0.000000e+00 : f32
    %cst_71 = arith.constant 6.000000e+00 : f32
    %80 = vector.broadcast %cst_70 : f32 to vector<1x16x16x16xf32>
    %81 = arith.maximumf %80, %79 : vector<1x16x16x16xf32>
    %82 = vector.broadcast %cst_71 : f32 to vector<1x16x16x16xf32>
    %83 = arith.minimumf %82, %81 : vector<1x16x16x16xf32>
    %84 = vector.shape_cast %83 : vector<1x16x16x16xf32> to vector<256x16xf32>
    %85 = arith.truncf %84 : vector<256x16xf32> to vector<256x16xbf16>
    %c0_72 = arith.constant 0 : index
    %c0_73 = arith.constant 0 : index
    %86 = vector.load %arg6[%c0_72, %c0_73] : memref<16x128xbf16, #tpu.memory_space<vmem>>, vector<16x128xbf16>
    %cst_74 = arith.constant dense<0.000000e+00> : vector<256x128xf32>
    %87 = tpu.matmul %85, %86, %cst_74 {dimension_numbers = #tpu.dot_dimension_numbers<[1], [0], [0], [1], [0, 0, 1, 1], [], []>} : vector<256x16xbf16>, vector<16x128xbf16>, vector<256x128xf32> -> vector<256x128xf32>
    %c0_75 = arith.constant 0 : index
    %c0_76 = arith.constant 0 : index
    %88 = vector.load %arg7[%c0_75, %c0_76] : memref<1x128xf32, #tpu.memory_space<vmem>>, vector<1x128xf32>
    %89 = vector.broadcast %88 : vector<1x128xf32> to vector<256x128xf32>
    %90 = arith.addf %87, %89 : vector<256x128xf32>
    %91 = arith.addf %90, %1 : vector<256x128xf32>
    %92 = vector.shape_cast %91 : vector<256x128xf32> to vector<1x256x128xf32>
    %c0_77 = arith.constant 0 : index
    %c0_78 = arith.constant 0 : index
    %c0_79 = arith.constant 0 : index
    %93 = vector.load %arg8[%c0_77, %c0_78, %c0_79] : memref<1x256x128xf32, #tpu.memory_space<vmem>>, vector<1x256x128xf32>
    tpu.vector_store %arg8[%c0_77, %c0_78, %c0_79], %92 {strides = array<i32>} : memref<1x256x128xf32, #tpu.memory_space<vmem>>, vector<1x256x128xf32>,
    return
  }
  func.func @transform_0(%arg0: i32) -> (i32, i32, i32, i32) {
    %c0_i32 = arith.constant 0 : i32
    %c0_i32_0 = arith.constant 0 : i32
    %c0_i32_1 = arith.constant 0 : i32
    %c0_i32_2 = arith.constant 0 : i32
    return %arg0, %c0_i32, %c0_i32_0, %c0_i32_1 : i32, i32, i32, i32
  }
  func.func @transform_1(%arg0: i32) -> (i32, i32) {
    %c0_i32 = arith.constant 0 : i32
    %c0_i32_0 = arith.constant 0 : i32
    %c0_i32_1 = arith.constant 0 : i32
    return %c0_i32, %c0_i32_0 : i32, i32
  }
  func.func @transform_2(%arg0: i32) -> (i32, i32) {
    %c0_i32 = arith.constant 0 : i32
    %c0_i32_0 = arith.constant 0 : i32
    %c0_i32_1 = arith.constant 0 : i32
    return %c0_i32, %c0_i32_0 : i32, i32
  }
  func.func @transform_3(%arg0: i32) -> (i32, i32) {
    %c0_i32 = arith.constant 0 : i32
    %c0_i32_0 = arith.constant 0 : i32
    %c0_i32_1 = arith.constant 0 : i32
    return %c0_i32, %c0_i32_0 : i32, i32
  }
  func.func @transform_4(%arg0: i32) -> (i32, i32) {
    %c0_i32 = arith.constant 0 : i32
    %c0_i32_0 = arith.constant 0 : i32
    %c0_i32_1 = arith.constant 0 : i32
    return %c0_i32, %c0_i32_0 : i32, i32
  }
  func.func @transform_5(%arg0: i32) -> (i32, i32) {
    %c0_i32 = arith.constant 0 : i32
    %c0_i32_0 = arith.constant 0 : i32
    %c0_i32_1 = arith.constant 0 : i32
    return %c0_i32, %c0_i32_0 : i32, i32
  }
  func.func @transform_6(%arg0: i32) -> (i32, i32) {
    %c0_i32 = arith.constant 0 : i32
    %c0_i32_0 = arith.constant 0 : i32
    %c0_i32_1 = arith.constant 0 : i32
    return %c0_i32, %c0_i32_0 : i32, i32
  }
  func.func @transform_7(%arg0: i32) -> (i32, i32, i32) {
    %c0_i32 = arith.constant 0 : i32
    %c0_i32_0 = arith.constant 0 : i32
    %c0_i32_1 = arith.constant 0 : i32
    return %arg0, %c0_i32, %c0_i32_0 : i32, i32, i32
  }
}

</mosaic_0001>

<llo_original>
// kernel: tpu_custom_call.1
$region0: #{tpu_custom_call.1}
  #allocation0 [shape = 'u32[]', space=smem, size = 0x4, offset = 0x4, fixed_abs, tag = 'smem constant byte address 0x4 - core index']
  #allocation1 [shape = 'u32[144,128]{1,0:T(1,128)}', space=vmem, size = 0x12000, scoped, tag = 'internal scratch']
  #allocation2 [shape = 'f32[1,18,18,16]{3,2,1,0:T(8,128)}', space=vmem, size = 0x36000, scoped, tag = 'scratch operand']
  %s0 = inlined_call_operand.hbm [shape: f32[2,16,16,128], index: 0, kind: input, shape index: {}]
  %s1 = inlined_call_operand.vmem [shape: bf16[128,16], index: 1, kind: input, shape index: {}]
  %s2 = inlined_call_operand.vmem [shape: f32[1,16], index: 2, kind: input, shape index: {}]
  %s3 = inlined_call_operand.vmem [shape: f32[9,16], index: 3, kind: input, shape index: {}]
  %s4 = inlined_call_operand.vmem [shape: f32[1,16], index: 4, kind: input, shape index: {}]
  %s5 = inlined_call_operand.vmem [shape: bf16[16,128], index: 5, kind: input, shape index: {}]
  %s6 = inlined_call_operand.vmem [shape: f32[1,128], index: 6, kind: input, shape index: {}]
  %s7 = inlined_call_operand.hbm [shape: f32[2,256,128], index: 7, kind: output, shape index: {}]
  %s8 = sld [smem:[#allocation0]]
  $region65: #{tpu_custom_call.1} parent=0
    _
  %s10 = ssub.s32 1, %s8
  %s11 = scalar_select 0, %s10, %s8
  $region1: #{tpu_custom_call.1} parent=0
    #allocation3 [shape = 'u8[262144]{0}', space=vmem, size = 0x40000, scoped, tag = 'input window, operand 0']
    #allocation4 [shape = 's32[2]{0}', space=sflag, size = 0x8, scoped, tag = 'scoped memory for tpu_custom_call.1']
    #allocation5 [shape = 's32[2]{0}', space=sflag, size = 0x8, scoped, tag = 'scoped memory for tpu_custom_call.1']
    #allocation6 [shape = 'u8[262144]{0}', space=vmem, size = 0x40000, scoped, tag = 'output window, operand 0']
    %12 = vsyncpa [#allocation4], 0
    %s13 = scalar_lea.sflag [#allocation4], 1
    %14 = vsyncpa %s13, 0
    %15 = vsyncpa [#allocation5], 0
    %s16 = scalar_lea.sflag [#allocation5], 1
    %17 = vsyncpa %s16, 0
    loop: start=0, step=1, limit=4
    $region2: #{tpu_custom_call.1} parent=1 // loop_pre_header
      _
    $region3: #{tpu_custom_call.1} parent=1 // loop_header
      %s19 = sphi 0, %s23
      %p20 = scmp.ge.s32.totalorder %s19, 4
      %s29 = sphi 0, %s31
      %s32 = sphi 0, %s29
      %s33 = sphi 0, %s32
      %s49 = sphi 0, %s33
      %s53 = sphi 0, %s53
      %s55 = sphi 0, %s53
      %s56 = sphi 0, %s55
      %s70 = sphi 0, %s56
      %s74 = sphi 0, %s74
      %s76 = sphi 0, %s74
      %s77 = sphi 0, %s76
      %s91 = sphi 0, %s77
      %s95 = sphi 0, %s95
      %s97 = sphi 0, %s95
      %s98 = sphi 0, %s97
      %s112 = sphi 0, %s98
      %s116 = sphi 0, %s116
      %s118 = sphi 0, %s116
      %s119 = sphi 0, %s118
      %s133 = sphi 0, %s119
      %s137 = sphi 0, %s137
      %s139 = sphi 0, %s137
      %s140 = sphi 0, %s139
      %s154 = sphi 0, %s140
      %s158 = sphi 0, %s158
      %s160 = sphi 0, %s158
      %s161 = sphi 0, %s160
      %s175 = sphi 0, %s161
      %s181 = sphi 0, %s183
      %s184 = sphi 0, %s181
      %s185 = sphi 0, %s184
      %s201 = sphi 0, %s185
    $region4: #{tpu_custom_call.1} parent=1 // loop_header_branch
      %22 = sbr.rel (%p20) target = $region8
    $region5: #{tpu_custom_call.1} parent=1 // loop_body
      %s24 = ssub.s32 %s19, 1
      %s25 = ssub.s32 %s19, 2
      %s26 = sadd.s32 %s19, 1
      %s27 = ssub.s32 %s19, %s26
      %p28 = scmp.eq.s32.totalorder %s27, 0
      %s30 = sadd.s32 %s29, 1
      %s31 = scalar_select %p28, %s29, %s30
      %p34 = pneg %p28
      %p35 = scmp.eq.s32.totalorder %s19, 1
      %p36 = por %p34, %p35
      %p37 = scmp.ne.s32.totalorder %s29, %s32
      %p38 = scmp.eq.s32.totalorder %s19, 0
      %p39 = por %p37, %p38
      %p40 = scmp.ne.s32.totalorder %s29, %s32
      %p41 = scmp.eq.s32.totalorder %s24, 1
      %p42 = por %p40, %p41
      %p43 = scmp.ne.s32.totalorder %s32, %s33
      %p44 = scmp.eq.s32.totalorder %s24, 0
      %p45 = por %p43, %p44
      %p46 = scmp.ne.s32.totalorder %s32, %s33
      %p47 = scmp.eq.s32.totalorder %s25, 1
      %p48 = por %p46, %p47
      %p50 = scmp.ne.s32.totalorder %s33, %s49
      %p51 = scmp.eq.s32.totalorder %s25, 0
      %p52 = por %p50, %p51
      %s54 = sadd.s32 %s53, 1
      %p57 = scmp.eq.s32.totalorder %s19, 1
      %p58 = scmp.ne.s32.totalorder %s53, %s55
      %p59 = scmp.eq.s32.totalorder %s19, 0
      %p60 = por %p58, %p59
      %p61 = scmp.ne.s32.totalorder %s53, %s55
      %p62 = scmp.eq.s32.totalorder %s24, 1
      %p63 = por %p61, %p62
      %p64 = scmp.ne.s32.totalorder %s55, %s56
      %p65 = scmp.eq.s32.totalorder %s24, 0
      %p66 = por %p64, %p65
      %p67 = scmp.ne.s32.totalorder %s55, %s56
      %p68 = scmp.eq.s32.totalorder %s25, 1
      %p69 = por %p67, %p68
      %p71 = scmp.ne.s32.totalorder %s56, %s70
      %p72 = scmp.eq.s32.totalorder %s25, 0
      %p73 = por %p71, %p72
      %s75 = sadd.s32 %s74, 1
      %p78 = scmp.eq.s32.totalorder %s19, 1
      %p79 = scmp.ne.s32.totalorder %s74, %s76
      %p80 = scmp.eq.s32.totalorder %s19, 0
      %p81 = por %p79, %p80
      %p82 = scmp.ne.s32.totalorder %s74, %s76
      %p83 = scmp.eq.s32.totalorder %s24, 1
      %p84 = por %p82, %p83
      %p85 = scmp.ne.s32.totalorder %s76, %s77
      %p86 = scmp.eq.s32.totalorder %s24, 0
      %p87 = por %p85, %p86
      %p88 = scmp.ne.s32.totalorder %s76, %s77
      %p89 = scmp.eq.s32.totalorder %s25, 1
      %p90 = por %p88, %p89
      %p92 = scmp.ne.s32.totalorder %s77, %s91
      %p93 = scmp.eq.s32.totalorder %s25, 0
      %p94 = por %p92, %p93
      %s96 = sadd.s32 %s95, 1
      %p99 = scmp.eq.s32.totalorder %s19, 1
      %p100 = scmp.ne.s32.totalorder %s95, %s97
      %p101 = scmp.eq.s32.totalorder %s19, 0
      %p102 = por %p100, %p101
      %p103 = scmp.ne.s32.totalorder %s95, %s97
      %p104 = scmp.eq.s32.totalorder %s24, 1
      %p105 = por %p103, %p104
      %p106 = scmp.ne.s32.totalorder %s97, %s98
      %p107 = scmp.eq.s32.totalorder %s24, 0
      %p108 = por %p106, %p107
      %p109 = scmp.ne.s32.totalorder %s97, %s98
      %p110 = scmp.eq.s32.totalorder %s25, 1
      %p111 = por %p109, %p110
      %p113 = scmp.ne.s32.totalorder %s98, %s112
      %p114 = scmp.eq.s32.totalorder %s25, 0
      %p115 = por %p113, %p114
      %s117 = sadd.s32 %s116, 1
      %p120 = scmp.eq.s32.totalorder %s19, 1
      %p121 = scmp.ne.s32.totalorder %s116, %s118
      %p122 = scmp.eq.s32.totalorder %s19, 0
      %p123 = por %p121, %p122
      %p124 = scmp.ne.s32.totalorder %s116, %s118
      %p125 = scmp.eq.s32.totalorder %s24, 1
      %p126 = por %p124, %p125
      %p127 = scmp.ne.s32.totalorder %s118, %s119
      %p128 = scmp.eq.s32.totalorder %s24, 0
      %p129 = por %p127, %p128
      %p130 = scmp.ne.s32.totalorder %s118, %s119
      %p131 = scmp.eq.s32.totalorder %s25, 1
      %p132 = por %p130, %p131
      %p134 = scmp.ne.s32.totalorder %s119, %s133
      %p135 = scmp.eq.s32.totalorder %s25, 0
      %p136 = por %p134, %p135
      %s138 = sadd.s32 %s137, 1
      %p141 = scmp.eq.s32.totalorder %s19, 1
      %p142 = scmp.ne.s32.totalorder %s137, %s139
      %p143 = scmp.eq.s32.totalorder %s19, 0
      %p144 = por %p142, %p143
      %p145 = scmp.ne.s32.totalorder %s137, %s139
      %p146 = scmp.eq.s32.totalorder %s24, 1
      %p147 = por %p145, %p146
      %p148 = scmp.ne.s32.totalorder %s139, %s140
      %p149 = scmp.eq.s32.totalorder %s24, 0
      %p150 = por %p148, %p149
      %p151 = scmp.ne.s32.totalorder %s139, %s140
      %p152 = scmp.eq.s32.totalorder %s25, 1
      %p153 = por %p151, %p152
      %p155 = scmp.ne.s32.totalorder %s140, %s154
      %p156 = scmp.eq.s32.totalorder %s25, 0
      %p157 = por %p155, %p156
      %s159 = sadd.s32 %s158, 1
      %p162 = scmp.eq.s32.totalorder %s19, 1
      %p163 = scmp.ne.s32.totalorder %s158, %s160
      %p164 = scmp.eq.s32.totalorder %s19, 0
      %p165 = por %p163, %p164
      %p166 = scmp.ne.s32.totalorder %s158, %s160
      %p167 = scmp.eq.s32.totalorder %s24, 1
      %p168 = por %p166, %p167
      %p169 = scmp.ne.s32.totalorder %s160, %s161
      %p170 = scmp.eq.s32.totalorder %s24, 0
      %p171 = por %p169, %p170
      %p172 = scmp.ne.s32.totalorder %s160, %s161
      %p173 = scmp.eq.s32.totalorder %s25, 1
      %p174 = por %p172, %p173
      %p176 = scmp.ne.s32.totalorder %s161, %s175
      %p177 = scmp.eq.s32.totalorder %s25, 0
      %p178 = por %p176, %p177
      %s179 = ssub.s32 %s19, %s26
      %p180 = scmp.eq.s32.totalorder %s179, 0
      %s182 = sadd.s32 %s181, 1
      %s183 = scalar_select %p180, %s181, %s182
      %p186 = pneg %p180
      %p187 = scmp.eq.s32.totalorder %s19, 1
      %p188 = por %p186, %p187
      %p189 = scmp.ne.s32.totalorder %s181, %s184
      %p190 = scmp.eq.s32.totalorder %s19, 0
      %p191 = por %p189, %p190
      %p192 = scmp.ne.s32.totalorder %s181, %s184
      %p193 = scmp.eq.s32.totalorder %s24, 1
      %p194 = por %p192, %p193
      %p195 = scmp.ne.s32.totalorder %s184, %s185
      %p196 = scmp.eq.s32.totalorder %s24, 0
      %p197 = por %p195, %p196
      %p198 = scmp.ne.s32.totalorder %s184, %s185
      %p199 = scmp.eq.s32.totalorder %s25, 1
      %p200 = por %p198, %p199
      %p202 = scmp.ne.s32.totalorder %s185, %s201
      %p203 = scmp.eq.s32.totalorder %s25, 0
      %p204 = por %p202, %p203
      %p205 = scmp.le.s32.totalorder 1, %s19
      %p206 = scmp.lt.s32.totalorder %s19, 3
      %p207 = pnand %p205, %p206
      %p208 = pneg %p207
      // Predicated region
      $region9: #{tpu_custom_call.1} parent=5 // pred_check
        _
      $region10: #{tpu_custom_call.1} parent=5 // pred_check_branch
        %210 = sbr.rel (%p207) target = $region12
      $region11: #{tpu_custom_call.1} parent=5 // pred_region
        %s211 = ssub.s32 %s19, 1
        // Predicated region
        $region13: #{tpu_custom_call.1} parent=11 // pred_check
          %p212 = pneg %p66
        $region14: #{tpu_custom_call.1} parent=11 // pred_check_branch
          %214 = sbr.rel (%p212) target = $region16
        $region15: #{tpu_custom_call.1} parent=11 // pred_region
          _
        $region16: #{tpu_custom_call.1} parent=11 // pred_fallthru
          _
        // Predicated region
        $region17: #{tpu_custom_call.1} parent=11 // pred_check
          %p215 = pneg %p87
        $region18: #{tpu_custom_call.1} parent=11 // pred_check_branch
          %217 = sbr.rel (%p215) target = $region20
        $region19: #{tpu_custom_call.1} parent=11 // pred_region
          _
        $region20: #{tpu_custom_call.1} parent=11 // pred_fallthru
          _
        // Predicated region
        $region21: #{tpu_custom_call.1} parent=11 // pred_check
          %p218 = pneg %p108
        $region22: #{tpu_custom_call.1} parent=11 // pred_check_branch
          %220 = sbr.rel (%p218) target = $region24
        $region23: #{tpu_custom_call.1} parent=11 // pred_region
          _
        $region24: #{tpu_custom_call.1} parent=11 // pred_fallthru
          _
        // Predicated region
        $region25: #{tpu_custom_call.1} parent=11 // pred_check
          %p221 = pneg %p129
        $region26: #{tpu_custom_call.1} parent=11 // pred_check_branch
          %223 = sbr.rel (%p221) target = $region28
        $region27: #{tpu_custom_call.1} parent=11 // pred_region
          _
        $region28: #{tpu_custom_call.1} parent=11 // pred_fallthru
          _
        // Predicated region
        $region29: #{tpu_custom_call.1} parent=11 // pred_check
          %p224 = pneg %p150
        $region30: #{tpu_custom_call.1} parent=11 // pred_check_branch
          %226 = sbr.rel (%p224) target = $region32
        $region31: #{tpu_custom_call.1} parent=11 // pred_region
          _
        $region32: #{tpu_custom_call.1} parent=11 // pred_fallthru
          _
        // Predicated region
        $region33: #{tpu_custom_call.1} parent=11 // pred_check
          %p227 = pneg %p171
        $region34: #{tpu_custom_call.1} parent=11 // pred_check_branch
          %229 = sbr.rel (%p227) target = $region36
        $region35: #{tpu_custom_call.1} parent=11 // pred_region
          _
        $region36: #{tpu_custom_call.1} parent=11 // pred_fallthru
          _
      $region12: #{tpu_custom_call.1} parent=5 // pred_fallthru
        _
      %p230 = scmp.lt.s32.totalorder %s19, 2
      // Predicated region
      $region37: #{tpu_custom_call.1} parent=5 // pred_check
        %p231 = pneg %p230
      $region38: #{tpu_custom_call.1} parent=5 // pred_check_branch
        %233 = sbr.rel (%p231) target = $region40
      $region39: #{tpu_custom_call.1} parent=5 // pred_region
        // Predicated region
        $region41: #{tpu_custom_call.1} parent=39 // pred_check
          %p234 = pneg %p39
        $region42: #{tpu_custom_call.1} parent=39 // pred_check_branch
          %236 = sbr.rel (%p234) target = $region44
        $region43: #{tpu_custom_call.1} parent=39 // pred_region
          %s237 = sand.u32 %s29, 1
          %s238 = scalar_lea.sflag [#allocation4], %s237
          %s239 = sand.u32 %s29, 1
          %s240 = smul.addr %s239, 256
          %s241 = scalar_lea.vmem [#allocation3], %s240
          %s243 = ssub.s32 4096, 4096
          %244 = vsyncadd %s238, %s243
          %s245 = smul.addr %s19, 32
          %s246 = smul.addr %s245, 128
          %s247 = scalar_lea.hbm %s0, %s246
          %s248 = sshll.u32 %s241, 4
          %s249 = int_to_ptr.vmem [resolvable:$true] %s248
          %254 = dma.hbm_to_vmem [thread:$0]  %s247, 4096, %s249, %s238, 128, 128, 8
        $region44: #{tpu_custom_call.1} parent=39 // pred_fallthru
          _
      $region40: #{tpu_custom_call.1} parent=5 // pred_fallthru
        _
      %p255 = scmp.le.s32.totalorder 1, %s19
      %p256 = scmp.lt.s32.totalorder %s19, 3
      %p257 = pnand %p255, %p256
      %p258 = pneg %p257
      // Predicated region
      $region45: #{tpu_custom_call.1} parent=5 // pred_check
        _
      $region46: #{tpu_custom_call.1} parent=5 // pred_check_branch
        %260 = sbr.rel (%p257) target = $region48
      $region47: #{tpu_custom_call.1} parent=5 // pred_region
        %s261 = ssub.s32 %s19, 1
        %s262 = sand.u32 %s32, 1
        %s263 = scalar_lea.sflag [#allocation4], %s262
        %s264 = sand.u32 %s32, 1
        %s265 = smul.addr %s264, 256
        %s266 = scalar_lea.vmem [#allocation3], %s265
        // Predicated region
        $region49: #{tpu_custom_call.1} parent=47 // pred_check
          %p267 = pneg %p45
        $region50: #{tpu_custom_call.1} parent=47 // pred_check_branch
          %269 = sbr.rel (%p267) target = $region52
        $region51: #{tpu_custom_call.1} parent=47 // pred_region
          %270 = dma.done %s263, 4096
        $region52: #{tpu_custom_call.1} parent=47 // pred_fallthru
          _
        %s271 = sand.u32 %s32, 1
        %s272 = scalar_lea.sflag [#allocation4], %s271
        %s273 = sand.u32 %s32, 1
        %s274 = smul.addr %s273, 256
        %s275 = scalar_lea.vmem [#allocation3], %s274
        %p276 = pneg %p45
        %p277 = pneg %p42
        %p278 = pneg %p66
        %p279 = pneg %p63
        %p280 = pneg %p87
        %p281 = pneg %p84
        %p282 = pneg %p108
        %p283 = pneg %p105
        %p284 = pneg %p129
        %p285 = pneg %p126
        %p286 = pneg %p150
        %p287 = pneg %p147
        %p288 = pneg %p171
        %p289 = pneg %p168
        %p290 = pneg %p197
        %p291 = pneg %p194
        %s292 = sand.u32 %s184, 1
        %s293 = scalar_lea.sflag [#allocation5], %s292
        %s294 = sand.u32 %s184, 1
        %s295 = smul.addr %s294, 256
        %s296 = scalar_lea.vmem [#allocation6], %s295
        %v298 = vld [vmem:[%s266] sm:$0xff]
        %v299 = vld [vmem:[%s266 + $0x8] sm:$0xff]
        %v300 = vld [vmem:[%s266 + $0x10] sm:$0xff]
        %v301 = vld [vmem:[%s266 + $0x18] sm:$0xff]
        %v302 = vld [vmem:[%s266 + $0x20] sm:$0xff]
        %v303 = vld [vmem:[%s266 + $0x28] sm:$0xff]
        %v304 = vld [vmem:[%s266 + $0x30] sm:$0xff]
        %v305 = vld [vmem:[%s266 + $0x38] sm:$0xff]
        %v306 = vld [vmem:[%s266 + $0x40] sm:$0xff]
        %v307 = vld [vmem:[%s266 + $0x48] sm:$0xff]
        %v308 = vld [vmem:[%s266 + $0x50] sm:$0xff]
        %v309 = vld [vmem:[%s266 + $0x58] sm:$0xff]
        %v310 = vld [vmem:[%s266 + $0x60] sm:$0xff]
        %v311 = vld [vmem:[%s266 + $0x68] sm:$0xff]
        %v312 = vld [vmem:[%s266 + $0x70] sm:$0xff]
        %v313 = vld [vmem:[%s266 + $0x78] sm:$0xff]
        %v314 = vld [vmem:[%s266 + $0x80] sm:$0xff]
        %v315 = vld [vmem:[%s266 + $0x88] sm:$0xff]
        %v316 = vld [vmem:[%s266 + $0x90] sm:$0xff]
        %v317 = vld [vmem:[%s266 + $0x98] sm:$0xff]
        %v318 = vld [vmem:[%s266 + $0xa0] sm:$0xff]
        %v319 = vld [vmem:[%s266 + $0xa8] sm:$0xff]
        %v320 = vld [vmem:[%s266 + $0xb0] sm:$0xff]
        %v321 = vld [vmem:[%s266 + $0xb8] sm:$0xff]
        %v322 = vld [vmem:[%s266 + $0xc0] sm:$0xff]
        %v323 = vld [vmem:[%s266 + $0xc8] sm:$0xff]
        %v324 = vld [vmem:[%s266 + $0xd0] sm:$0xff]
        %v325 = vld [vmem:[%s266 + $0xd8] sm:$0xff]
        %v326 = vld [vmem:[%s266 + $0xe0] sm:$0xff]
        %v327 = vld [vmem:[%s266 + $0xe8] sm:$0xff]
        %v328 = vld [vmem:[%s266 + $0xf0] sm:$0xff]
        %v329 = vld [vmem:[%s266 + $0xf8] sm:$0xff]
        %v330 = vpack.c.bf16 %v299, %v298
        %v331 = vpack.c.bf16 %v301, %v300
        %v332 = vpack.c.bf16 %v303, %v302
        %v333 = vpack.c.bf16 %v305, %v304
        %v334 = vpack.c.bf16 %v307, %v306
        %v335 = vpack.c.bf16 %v309, %v308
        %v336 = vpack.c.bf16 %v311, %v310
        %v337 = vpack.c.bf16 %v313, %v312
        %v338 = vpack.c.bf16 %v315, %v314
        %v339 = vpack.c.bf16 %v317, %v316
        %v340 = vpack.c.bf16 %v319, %v318
        %v341 = vpack.c.bf16 %v321, %v320
        %v342 = vpack.c.bf16 %v323, %v322
        %v343 = vpack.c.bf16 %v325, %v324
        %v344 = vpack.c.bf16 %v327, %v326
        %v345 = vpack.c.bf16 %v329, %v328
        %v346 = vld [vmem:[%s1] sm:$0xf]
        %v347 = vld [vmem:[%s1 + $0x4] sm:$0xf]
        %v348 = vld [vmem:[%s1 + $0x8] sm:$0xf]
        %v349 = vld [vmem:[%s1 + $0xc] sm:$0xf]
        %v350 = vld [vmem:[%s1 + $0x10] sm:$0xf]
        %v351 = vld [vmem:[%s1 + $0x14] sm:$0xf]
        %v352 = vld [vmem:[%s1 + $0x18] sm:$0xf]
        %v353 = vld [vmem:[%s1 + $0x1c] sm:$0xf]
        %v354 = vld [vmem:[%s1 + $0x20] sm:$0xf]
        %v355 = vld [vmem:[%s1 + $0x24] sm:$0xf]
        %v356 = vld [vmem:[%s1 + $0x28] sm:$0xf]
        %v357 = vld [vmem:[%s1 + $0x2c] sm:$0xf]
        %v358 = vld [vmem:[%s1 + $0x30] sm:$0xf]
        %v359 = vld [vmem:[%s1 + $0x34] sm:$0xf]
        %v360 = vld [vmem:[%s1 + $0x38] sm:$0xf]
        %v361 = vld [vmem:[%s1 + $0x3c] sm:$0xf]
        %v362 = vld [vmem:[%s2] sm:$0x1]
        %v364 = vlaneseq
        %v365 = vshrl.u32 %v364, 7
        %v366 = vsub.s32 0, %v365
        %v367 = vrot.slane %v362, %v366
        %v385 = vunpack.c.l.b16 %v346
        %v386 = vunpack.c.l.b16 %v347
        %v387 = vunpack.c.l.b16 %v348
        %v388 = vunpack.c.l.b16 %v349
        %v389 = vunpack.c.l.b16 %v350
        %v390 = vunpack.c.l.b16 %v351
        %v391 = vunpack.c.l.b16 %v352
        %v392 = vunpack.c.l.b16 %v353
        %v393 = vunpack.c.l.b16 %v354
        %v394 = vunpack.c.l.b16 %v355
        %v395 = vunpack.c.l.b16 %v356
        %v396 = vunpack.c.l.b16 %v357
        %v397 = vunpack.c.l.b16 %v358
        %v398 = vunpack.c.l.b16 %v359
        %v399 = vunpack.c.l.b16 %v360
        %v400 = vunpack.c.l.b16 %v361
        %v401 = vpack.c.b16 %v386, %v385
        %v402 = vpack.c.b16 %v388, %v387
        %v403 = vpack.c.b16 %v390, %v389
        %v404 = vpack.c.b16 %v392, %v391
        %v405 = vpack.c.b16 %v394, %v393
        %v406 = vpack.c.b16 %v396, %v395
        %v407 = vpack.c.b16 %v398, %v397
        %v408 = vpack.c.b16 %v400, %v399
        %417 = vmatprep.subr.bf16.mxu0 0
        %418 = vmatpush1.bf16.msra.mxu0 %v408
        %419 = vmatprep.subr.bf16.mxu0 0
        %420 = vmatpush1.bf16.msra.mxu0 %v407
        %421 = vmatprep.subr.bf16.mxu0 0
        %422 = vmatpush1.bf16.msra.mxu0 %v406
        %423 = vmatprep.subr.bf16.mxu0 0
        %424 = vmatpush1.bf16.msra.mxu0 %v405
        %425 = vmatprep.subr.bf16.mxu0 0
        %426 = vmatpush1.bf16.msra.mxu0 %v404
        %427 = vmatprep.subr.bf16.mxu0 0
        %428 = vmatpush1.bf16.msra.mxu0 %v403
        %429 = vmatprep.subr.bf16.mxu0 0
        %430 = vmatpush1.bf16.msra.mxu0 %v402
        %431 = vmatprep.subr.bf16.mxu0 0
        %432 = vmatpush1.bf16.msra.mxu0 %v401
        %433 = vmatprep.subr.bf16.mxu0 0
        %434 = vmatpush2.bf16.msra.mxu0 0
        %435 = vmatprep.subr.bf16.mxu0 0
        %436 = vmatpush2.bf16.msra.mxu0 0
        %437 = vmatprep.subr.bf16.mxu0 0
        %438 = vmatpush2.bf16.msra.mxu0 0
        %439 = vmatprep.subr.bf16.mxu0 0
        %440 = vmatpush2.bf16.msra.mxu0 0
        %441 = vmatprep.subr.bf16.mxu0 0
        %442 = vmatpush2.bf16.msra.mxu0 0
        %443 = vmatprep.subr.bf16.mxu0 0
        %444 = vmatpush2.bf16.msra.mxu0 0
        %445 = vmatprep.subr.bf16.mxu0 0
        %446 = vmatpush2.bf16.msra.mxu0 0
        %447 = vmatprep.subr.bf16.mxu0 0
        %448 = vmatpush2.bf16.msra.mxu0 0
        %449 = vmatprep.mubr.bf16.mxu0 0
        %450 = vmatmul.mubr.bf16.gmra.mxu0 %v330
        %v451 = vpop.f32.mrf.mxu0
        %v452 = vadd.f32 %v367, %v451
        %v453 = vpop.f32.mrf.mxu0
        %v454 = vpop.f32.mrf.mxu0
        %v455 = vadd.f32 %v367, %v454
        %v456 = vpop.f32.mrf.mxu0
        %457 = vmatprep.mubr.bf16.mxu0 0
        %458 = vmatmul.mubr.bf16.gmra.mxu0 %v331
        %v459 = vpop.f32.mrf.mxu0
        %v460 = vadd.f32 %v367, %v459
        %v461 = vpop.f32.mrf.mxu0
        %v462 = vpop.f32.mrf.mxu0
        %v463 = vadd.f32 %v367, %v462
        %v464 = vpop.f32.mrf.mxu0
        %465 = vmatprep.mubr.bf16.mxu0 0
        %466 = vmatmul.mubr.bf16.gmra.mxu0 %v332
        %v467 = vpop.f32.mrf.mxu0
        %v468 = vadd.f32 %v367, %v467
        %v469 = vpop.f32.mrf.mxu0
        %v470 = vpop.f32.mrf.mxu0
        %v471 = vadd.f32 %v367, %v470
        %v472 = vpop.f32.mrf.mxu0
        %473 = vmatprep.mubr.bf16.mxu0 0
        %474 = vmatmul.mubr.bf16.gmra.mxu0 %v333
        %v475 = vpop.f32.mrf.mxu0
        %v476 = vadd.f32 %v367, %v475
        %v477 = vpop.f32.mrf.mxu0
        %v478 = vpop.f32.mrf.mxu0
        %v479 = vadd.f32 %v367, %v478
        %v480 = vpop.f32.mrf.mxu0
        %481 = vmatprep.mubr.bf16.mxu0 0
        %482 = vmatmul.mubr.bf16.gmra.mxu0 %v334
        %v483 = vpop.f32.mrf.mxu0
        %v484 = vadd.f32 %v367, %v483
        %v485 = vpop.f32.mrf.mxu0
        %v486 = vpop.f32.mrf.mxu0
        %v487 = vadd.f32 %v367, %v486
        %v488 = vpop.f32.mrf.mxu0
        %489 = vmatprep.mubr.bf16.mxu0 0
        %490 = vmatmul.mubr.bf16.gmra.mxu0 %v335
        %v491 = vpop.f32.mrf.mxu0
        %v492 = vadd.f32 %v367, %v491
        %v493 = vpop.f32.mrf.mxu0
        %v494 = vpop.f32.mrf.mxu0
        %v495 = vadd.f32 %v367, %v494
        %v496 = vpop.f32.mrf.mxu0
        %497 = vmatprep.mubr.bf16.mxu0 0
        %498 = vmatmul.mubr.bf16.gmra.mxu0 %v336
        %v499 = vpop.f32.mrf.mxu0
        %v500 = vadd.f32 %v367, %v499
        %v501 = vpop.f32.mrf.mxu0
        %v502 = vpop.f32.mrf.mxu0
        %v503 = vadd.f32 %v367, %v502
        %v504 = vpop.f32.mrf.mxu0
        %505 = vmatprep.mubr.bf16.mxu0 0
        %506 = vmatmul.mubr.bf16.gmra.mxu0 %v337
        %v507 = vpop.f32.mrf.mxu0
        %v508 = vadd.f32 %v367, %v507
        %v509 = vpop.f32.mrf.mxu0
        %v510 = vpop.f32.mrf.mxu0
        %v511 = vadd.f32 %v367, %v510
        %v512 = vpop.f32.mrf.mxu0
        %513 = vmatprep.mubr.bf16.mxu0 0
        %514 = vmatmul.mubr.bf16.gmra.mxu0 %v338
        %v515 = vpop.f32.mrf.mxu0
        %v516 = vadd.f32 %v367, %v515
        %v517 = vpop.f32.mrf.mxu0
        %v518 = vpop.f32.mrf.mxu0
        %v519 = vadd.f32 %v367, %v518
        %v520 = vpop.f32.mrf.mxu0
        %521 = vmatprep.mubr.bf16.mxu0 0
        %522 = vmatmul.mubr.bf16.gmra.mxu0 %v339
        %v523 = vpop.f32.mrf.mxu0
        %v524 = vadd.f32 %v367, %v523
        %v525 = vpop.f32.mrf.mxu0
        %v526 = vpop.f32.mrf.mxu0
        %v527 = vadd.f32 %v367, %v526
        %v528 = vpop.f32.mrf.mxu0
        %529 = vmatprep.mubr.bf16.mxu0 0
        %530 = vmatmul.mubr.bf16.gmra.mxu0 %v340
        %v531 = vpop.f32.mrf.mxu0
        %v532 = vadd.f32 %v367, %v531
        %v533 = vpop.f32.mrf.mxu0
        %v534 = vpop.f32.mrf.mxu0
        %v535 = vadd.f32 %v367, %v534
        %v536 = vpop.f32.mrf.mxu0
        %537 = vmatprep.mubr.bf16.mxu0 0
        %538 = vmatmul.mubr.bf16.gmra.mxu0 %v341
        %v539 = vpop.f32.mrf.mxu0
        %v540 = vadd.f32 %v367, %v539
        %v541 = vpop.f32.mrf.mxu0
        %v542 = vpop.f32.mrf.mxu0
        %v543 = vadd.f32 %v367, %v542
        %v544 = vpop.f32.mrf.mxu0
        %545 = vmatprep.mubr.bf16.mxu0 0
        %546 = vmatmul.mubr.bf16.gmra.mxu0 %v342
        %v547 = vpop.f32.mrf.mxu0
        %v548 = vadd.f32 %v367, %v547
        %v549 = vpop.f32.mrf.mxu0
        %v550 = vpop.f32.mrf.mxu0
        %v551 = vadd.f32 %v367, %v550
        %v552 = vpop.f32.mrf.mxu0
        %553 = vmatprep.mubr.bf16.mxu0 0
        %554 = vmatmul.mubr.bf16.gmra.mxu0 %v343
        %v555 = vpop.f32.mrf.mxu0
        %v556 = vadd.f32 %v367, %v555
        %v557 = vpop.f32.mrf.mxu0
        %v558 = vpop.f32.mrf.mxu0
        %v559 = vadd.f32 %v367, %v558
        %v560 = vpop.f32.mrf.mxu0
        %561 = vmatprep.mubr.bf16.mxu0 0
        %562 = vmatmul.mubr.bf16.gmra.mxu0 %v344
        %v563 = vpop.f32.mrf.mxu0
        %v564 = vadd.f32 %v367, %v563
        %v565 = vpop.f32.mrf.mxu0
        %v566 = vpop.f32.mrf.mxu0
        %v567 = vadd.f32 %v367, %v566
        %v568 = vpop.f32.mrf.mxu0
        %569 = vmatprep.mubr.bf16.mxu0 0
        %570 = vmatmul.mubr.bf16.gmra.mxu0 %v345
        %v571 = vpop.f32.mrf.mxu0
        %v572 = vadd.f32 %v367, %v571
        %v573 = vpop.f32.mrf.mxu0
        %v574 = vpop.f32.mrf.mxu0
        %v575 = vadd.f32 %v367, %v574
        %v576 = vpop.f32.mrf.mxu0
        %577 = vdwg.mxu0
        %v578 = vmax.f32 %v452, 0.0
        %v579 = vmax.f32 %v455, 0.0
        %v580 = vmax.f32 %v460, 0.0
        %v581 = vmax.f32 %v463, 0.0
        %v582 = vmax.f32 %v468, 0.0
        %v583 = vmax.f32 %v471, 0.0
        %v584 = vmax.f32 %v476, 0.0
        %v585 = vmax.f32 %v479, 0.0
        %v586 = vmax.f32 %v484, 0.0
        %v587 = vmax.f32 %v487, 0.0
        %v588 = vmax.f32 %v492, 0.0
        %v589 = vmax.f32 %v495, 0.0
        %v590 = vmax.f32 %v500, 0.0
        %v591 = vmax.f32 %v503, 0.0
        %v592 = vmax.f32 %v508, 0.0
        %v593 = vmax.f32 %v511, 0.0
        %v594 = vmax.f32 %v516, 0.0
        %v595 = vmax.f32 %v519, 0.0
        %v596 = vmax.f32 %v524, 0.0
        %v597 = vmax.f32 %v527, 0.0
        %v598 = vmax.f32 %v532, 0.0
        %v599 = vmax.f32 %v535, 0.0
        %v600 = vmax.f32 %v540, 0.0
        %v601 = vmax.f32 %v543, 0.0
        %v602 = vmax.f32 %v548, 0.0
        %v603 = vmax.f32 %v551, 0.0
        %v604 = vmax.f32 %v556, 0.0
        %v605 = vmax.f32 %v559, 0.0
        %v606 = vmax.f32 %v564, 0.0
        %v607 = vmax.f32 %v567, 0.0
        %v608 = vmax.f32 %v572, 0.0
        %v609 = vmax.f32 %v575, 0.0
        %v610 = vmin.f32 %v578, 6.0
        %v611 = vmin.f32 %v579, 6.0
        %v612 = vmin.f32 %v580, 6.0
        %v613 = vmin.f32 %v581, 6.0
        %v614 = vmin.f32 %v582, 6.0
        %v615 = vmin.f32 %v583, 6.0
        %v616 = vmin.f32 %v584, 6.0
        %v617 = vmin.f32 %v585, 6.0
        %v618 = vmin.f32 %v586, 6.0
        %v619 = vmin.f32 %v587, 6.0
        %v620 = vmin.f32 %v588, 6.0
        %v621 = vmin.f32 %v589, 6.0
        %v622 = vmin.f32 %v590, 6.0
        %v623 = vmin.f32 %v591, 6.0
        %v624 = vmin.f32 %v592, 6.0
        %v625 = vmin.f32 %v593, 6.0
        %v626 = vmin.f32 %v594, 6.0
        %v627 = vmin.f32 %v595, 6.0
        %v628 = vmin.f32 %v596, 6.0
        %v629 = vmin.f32 %v597, 6.0
        %v630 = vmin.f32 %v598, 6.0
        %v631 = vmin.f32 %v599, 6.0
        %v632 = vmin.f32 %v600, 6.0
        %v633 = vmin.f32 %v601, 6.0
        %v634 = vmin.f32 %v602, 6.0
        %v635 = vmin.f32 %v603, 6.0
        %v636 = vmin.f32 %v604, 6.0
        %v637 = vmin.f32 %v605, 6.0
        %v638 = vmin.f32 %v606, 6.0
        %v639 = vmin.f32 %v607, 6.0
        %v640 = vmin.f32 %v608, 6.0
        %v641 = vmin.f32 %v609, 6.0
        %vm642 = vcmask 130048
        %643 = vst.msk [vmem:[#allocation2] sm:$0xff] %vm642, 0.0
        %644 = vst.msk [vmem:[#allocation2 + $0x8] sm:$0xff] %vm642, 0.0
        %vm645 = vcmask 123904
        %646 = vst.msk [vmem:[#allocation2 + $0x10] sm:$0x3] %vm645, 0.0
        %s647 = scalar_lea.vmem [#allocation2], 408
        %648 = vst.msk [vmem:[%s647] sm:$0xff] %vm642, 0.0
        %649 = vst.msk [vmem:[%s647 + $0x8] sm:$0xff] %vm642, 0.0
        %650 = vst.msk [vmem:[%s647 + $0x10] sm:$0x3] %vm645, 0.0
        %s651 = scalar_lea.vmem [#allocation2], 24
        %vm652 = vcmask 122880
        %653 = vst.msk [vmem:[%s651] sm:$0x1] %vm652, 0.0
        %654 = vst.msk [vmem:[%s651 + $0x18] sm:$0x1] %vm652, 0.0
        %655 = vst.msk [vmem:[%s651 + $0x30] sm:$0x1] %vm652, 0.0
        %656 = vst.msk [vmem:[%s651 + $0x48] sm:$0x1] %vm652, 0.0
        %657 = vst.msk [vmem:[%s651 + $0x60] sm:$0x1] %vm652, 0.0
        %658 = vst.msk [vmem:[%s651 + $0x78] sm:$0x1] %vm652, 0.0
        %659 = vst.msk [vmem:[%s651 + $0x90] sm:$0x1] %vm652, 0.0
        %660 = vst.msk [vmem:[%s651 + $0xa8] sm:$0x1] %vm652, 0.0
        %661 = vst.msk [vmem:[%s651 + $0xc0] sm:$0x1] %vm652, 0.0
        %662 = vst.msk [vmem:[%s651 + $0xd8] sm:$0x1] %vm652, 0.0
        %663 = vst.msk [vmem:[%s651 + $0xf0] sm:$0x1] %vm652, 0.0
        %664 = vst.msk [vmem:[%s651 + $0x108] sm:$0x1] %vm652, 0.0
        %665 = vst.msk [vmem:[%s651 + $0x120] sm:$0x1] %vm652, 0.0
        %666 = vst.msk [vmem:[%s651 + $0x138] sm:$0x1] %vm652, 0.0
        %667 = vst.msk [vmem:[%s651 + $0x150] sm:$0x1] %vm652, 0.0
        %668 = vst.msk [vmem:[%s651 + $0x168] sm:$0x1] %vm652, 0.0
        %669 = vst.msk [vmem:[%s651 + $0x11] sm:$0x1] %vm652, 0.0
        %670 = vst.msk [vmem:[%s651 + $0x29] sm:$0x1] %vm652, 0.0
        %671 = vst.msk [vmem:[%s651 + $0x41] sm:$0x1] %vm652, 0.0
        %672 = vst.msk [vmem:[%s651 + $0x59] sm:$0x1] %vm652, 0.0
        %673 = vst.msk [vmem:[%s651 + $0x71] sm:$0x1] %vm652, 0.0
        %674 = vst.msk [vmem:[%s651 + $0x89] sm:$0x1] %vm652, 0.0
        %675 = vst.msk [vmem:[%s651 + $0xa1] sm:$0x1] %vm652, 0.0
        %676 = vst.msk [vmem:[%s651 + $0xb9] sm:$0x1] %vm652, 0.0
        %677 = vst.msk [vmem:[%s651 + $0xd1] sm:$0x1] %vm652, 0.0
        %678 = vst.msk [vmem:[%s651 + $0xe9] sm:$0x1] %vm652, 0.0
        %679 = vst.msk [vmem:[%s651 + $0x101] sm:$0x1] %vm652, 0.0
        %680 = vst.msk [vmem:[%s651 + $0x119] sm:$0x1] %vm652, 0.0
        %681 = vst.msk [vmem:[%s651 + $0x131] sm:$0x1] %vm652, 0.0
        %682 = vst.msk [vmem:[%s651 + $0x149] sm:$0x1] %vm652, 0.0
        %683 = vst.msk [vmem:[%s651 + $0x161] sm:$0x1] %vm652, 0.0
        %684 = vst.msk [vmem:[%s651 + $0x179] sm:$0x1] %vm652, 0.0
        %685 = vst.msk [vmem:[%s651 + $0x1] sm:$0xff] %vm642, %v610
        %686 = vst.msk [vmem:[%s651 + $0x9] sm:$0xff] %vm642, %v611
        %687 = vst.msk [vmem:[%s651 + $0x19] sm:$0xff] %vm642, %v612
        %688 = vst.msk [vmem:[%s651 + $0x21] sm:$0xff] %vm642, %v613
        %689 = vst.msk [vmem:[%s651 + $0x31] sm:$0xff] %vm642, %v614
        %690 = vst.msk [vmem:[%s651 + $0x39] sm:$0xff] %vm642, %v615
        %691 = vst.msk [vmem:[%s651 + $0x49] sm:$0xff] %vm642, %v616
        %692 = vst.msk [vmem:[%s651 + $0x51] sm:$0xff] %vm642, %v617
        %693 = vst.msk [vmem:[%s651 + $0x61] sm:$0xff] %vm642, %v618
        %694 = vst.msk [vmem:[%s651 + $0x69] sm:$0xff] %vm642, %v619
        %695 = vst.msk [vmem:[%s651 + $0x79] sm:$0xff] %vm642, %v620
        %696 = vst.msk [vmem:[%s651 + $0x81] sm:$0xff] %vm642, %v621
        %697 = vst.msk [vmem:[%s651 + $0x91] sm:$0xff] %vm642, %v622
        %698 = vst.msk [vmem:[%s651 + $0x99] sm:$0xff] %vm642, %v623
        %699 = vst.msk [vmem:[%s651 + $0xa9] sm:$0xff] %vm642, %v624
        %700 = vst.msk [vmem:[%s651 + $0xb1] sm:$0xff] %vm642, %v625
        %701 = vst.msk [vmem:[%s651 + $0xc1] sm:$0xff] %vm642, %v626
        %702 = vst.msk [vmem:[%s651 + $0xc9] sm:$0xff] %vm642, %v627
        %703 = vst.msk [vmem:[%s651 + $0xd9] sm:$0xff] %vm642, %v628
        %704 = vst.msk [vmem:[%s651 + $0xe1] sm:$0xff] %vm642, %v629
        %705 = vst.msk [vmem:[%s651 + $0xf1] sm:$0xff] %vm642, %v630
        %706 = vst.msk [vmem:[%s651 + $0xf9] sm:$0xff] %vm642, %v631
        %707 = vst.msk [vmem:[%s651 + $0x109] sm:$0xff] %vm642, %v632
        %708 = vst.msk [vmem:[%s651 + $0x111] sm:$0xff] %vm642, %v633
        %709 = vst.msk [vmem:[%s651 + $0x121] sm:$0xff] %vm642, %v634
        %710 = vst.msk [vmem:[%s651 + $0x129] sm:$0xff] %vm642, %v635
        %711 = vst.msk [vmem:[%s651 + $0x139] sm:$0xff] %vm642, %v636
        %712 = vst.msk [vmem:[%s651 + $0x141] sm:$0xff] %vm642, %v637
        %713 = vst.msk [vmem:[%s651 + $0x151] sm:$0xff] %vm642, %v638
        %714 = vst.msk [vmem:[%s651 + $0x159] sm:$0xff] %vm642, %v639
        %715 = vst.msk [vmem:[%s651 + $0x169] sm:$0xff] %vm642, %v640
        %716 = vst.msk [vmem:[%s651 + $0x171] sm:$0xff] %vm642, %v641
        %v717 = vld [vmem:[%s3] sm:$0xff]
        %v718 = vld [vmem:[%s3 + $0x8] sm:$0x1]
        %v719 = vld [vmem:[#allocation2] sm:$0xff]
        %v720 = vld [vmem:[#allocation2 + $0x8] sm:$0xff]
        %v721 = vld [vmem:[#allocation2 + $0x18] sm:$0xff]
        %v722 = vld [vmem:[#allocation2 + $0x20] sm:$0xff]
        %v723 = vld [vmem:[#allocation2 + $0x30] sm:$0xff]
        %v724 = vld [vmem:[#allocation2 + $0x38] sm:$0xff]
        %v725 = vld [vmem:[#allocation2 + $0x48] sm:$0xff]
        %v726 = vld [vmem:[#allocation2 + $0x50] sm:$0xff]
        %v727 = vld [vmem:[#allocation2 + $0x60] sm:$0xff]
        %v728 = vld [vmem:[#allocation2 + $0x68] sm:$0xff]
        %v729 = vld [vmem:[#allocation2 + $0x78] sm:$0xff]
        %v730 = vld [vmem:[#allocation2 + $0x80] sm:$0xff]
        %v731 = vld [vmem:[#allocation2 + $0x90] sm:$0xff]
        %v732 = vld [vmem:[#allocation2 + $0x98] sm:$0xff]
        %v733 = vld [vmem:[#allocation2 + $0xa8] sm:$0xff]
        %v734 = vld [vmem:[#allocation2 + $0xb0] sm:$0xff]
        %v735 = vld [vmem:[#allocation2 + $0xc0] sm:$0xff]
        %v736 = vld [vmem:[#allocation2 + $0xc8] sm:$0xff]
        %v737 = vld [vmem:[#allocation2 + $0xd8] sm:$0xff]
        %v738 = vld [vmem:[#allocation2 + $0xe0] sm:$0xff]
        %v739 = vld [vmem:[#allocation2 + $0xf0] sm:$0xff]
        %v740 = vld [vmem:[#allocation2 + $0xf8] sm:$0xff]
        %v741 = vld [vmem:[#allocation2 + $0x108] sm:$0xff]
        %v742 = vld [vmem:[#allocation2 + $0x110] sm:$0xff]
        %v743 = vld [vmem:[#allocation2 + $0x120] sm:$0xff]
        %v744 = vld [vmem:[#allocation2 + $0x128] sm:$0xff]
        %v745 = vld [vmem:[#allocation2 + $0x138] sm:$0xff]
        %v746 = vld [vmem:[#allocation2 + $0x140] sm:$0xff]
        %v747 = vld [vmem:[#allocation2 + $0x150] sm:$0xff]
        %v748 = vld [vmem:[#allocation2 + $0x158] sm:$0xff]
        %v749 = vld [vmem:[#allocation2 + $0x168] sm:$0xff]
        %v750 = vld [vmem:[#allocation2 + $0x170] sm:$0xff]
        %v751 = vlaneseq
        %v752 = vshrl.u32 %v751, 7
        %v753 = vsub.s32 0, %v752
        %v754 = vrot.slane %v717, %v753
        %v755 = vmul.f32 %v719, %v754
        %v756 = vmul.f32 %v720, %v754
        %v757 = vmul.f32 %v721, %v754
        %v758 = vmul.f32 %v722, %v754
        %v759 = vmul.f32 %v723, %v754
        %v760 = vmul.f32 %v724, %v754
        %v761 = vmul.f32 %v725, %v754
        %v762 = vmul.f32 %v726, %v754
        %v763 = vmul.f32 %v727, %v754
        %v764 = vmul.f32 %v728, %v754
        %v765 = vmul.f32 %v729, %v754
        %v766 = vmul.f32 %v730, %v754
        %v767 = vmul.f32 %v731, %v754
        %v768 = vmul.f32 %v732, %v754
        %v769 = vmul.f32 %v733, %v754
        %v770 = vmul.f32 %v734, %v754
        %v771 = vmul.f32 %v735, %v754
        %v772 = vmul.f32 %v736, %v754
        %v773 = vmul.f32 %v737, %v754
        %v774 = vmul.f32 %v738, %v754
        %v775 = vmul.f32 %v739, %v754
        %v776 = vmul.f32 %v740, %v754
        %v777 = vmul.f32 %v741, %v754
        %v778 = vmul.f32 %v742, %v754
        %v779 = vmul.f32 %v743, %v754
        %v780 = vmul.f32 %v744, %v754
        %v781 = vmul.f32 %v745, %v754
        %v782 = vmul.f32 %v746, %v754
        %v783 = vmul.f32 %v747, %v754
        %v784 = vmul.f32 %v748, %v754
        %v785 = vmul.f32 %v749, %v754
        %v786 = vmul.f32 %v750, %v754
        %v787 = vld [vmem:[#allocation2 + $0x1] sm:$0xff]
        %v788 = vld [vmem:[#allocation2 + $0x9] sm:$0xff]
        %v789 = vld [vmem:[#allocation2 + $0x19] sm:$0xff]
        %v790 = vld [vmem:[#allocation2 + $0x21] sm:$0xff]
        %v791 = vld [vmem:[#allocation2 + $0x31] sm:$0xff]
        %v792 = vld [vmem:[#allocation2 + $0x39] sm:$0xff]
        %v793 = vld [vmem:[#allocation2 + $0x49] sm:$0xff]
        %v794 = vld [vmem:[#allocation2 + $0x51] sm:$0xff]
        %v795 = vld [vmem:[#allocation2 + $0x61] sm:$0xff]
        %v796 = vld [vmem:[#allocation2 + $0x69] sm:$0xff]
        %v797 = vld [vmem:[#allocation2 + $0x79] sm:$0xff]
        %v798 = vld [vmem:[#allocation2 + $0x81] sm:$0xff]
        %v799 = vld [vmem:[#allocation2 + $0x91] sm:$0xff]
        %v800 = vld [vmem:[#allocation2 + $0x99] sm:$0xff]
        %v801 = vld [vmem:[#allocation2 + $0xa9] sm:$0xff]
        %v802 = vld [vmem:[#allocation2 + $0xb1] sm:$0xff]
        %v803 = vld [vmem:[#allocation2 + $0xc1] sm:$0xff]
        %v804 = vld [vmem:[#allocation2 + $0xc9] sm:$0xff]
        %v805 = vld [vmem:[#allocation2 + $0xd9] sm:$0xff]
        %v806 = vld [vmem:[#allocation2 + $0xe1] sm:$0xff]
        %v807 = vld [vmem:[#allocation2 + $0xf1] sm:$0xff]
        %v808 = vld [vmem:[#allocation2 + $0xf9] sm:$0xff]
        %v809 = vld [vmem:[#allocation2 + $0x109] sm:$0xff]
        %v810 = vld [vmem:[#allocation2 + $0x111] sm:$0xff]
        %v811 = vld [vmem:[#allocation2 + $0x121] sm:$0xff]
        %v812 = vld [vmem:[#allocation2 + $0x129] sm:$0xff]
        %v813 = vld [vmem:[#allocation2 + $0x139] sm:$0xff]
        %v814 = vld [vmem:[#allocation2 + $0x141] sm:$0xff]
        %v815 = vld [vmem:[#allocation2 + $0x151] sm:$0xff]
        %v816 = vld [vmem:[#allocation2 + $0x159] sm:$0xff]
        %v817 = vld [vmem:[#allocation2 + $0x169] sm:$0xff]
        %v818 = vld [vmem:[#allocation2 + $0x171] sm:$0xff]
        %v819 = vlaneseq
        %v820 = vshrl.u32 %v819, 7
        %v821 = vsub.s32 1, %v820
        %v822 = vrot.slane %v717, %v821
        %v823 = vmul.f32 %v787, %v822
        %v824 = vmul.f32 %v788, %v822
        %v825 = vmul.f32 %v789, %v822
        %v826 = vmul.f32 %v790, %v822
        %v827 = vmul.f32 %v791, %v822
        %v828 = vmul.f32 %v792, %v822
        %v829 = vmul.f32 %v793, %v822
        %v830 = vmul.f32 %v794, %v822
        %v831 = vmul.f32 %v795, %v822
        %v832 = vmul.f32 %v796, %v822
        %v833 = vmul.f32 %v797, %v822
        %v834 = vmul.f32 %v798, %v822
        %v835 = vmul.f32 %v799, %v822
        %v836 = vmul.f32 %v800, %v822
        %v837 = vmul.f32 %v801, %v822
        %v838 = vmul.f32 %v802, %v822
        %v839 = vmul.f32 %v803, %v822
        %v840 = vmul.f32 %v804, %v822
        %v841 = vmul.f32 %v805, %v822
        %v842 = vmul.f32 %v806, %v822
        %v843 = vmul.f32 %v807, %v822
        %v844 = vmul.f32 %v808, %v822
        %v845 = vmul.f32 %v809, %v822
        %v846 = vmul.f32 %v810, %v822
        %v847 = vmul.f32 %v811, %v822
        %v848 = vmul.f32 %v812, %v822
        %v849 = vmul.f32 %v813, %v822
        %v850 = vmul.f32 %v814, %v822
        %v851 = vmul.f32 %v815, %v822
        %v852 = vmul.f32 %v816, %v822
        %v853 = vmul.f32 %v817, %v822
        %v854 = vmul.f32 %v818, %v822
        %v855 = vadd.f32 %v755, %v823
        %v856 = vadd.f32 %v756, %v824
        %v857 = vadd.f32 %v757, %v825
        %v858 = vadd.f32 %v758, %v826
        %v859 = vadd.f32 %v759, %v827
        %v860 = vadd.f32 %v760, %v828
        %v861 = vadd.f32 %v761, %v829
        %v862 = vadd.f32 %v762, %v830
        %v863 = vadd.f32 %v763, %v831
        %v864 = vadd.f32 %v764, %v832
        %v865 = vadd.f32 %v765, %v833
        %v866 = vadd.f32 %v766, %v834
        %v867 = vadd.f32 %v767, %v835
        %v868 = vadd.f32 %v768, %v836
        %v869 = vadd.f32 %v769, %v837
        %v870 = vadd.f32 %v770, %v838
        %v871 = vadd.f32 %v771, %v839
        %v872 = vadd.f32 %v772, %v840
        %v873 = vadd.f32 %v773, %v841
        %v874 = vadd.f32 %v774, %v842
        %v875 = vadd.f32 %v775, %v843
        %v876 = vadd.f32 %v776, %v844
        %v877 = vadd.f32 %v777, %v845
        %v878 = vadd.f32 %v778, %v846
        %v879 = vadd.f32 %v779, %v847
        %v880 = vadd.f32 %v780, %v848
        %v881 = vadd.f32 %v781, %v849
        %v882 = vadd.f32 %v782, %v850
        %v883 = vadd.f32 %v783, %v851
        %v884 = vadd.f32 %v784, %v852
        %v885 = vadd.f32 %v785, %v853
        %v886 = vadd.f32 %v786, %v854
        %v887 = vld [vmem:[#allocation2 + $0x2] sm:$0xff]
        %v888 = vld [vmem:[#allocation2 + $0xa] sm:$0xff]
        %v889 = vld [vmem:[#allocation2 + $0x1a] sm:$0xff]
        %v890 = vld [vmem:[#allocation2 + $0x22] sm:$0xff]
        %v891 = vld [vmem:[#allocation2 + $0x32] sm:$0xff]
        %v892 = vld [vmem:[#allocation2 + $0x3a] sm:$0xff]
        %v893 = vld [vmem:[#allocation2 + $0x4a] sm:$0xff]
        %v894 = vld [vmem:[#allocation2 + $0x52] sm:$0xff]
        %v895 = vld [vmem:[#allocation2 + $0x62] sm:$0xff]
        %v896 = vld [vmem:[#allocation2 + $0x6a] sm:$0xff]
        %v897 = vld [vmem:[#allocation2 + $0x7a] sm:$0xff]
        %v898 = vld [vmem:[#allocation2 + $0x82] sm:$0xff]
        %v899 = vld [vmem:[#allocation2 + $0x92] sm:$0xff]
        %v900 = vld [vmem:[#allocation2 + $0x9a] sm:$0xff]
        %v901 = vld [vmem:[#allocation2 + $0xaa] sm:$0xff]
        %v902 = vld [vmem:[#allocation2 + $0xb2] sm:$0xff]
        %v903 = vld [vmem:[#allocation2 + $0xc2] sm:$0xff]
        %v904 = vld [vmem:[#allocation2 + $0xca] sm:$0xff]
        %v905 = vld [vmem:[#allocation2 + $0xda] sm:$0xff]
        %v906 = vld [vmem:[#allocation2 + $0xe2] sm:$0xff]
        %v907 = vld [vmem:[#allocation2 + $0xf2] sm:$0xff]
        %v908 = vld [vmem:[#allocation2 + $0xfa] sm:$0xff]
        %v909 = vld [vmem:[#allocation2 + $0x10a] sm:$0xff]
        %v910 = vld [vmem:[#allocation2 + $0x112] sm:$0xff]
        %v911 = vld [vmem:[#allocation2 + $0x122] sm:$0xff]
        %v912 = vld [vmem:[#allocation2 + $0x12a] sm:$0xff]
        %v913 = vld [vmem:[#allocation2 + $0x13a] sm:$0xff]
        %v914 = vld [vmem:[#allocation2 + $0x142] sm:$0xff]
        %v915 = vld [vmem:[#allocation2 + $0x152] sm:$0xff]
        %v916 = vld [vmem:[#allocation2 + $0x15a] sm:$0xff]
        %v917 = vld [vmem:[#allocation2 + $0x16a] sm:$0xff]
        %v918 = vld [vmem:[#allocation2 + $0x172] sm:$0xff]
        %v919 = vlaneseq
        %v920 = vshrl.u32 %v919, 7
        %v921 = vsub.s32 2, %v920
        %v922 = vrot.slane %v717, %v921
        %v923 = vmul.f32 %v887, %v922
        %v924 = vmul.f32 %v888, %v922
        %v925 = vmul.f32 %v889, %v922
        %v926 = vmul.f32 %v890, %v922
        %v927 = vmul.f32 %v891, %v922
        %v928 = vmul.f32 %v892, %v922
        %v929 = vmul.f32 %v893, %v922
        %v930 = vmul.f32 %v894, %v922
        %v931 = vmul.f32 %v895, %v922
        %v932 = vmul.f32 %v896, %v922
        %v933 = vmul.f32 %v897, %v922
        %v934 = vmul.f32 %v898, %v922
        %v935 = vmul.f32 %v899, %v922
        %v936 = vmul.f32 %v900, %v922
        %v937 = vmul.f32 %v901, %v922
        %v938 = vmul.f32 %v902, %v922
        %v939 = vmul.f32 %v903, %v922
        %v940 = vmul.f32 %v904, %v922
        %v941 = vmul.f32 %v905, %v922
        %v942 = vmul.f32 %v906, %v922
        %v943 = vmul.f32 %v907, %v922
        %v944 = vmul.f32 %v908, %v922
        %v945 = vmul.f32 %v909, %v922
        %v946 = vmul.f32 %v910, %v922
        %v947 = vmul.f32 %v911, %v922
        %v948 = vmul.f32 %v912, %v922
        %v949 = vmul.f32 %v913, %v922
        %v950 = vmul.f32 %v914, %v922
        %v951 = vmul.f32 %v915, %v922
        %v952 = vmul.f32 %v916, %v922
        %v953 = vmul.f32 %v917, %v922
        %v954 = vmul.f32 %v918, %v922
        %v955 = vadd.f32 %v855, %v923
        %v956 = vadd.f32 %v856, %v924
        %v957 = vadd.f32 %v857, %v925
        %v958 = vadd.f32 %v858, %v926
        %v959 = vadd.f32 %v859, %v927
        %v960 = vadd.f32 %v860, %v928
        %v961 = vadd.f32 %v861, %v929
        %v962 = vadd.f32 %v862, %v930
        %v963 = vadd.f32 %v863, %v931
        %v964 = vadd.f32 %v864, %v932
        %v965 = vadd.f32 %v865, %v933
        %v966 = vadd.f32 %v866, %v934
        %v967 = vadd.f32 %v867, %v935
        %v968 = vadd.f32 %v868, %v936
        %v969 = vadd.f32 %v869, %v937
        %v970 = vadd.f32 %v870, %v938
        %v971 = vadd.f32 %v871, %v939
        %v972 = vadd.f32 %v872, %v940
        %v973 = vadd.f32 %v873, %v941
        %v974 = vadd.f32 %v874, %v942
        %v975 = vadd.f32 %v875, %v943
        %v976 = vadd.f32 %v876, %v944
        %v977 = vadd.f32 %v877, %v945
        %v978 = vadd.f32 %v878, %v946
        %v979 = vadd.f32 %v879, %v947
        %v980 = vadd.f32 %v880, %v948
        %v981 = vadd.f32 %v881, %v949
        %v982 = vadd.f32 %v882, %v950
        %v983 = vadd.f32 %v883, %v951
        %v984 = vadd.f32 %v884, %v952
        %v985 = vadd.f32 %v885, %v953
        %v986 = vadd.f32 %v886, %v954
        %v987 = vld [vmem:[%s651] sm:$0xff]
        %v988 = vld [vmem:[%s651 + $0x8] sm:$0xff]
        %v989 = vld [vmem:[%s651 + $0x18] sm:$0xff]
        %v990 = vld [vmem:[%s651 + $0x20] sm:$0xff]
        %v991 = vld [vmem:[%s651 + $0x30] sm:$0xff]
        %v992 = vld [vmem:[%s651 + $0x38] sm:$0xff]
        %v993 = vld [vmem:[%s651 + $0x48] sm:$0xff]
        %v994 = vld [vmem:[%s651 + $0x50] sm:$0xff]
        %v995 = vld [vmem:[%s651 + $0x60] sm:$0xff]
        %v996 = vld [vmem:[%s651 + $0x68] sm:$0xff]
        %v997 = vld [vmem:[%s651 + $0x78] sm:$0xff]
        %v998 = vld [vmem:[%s651 + $0x80] sm:$0xff]
        %v999 = vld [vmem:[%s651 + $0x90] sm:$0xff]
        %v1000 = vld [vmem:[%s651 + $0x98] sm:$0xff]
        %v1001 = vld [vmem:[%s651 + $0xa8] sm:$0xff]
        %v1002 = vld [vmem:[%s651 + $0xb0] sm:$0xff]
        %v1003 = vld [vmem:[%s651 + $0xc0] sm:$0xff]
        %v1004 = vld [vmem:[%s651 + $0xc8] sm:$0xff]
        %v1005 = vld [vmem:[%s651 + $0xd8] sm:$0xff]
        %v1006 = vld [vmem:[%s651 + $0xe0] sm:$0xff]
        %v1007 = vld [vmem:[%s651 + $0xf0] sm:$0xff]
        %v1008 = vld [vmem:[%s651 + $0xf8] sm:$0xff]
        %v1009 = vld [vmem:[%s651 + $0x108] sm:$0xff]
        %v1010 = vld [vmem:[%s651 + $0x110] sm:$0xff]
        %v1011 = vld [vmem:[%s651 + $0x120] sm:$0xff]
        %v1012 = vld [vmem:[%s651 + $0x128] sm:$0xff]
        %v1013 = vld [vmem:[%s651 + $0x138] sm:$0xff]
        %v1014 = vld [vmem:[%s651 + $0x140] sm:$0xff]
        %v1015 = vld [vmem:[%s651 + $0x150] sm:$0xff]
        %v1016 = vld [vmem:[%s651 + $0x158] sm:$0xff]
        %v1017 = vld [vmem:[%s651 + $0x168] sm:$0xff]
        %v1018 = vld [vmem:[%s651 + $0x170] sm:$0xff]
        %v1019 = vlaneseq
        %v1020 = vshrl.u32 %v1019, 7
        %v1021 = vsub.s32 3, %v1020
        %v1022 = vrot.slane %v717, %v1021
        %v1023 = vmul.f32 %v987, %v1022
        %v1024 = vmul.f32 %v988, %v1022
        %v1025 = vmul.f32 %v989, %v1022
        %v1026 = vmul.f32 %v990, %v1022
        %v1027 = vmul.f32 %v991, %v1022
        %v1028 = vmul.f32 %v992, %v1022
        %v1029 = vmul.f32 %v993, %v1022
        %v1030 = vmul.f32 %v994, %v1022
        %v1031 = vmul.f32 %v995, %v1022
        %v1032 = vmul.f32 %v996, %v1022
        %v1033 = vmul.f32 %v997, %v1022
        %v1034 = vmul.f32 %v998, %v1022
        %v1035 = vmul.f32 %v999, %v1022
        %v1036 = vmul.f32 %v1000, %v1022
        %v1037 = vmul.f32 %v1001, %v1022
        %v1038 = vmul.f32 %v1002, %v1022
        %v1039 = vmul.f32 %v1003, %v1022
        %v1040 = vmul.f32 %v1004, %v1022
        %v1041 = vmul.f32 %v1005, %v1022
        %v1042 = vmul.f32 %v1006, %v1022
        %v1043 = vmul.f32 %v1007, %v1022
        %v1044 = vmul.f32 %v1008, %v1022
        %v1045 = vmul.f32 %v1009, %v1022
        %v1046 = vmul.f32 %v1010, %v1022
        %v1047 = vmul.f32 %v1011, %v1022
        %v1048 = vmul.f32 %v1012, %v1022
        %v1049 = vmul.f32 %v1013, %v1022
        %v1050 = vmul.f32 %v1014, %v1022
        %v1051 = vmul.f32 %v1015, %v1022
        %v1052 = vmul.f32 %v1016, %v1022
        %v1053 = vmul.f32 %v1017, %v1022
        %v1054 = vmul.f32 %v1018, %v1022
        %v1055 = vadd.f32 %v955, %v1023
        %v1056 = vadd.f32 %v956, %v1024
        %v1057 = vadd.f32 %v957, %v1025
        %v1058 = vadd.f32 %v958, %v1026
        %v1059 = vadd.f32 %v959, %v1027
        %v1060 = vadd.f32 %v960, %v1028
        %v1061 = vadd.f32 %v961, %v1029
        %v1062 = vadd.f32 %v962, %v1030
        %v1063 = vadd.f32 %v963, %v1031
        %v1064 = vadd.f32 %v964, %v1032
        %v1065 = vadd.f32 %v965, %v1033
        %v1066 = vadd.f32 %v966, %v1034
        %v1067 = vadd.f32 %v967, %v1035
        %v1068 = vadd.f32 %v968, %v1036
        %v1069 = vadd.f32 %v969, %v1037
        %v1070 = vadd.f32 %v970, %v1038
        %v1071 = vadd.f32 %v971, %v1039
        %v1072 = vadd.f32 %v972, %v1040
        %v1073 = vadd.f32 %v973, %v1041
        %v1074 = vadd.f32 %v974, %v1042
        %v1075 = vadd.f32 %v975, %v1043
        %v1076 = vadd.f32 %v976, %v1044
        %v1077 = vadd.f32 %v977, %v1045
        %v1078 = vadd.f32 %v978, %v1046
        %v1079 = vadd.f32 %v979, %v1047
        %v1080 = vadd.f32 %v980, %v1048
        %v1081 = vadd.f32 %v981, %v1049
        %v1082 = vadd.f32 %v982, %v1050
        %v1083 = vadd.f32 %v983, %v1051
        %v1084 = vadd.f32 %v984, %v1052
        %v1085 = vadd.f32 %v985, %v1053
        %v1086 = vadd.f32 %v986, %v1054
        %v1087 = vld [vmem:[%s651 + $0x1] sm:$0xff]
        %v1088 = vld [vmem:[%s651 + $0x9] sm:$0xff]
        %v1089 = vld [vmem:[%s651 + $0x19] sm:$0xff]
        %v1090 = vld [vmem:[%s651 + $0x21] sm:$0xff]
        %v1091 = vld [vmem:[%s651 + $0x31] sm:$0xff]
        %v1092 = vld [vmem:[%s651 + $0x39] sm:$0xff]
        %v1093 = vld [vmem:[%s651 + $0x49] sm:$0xff]
        %v1094 = vld [vmem:[%s651 + $0x51] sm:$0xff]
        %v1095 = vld [vmem:[%s651 + $0x61] sm:$0xff]
        %v1096 = vld [vmem:[%s651 + $0x69] sm:$0xff]
        %v1097 = vld [vmem:[%s651 + $0x79] sm:$0xff]
        %v1098 = vld [vmem:[%s651 + $0x81] sm:$0xff]
        %v1099 = vld [vmem:[%s651 + $0x91] sm:$0xff]
        %v1100 = vld [vmem:[%s651 + $0x99] sm:$0xff]
        %v1101 = vld [vmem:[%s651 + $0xa9] sm:$0xff]
        %v1102 = vld [vmem:[%s651 + $0xb1] sm:$0xff]
        %v1103 = vld [vmem:[%s651 + $0xc1] sm:$0xff]
        %v1104 = vld [vmem:[%s651 + $0xc9] sm:$0xff]
        %v1105 = vld [vmem:[%s651 + $0xd9] sm:$0xff]
        %v1106 = vld [vmem:[%s651 + $0xe1] sm:$0xff]
        %v1107 = vld [vmem:[%s651 + $0xf1] sm:$0xff]
        %v1108 = vld [vmem:[%s651 + $0xf9] sm:$0xff]
        %v1109 = vld [vmem:[%s651 + $0x109] sm:$0xff]
        %v1110 = vld [vmem:[%s651 + $0x111] sm:$0xff]
        %v1111 = vld [vmem:[%s651 + $0x121] sm:$0xff]
        %v1112 = vld [vmem:[%s651 + $0x129] sm:$0xff]
        %v1113 = vld [vmem:[%s651 + $0x139] sm:$0xff]
        %v1114 = vld [vmem:[%s651 + $0x141] sm:$0xff]
        %v1115 = vld [vmem:[%s651 + $0x151] sm:$0xff]
        %v1116 = vld [vmem:[%s651 + $0x159] sm:$0xff]
        %v1117 = vld [vmem:[%s651 + $0x169] sm:$0xff]
        %v1118 = vld [vmem:[%s651 + $0x171] sm:$0xff]
        %v1119 = vlaneseq
        %v1120 = vshrl.u32 %v1119, 7
        %v1121 = vsub.s32 4, %v1120
        %v1122 = vrot.slane %v717, %v1121
        %v1123 = vmul.f32 %v1087, %v1122
        %v1124 = vmul.f32 %v1088, %v1122
        %v1125 = vmul.f32 %v1089, %v1122
        %v1126 = vmul.f32 %v1090, %v1122
        %v1127 = vmul.f32 %v1091, %v1122
        %v1128 = vmul.f32 %v1092, %v1122
        %v1129 = vmul.f32 %v1093, %v1122
        %v1130 = vmul.f32 %v1094, %v1122
        %v1131 = vmul.f32 %v1095, %v1122
        %v1132 = vmul.f32 %v1096, %v1122
        %v1133 = vmul.f32 %v1097, %v1122
        %v1134 = vmul.f32 %v1098, %v1122
        %v1135 = vmul.f32 %v1099, %v1122
        %v1136 = vmul.f32 %v1100, %v1122
        %v1137 = vmul.f32 %v1101, %v1122
        %v1138 = vmul.f32 %v1102, %v1122
        %v1139 = vmul.f32 %v1103, %v1122
        %v1140 = vmul.f32 %v1104, %v1122
        %v1141 = vmul.f32 %v1105, %v1122
        %v1142 = vmul.f32 %v1106, %v1122
        %v1143 = vmul.f32 %v1107, %v1122
        %v1144 = vmul.f32 %v1108, %v1122
        %v1145 = vmul.f32 %v1109, %v1122
        %v1146 = vmul.f32 %v1110, %v1122
        %v1147 = vmul.f32 %v1111, %v1122
        %v1148 = vmul.f32 %v1112, %v1122
        %v1149 = vmul.f32 %v1113, %v1122
        %v1150 = vmul.f32 %v1114, %v1122
        %v1151 = vmul.f32 %v1115, %v1122
        %v1152 = vmul.f32 %v1116, %v1122
        %v1153 = vmul.f32 %v1117, %v1122
        %v1154 = vmul.f32 %v1118, %v1122
        %v1155 = vadd.f32 %v1055, %v1123
        %v1156 = vadd.f32 %v1056, %v1124
        %v1157 = vadd.f32 %v1057, %v1125
        %v1158 = vadd.f32 %v1058, %v1126
        %v1159 = vadd.f32 %v1059, %v1127
        %v1160 = vadd.f32 %v1060, %v1128
        %v1161 = vadd.f32 %v1061, %v1129
        %v1162 = vadd.f32 %v1062, %v1130
        %v1163 = vadd.f32 %v1063, %v1131
        %v1164 = vadd.f32 %v1064, %v1132
        %v1165 = vadd.f32 %v1065, %v1133
        %v1166 = vadd.f32 %v1066, %v1134
        %v1167 = vadd.f32 %v1067, %v1135
        %v1168 = vadd.f32 %v1068, %v1136
        %v1169 = vadd.f32 %v1069, %v1137
        %v1170 = vadd.f32 %v1070, %v1138
        %v1171 = vadd.f32 %v1071, %v1139
        %v1172 = vadd.f32 %v1072, %v1140
        %v1173 = vadd.f32 %v1073, %v1141
        %v1174 = vadd.f32 %v1074, %v1142
        %v1175 = vadd.f32 %v1075, %v1143
        %v1176 = vadd.f32 %v1076, %v1144
        %v1177 = vadd.f32 %v1077, %v1145
        %v1178 = vadd.f32 %v1078, %v1146
        %v1179 = vadd.f32 %v1079, %v1147
        %v1180 = vadd.f32 %v1080, %v1148
        %v1181 = vadd.f32 %v1081, %v1149
        %v1182 = vadd.f32 %v1082, %v1150
        %v1183 = vadd.f32 %v1083, %v1151
        %v1184 = vadd.f32 %v1084, %v1152
        %v1185 = vadd.f32 %v1085, %v1153
        %v1186 = vadd.f32 %v1086, %v1154
        %v1187 = vld [vmem:[%s651 + $0x2] sm:$0xff]
        %v1188 = vld [vmem:[%s651 + $0xa] sm:$0xff]
        %v1189 = vld [vmem:[%s651 + $0x1a] sm:$0xff]
        %v1190 = vld [vmem:[%s651 + $0x22] sm:$0xff]
        %v1191 = vld [vmem:[%s651 + $0x32] sm:$0xff]
        %v1192 = vld [vmem:[%s651 + $0x3a] sm:$0xff]
        %v1193 = vld [vmem:[%s651 + $0x4a] sm:$0xff]
        %v1194 = vld [vmem:[%s651 + $0x52] sm:$0xff]
        %v1195 = vld [vmem:[%s651 + $0x62] sm:$0xff]
        %v1196 = vld [vmem:[%s651 + $0x6a] sm:$0xff]
        %v1197 = vld [vmem:[%s651 + $0x7a] sm:$0xff]
        %v1198 = vld [vmem:[%s651 + $0x82] sm:$0xff]
        %v1199 = vld [vmem:[%s651 + $0x92] sm:$0xff]
        %v1200 = vld [vmem:[%s651 + $0x9a] sm:$0xff]
        %v1201 = vld [vmem:[%s651 + $0xaa] sm:$0xff]
        %v1202 = vld [vmem:[%s651 + $0xb2] sm:$0xff]
        %v1203 = vld [vmem:[%s651 + $0xc2] sm:$0xff]
        %v1204 = vld [vmem:[%s651 + $0xca] sm:$0xff]
        %v1205 = vld [vmem:[%s651 + $0xda] sm:$0xff]
        %v1206 = vld [vmem:[%s651 + $0xe2] sm:$0xff]
        %v1207 = vld [vmem:[%s651 + $0xf2] sm:$0xff]
        %v1208 = vld [vmem:[%s651 + $0xfa] sm:$0xff]
        %v1209 = vld [vmem:[%s651 + $0x10a] sm:$0xff]
        %v1210 = vld [vmem:[%s651 + $0x112] sm:$0xff]
        %v1211 = vld [vmem:[%s651 + $0x122] sm:$0xff]
        %v1212 = vld [vmem:[%s651 + $0x12a] sm:$0xff]
        %v1213 = vld [vmem:[%s651 + $0x13a] sm:$0xff]
        %v1214 = vld [vmem:[%s651 + $0x142] sm:$0xff]
        %v1215 = vld [vmem:[%s651 + $0x152] sm:$0xff]
        %v1216 = vld [vmem:[%s651 + $0x15a] sm:$0xff]
        %v1217 = vld [vmem:[%s651 + $0x16a] sm:$0xff]
        %v1218 = vld [vmem:[%s651 + $0x172] sm:$0xff]
        %v1219 = vlaneseq
        %v1220 = vshrl.u32 %v1219, 7
        %v1221 = vsub.s32 5, %v1220
        %v1222 = vrot.slane %v717, %v1221
        %v1223 = vmul.f32 %v1187, %v1222
        %v1224 = vmul.f32 %v1188, %v1222
        %v1225 = vmul.f32 %v1189, %v1222
        %v1226 = vmul.f32 %v1190, %v1222
        %v1227 = vmul.f32 %v1191, %v1222
        %v1228 = vmul.f32 %v1192, %v1222
        %v1229 = vmul.f32 %v1193, %v1222
        %v1230 = vmul.f32 %v1194, %v1222
        %v1231 = vmul.f32 %v1195, %v1222
        %v1232 = vmul.f32 %v1196, %v1222
        %v1233 = vmul.f32 %v1197, %v1222
        %v1234 = vmul.f32 %v1198, %v1222
        %v1235 = vmul.f32 %v1199, %v1222
        %v1236 = vmul.f32 %v1200, %v1222
        %v1237 = vmul.f32 %v1201, %v1222
        %v1238 = vmul.f32 %v1202, %v1222
        %v1239 = vmul.f32 %v1203, %v1222
        %v1240 = vmul.f32 %v1204, %v1222
        %v1241 = vmul.f32 %v1205, %v1222
        %v1242 = vmul.f32 %v1206, %v1222
        %v1243 = vmul.f32 %v1207, %v1222
        %v1244 = vmul.f32 %v1208, %v1222
        %v1245 = vmul.f32 %v1209, %v1222
        %v1246 = vmul.f32 %v1210, %v1222
        %v1247 = vmul.f32 %v1211, %v1222
        %v1248 = vmul.f32 %v1212, %v1222
        %v1249 = vmul.f32 %v1213, %v1222
        %v1250 = vmul.f32 %v1214, %v1222
        %v1251 = vmul.f32 %v1215, %v1222
        %v1252 = vmul.f32 %v1216, %v1222
        %v1253 = vmul.f32 %v1217, %v1222
        %v1254 = vmul.f32 %v1218, %v1222
        %v1255 = vadd.f32 %v1155, %v1223
        %v1256 = vadd.f32 %v1156, %v1224
        %v1257 = vadd.f32 %v1157, %v1225
        %v1258 = vadd.f32 %v1158, %v1226
        %v1259 = vadd.f32 %v1159, %v1227
        %v1260 = vadd.f32 %v1160, %v1228
        %v1261 = vadd.f32 %v1161, %v1229
        %v1262 = vadd.f32 %v1162, %v1230
        %v1263 = vadd.f32 %v1163, %v1231
        %v1264 = vadd.f32 %v1164, %v1232
        %v1265 = vadd.f32 %v1165, %v1233
        %v1266 = vadd.f32 %v1166, %v1234
        %v1267 = vadd.f32 %v1167, %v1235
        %v1268 = vadd.f32 %v1168, %v1236
        %v1269 = vadd.f32 %v1169, %v1237
        %v1270 = vadd.f32 %v1170, %v1238
        %v1271 = vadd.f32 %v1171, %v1239
        %v1272 = vadd.f32 %v1172, %v1240
        %v1273 = vadd.f32 %v1173, %v1241
        %v1274 = vadd.f32 %v1174, %v1242
        %v1275 = vadd.f32 %v1175, %v1243
        %v1276 = vadd.f32 %v1176, %v1244
        %v1277 = vadd.f32 %v1177, %v1245
        %v1278 = vadd.f32 %v1178, %v1246
        %v1279 = vadd.f32 %v1179, %v1247
        %v1280 = vadd.f32 %v1180, %v1248
        %v1281 = vadd.f32 %v1181, %v1249
        %v1282 = vadd.f32 %v1182, %v1250
        %v1283 = vadd.f32 %v1183, %v1251
        %v1284 = vadd.f32 %v1184, %v1252
        %v1285 = vadd.f32 %v1185, %v1253
        %v1286 = vadd.f32 %v1186, %v1254
        %s1287 = scalar_lea.vmem [#allocation2], 48
        %v1288 = vld [vmem:[%s1287] sm:$0xff]
        %v1289 = vld [vmem:[%s1287 + $0x8] sm:$0xff]
        %v1290 = vld [vmem:[%s1287 + $0x18] sm:$0xff]
        %v1291 = vld [vmem:[%s1287 + $0x20] sm:$0xff]
        %v1292 = vld [vmem:[%s1287 + $0x30] sm:$0xff]
        %v1293 = vld [vmem:[%s1287 + $0x38] sm:$0xff]
        %v1294 = vld [vmem:[%s1287 + $0x48] sm:$0xff]
        %v1295 = vld [vmem:[%s1287 + $0x50] sm:$0xff]
        %v1296 = vld [vmem:[%s1287 + $0x60] sm:$0xff]
        %v1297 = vld [vmem:[%s1287 + $0x68] sm:$0xff]
        %v1298 = vld [vmem:[%s1287 + $0x78] sm:$0xff]
        %v1299 = vld [vmem:[%s1287 + $0x80] sm:$0xff]
        %v1300 = vld [vmem:[%s1287 + $0x90] sm:$0xff]
        %v1301 = vld [vmem:[%s1287 + $0x98] sm:$0xff]
        %v1302 = vld [vmem:[%s1287 + $0xa8] sm:$0xff]
        %v1303 = vld [vmem:[%s1287 + $0xb0] sm:$0xff]
        %v1304 = vld [vmem:[%s1287 + $0xc0] sm:$0xff]
        %v1305 = vld [vmem:[%s1287 + $0xc8] sm:$0xff]
        %v1306 = vld [vmem:[%s1287 + $0xd8] sm:$0xff]
        %v1307 = vld [vmem:[%s1287 + $0xe0] sm:$0xff]
        %v1308 = vld [vmem:[%s1287 + $0xf0] sm:$0xff]
        %v1309 = vld [vmem:[%s1287 + $0xf8] sm:$0xff]
        %v1310 = vld [vmem:[%s1287 + $0x108] sm:$0xff]
        %v1311 = vld [vmem:[%s1287 + $0x110] sm:$0xff]
        %v1312 = vld [vmem:[%s1287 + $0x120] sm:$0xff]
        %v1313 = vld [vmem:[%s1287 + $0x128] sm:$0xff]
        %v1314 = vld [vmem:[%s1287 + $0x138] sm:$0xff]
        %v1315 = vld [vmem:[%s1287 + $0x140] sm:$0xff]
        %v1316 = vld [vmem:[%s1287 + $0x150] sm:$0xff]
        %v1317 = vld [vmem:[%s1287 + $0x158] sm:$0xff]
        %v1318 = vld [vmem:[%s1287 + $0x168] sm:$0xff]
        %v1319 = vld [vmem:[%s1287 + $0x170] sm:$0xff]
        %v1320 = vlaneseq
        %v1321 = vshrl.u32 %v1320, 7
        %v1322 = vsub.s32 6, %v1321
        %v1323 = vrot.slane %v717, %v1322
        %v1324 = vmul.f32 %v1288, %v1323
        %v1325 = vmul.f32 %v1289, %v1323
        %v1326 = vmul.f32 %v1290, %v1323
        %v1327 = vmul.f32 %v1291, %v1323
        %v1328 = vmul.f32 %v1292, %v1323
        %v1329 = vmul.f32 %v1293, %v1323
        %v1330 = vmul.f32 %v1294, %v1323
        %v1331 = vmul.f32 %v1295, %v1323
        %v1332 = vmul.f32 %v1296, %v1323
        %v1333 = vmul.f32 %v1297, %v1323
        %v1334 = vmul.f32 %v1298, %v1323
        %v1335 = vmul.f32 %v1299, %v1323
        %v1336 = vmul.f32 %v1300, %v1323
        %v1337 = vmul.f32 %v1301, %v1323
        %v1338 = vmul.f32 %v1302, %v1323
        %v1339 = vmul.f32 %v1303, %v1323
        %v1340 = vmul.f32 %v1304, %v1323
        %v1341 = vmul.f32 %v1305, %v1323
        %v1342 = vmul.f32 %v1306, %v1323
        %v1343 = vmul.f32 %v1307, %v1323
        %v1344 = vmul.f32 %v1308, %v1323
        %v1345 = vmul.f32 %v1309, %v1323
        %v1346 = vmul.f32 %v1310, %v1323
        %v1347 = vmul.f32 %v1311, %v1323
        %v1348 = vmul.f32 %v1312, %v1323
        %v1349 = vmul.f32 %v1313, %v1323
        %v1350 = vmul.f32 %v1314, %v1323
        %v1351 = vmul.f32 %v1315, %v1323
        %v1352 = vmul.f32 %v1316, %v1323
        %v1353 = vmul.f32 %v1317, %v1323
        %v1354 = vmul.f32 %v1318, %v1323
        %v1355 = vmul.f32 %v1319, %v1323
        %v1356 = vadd.f32 %v1255, %v1324
        %v1357 = vadd.f32 %v1256, %v1325
        %v1358 = vadd.f32 %v1257, %v1326
        %v1359 = vadd.f32 %v1258, %v1327
        %v1360 = vadd.f32 %v1259, %v1328
        %v1361 = vadd.f32 %v1260, %v1329
        %v1362 = vadd.f32 %v1261, %v1330
        %v1363 = vadd.f32 %v1262, %v1331
        %v1364 = vadd.f32 %v1263, %v1332
        %v1365 = vadd.f32 %v1264, %v1333
        %v1366 = vadd.f32 %v1265, %v1334
        %v1367 = vadd.f32 %v1266, %v1335
        %v1368 = vadd.f32 %v1267, %v1336
        %v1369 = vadd.f32 %v1268, %v1337
        %v1370 = vadd.f32 %v1269, %v1338
        %v1371 = vadd.f32 %v1270, %v1339
        %v1372 = vadd.f32 %v1271, %v1340
        %v1373 = vadd.f32 %v1272, %v1341
        %v1374 = vadd.f32 %v1273, %v1342
        %v1375 = vadd.f32 %v1274, %v1343
        %v1376 = vadd.f32 %v1275, %v1344
        %v1377 = vadd.f32 %v1276, %v1345
        %v1378 = vadd.f32 %v1277, %v1346
        %v1379 = vadd.f32 %v1278, %v1347
        %v1380 = vadd.f32 %v1279, %v1348
        %v1381 = vadd.f32 %v1280, %v1349
        %v1382 = vadd.f32 %v1281, %v1350
        %v1383 = vadd.f32 %v1282, %v1351
        %v1384 = vadd.f32 %v1283, %v1352
        %v1385 = vadd.f32 %v1284, %v1353
        %v1386 = vadd.f32 %v1285, %v1354
        %v1387 = vadd.f32 %v1286, %v1355
        %v1388 = vld [vmem:[%s1287 + $0x1] sm:$0xff]
        %v1389 = vld [vmem:[%s1287 + $0x9] sm:$0xff]
        %v1390 = vld [vmem:[%s1287 + $0x19] sm:$0xff]
        %v1391 = vld [vmem:[%s1287 + $0x21] sm:$0xff]
        %v1392 = vld [vmem:[%s1287 + $0x31] sm:$0xff]
        %v1393 = vld [vmem:[%s1287 + $0x39] sm:$0xff]
        %v1394 = vld [vmem:[%s1287 + $0x49] sm:$0xff]
        %v1395 = vld [vmem:[%s1287 + $0x51] sm:$0xff]
        %v1396 = vld [vmem:[%s1287 + $0x61] sm:$0xff]
        %v1397 = vld [vmem:[%s1287 + $0x69] sm:$0xff]
        %v1398 = vld [vmem:[%s1287 + $0x79] sm:$0xff]
        %v1399 = vld [vmem:[%s1287 + $0x81] sm:$0xff]
        %v1400 = vld [vmem:[%s1287 + $0x91] sm:$0xff]
        %v1401 = vld [vmem:[%s1287 + $0x99] sm:$0xff]
        %v1402 = vld [vmem:[%s1287 + $0xa9] sm:$0xff]
        %v1403 = vld [vmem:[%s1287 + $0xb1] sm:$0xff]
        %v1404 = vld [vmem:[%s1287 + $0xc1] sm:$0xff]
        %v1405 = vld [vmem:[%s1287 + $0xc9] sm:$0xff]
        %v1406 = vld [vmem:[%s1287 + $0xd9] sm:$0xff]
        %v1407 = vld [vmem:[%s1287 + $0xe1] sm:$0xff]
        %v1408 = vld [vmem:[%s1287 + $0xf1] sm:$0xff]
        %v1409 = vld [vmem:[%s1287 + $0xf9] sm:$0xff]
        %v1410 = vld [vmem:[%s1287 + $0x109] sm:$0xff]
        %v1411 = vld [vmem:[%s1287 + $0x111] sm:$0xff]
        %v1412 = vld [vmem:[%s1287 + $0x121] sm:$0xff]
        %v1413 = vld [vmem:[%s1287 + $0x129] sm:$0xff]
        %v1414 = vld [vmem:[%s1287 + $0x139] sm:$0xff]
        %v1415 = vld [vmem:[%s1287 + $0x141] sm:$0xff]
        %v1416 = vld [vmem:[%s1287 + $0x151] sm:$0xff]
        %v1417 = vld [vmem:[%s1287 + $0x159] sm:$0xff]
        %v1418 = vld [vmem:[%s1287 + $0x169] sm:$0xff]
        %v1419 = vld [vmem:[%s1287 + $0x171] sm:$0xff]
        %v1420 = vlaneseq
        %v1421 = vshrl.u32 %v1420, 7
        %v1422 = vsub.s32 7, %v1421
        %v1423 = vrot.slane %v717, %v1422
        %v1424 = vmul.f32 %v1388, %v1423
        %v1425 = vmul.f32 %v1389, %v1423
        %v1426 = vmul.f32 %v1390, %v1423
        %v1427 = vmul.f32 %v1391, %v1423
        %v1428 = vmul.f32 %v1392, %v1423
        %v1429 = vmul.f32 %v1393, %v1423
        %v1430 = vmul.f32 %v1394, %v1423
        %v1431 = vmul.f32 %v1395, %v1423
        %v1432 = vmul.f32 %v1396, %v1423
        %v1433 = vmul.f32 %v1397, %v1423
        %v1434 = vmul.f32 %v1398, %v1423
        %v1435 = vmul.f32 %v1399, %v1423
        %v1436 = vmul.f32 %v1400, %v1423
        %v1437 = vmul.f32 %v1401, %v1423
        %v1438 = vmul.f32 %v1402, %v1423
        %v1439 = vmul.f32 %v1403, %v1423
        %v1440 = vmul.f32 %v1404, %v1423
        %v1441 = vmul.f32 %v1405, %v1423
        %v1442 = vmul.f32 %v1406, %v1423
        %v1443 = vmul.f32 %v1407, %v1423
        %v1444 = vmul.f32 %v1408, %v1423
        %v1445 = vmul.f32 %v1409, %v1423
        %v1446 = vmul.f32 %v1410, %v1423
        %v1447 = vmul.f32 %v1411, %v1423
        %v1448 = vmul.f32 %v1412, %v1423
        %v1449 = vmul.f32 %v1413, %v1423
        %v1450 = vmul.f32 %v1414, %v1423
        %v1451 = vmul.f32 %v1415, %v1423
        %v1452 = vmul.f32 %v1416, %v1423
        %v1453 = vmul.f32 %v1417, %v1423
        %v1454 = vmul.f32 %v1418, %v1423
        %v1455 = vmul.f32 %v1419, %v1423
        %v1456 = vadd.f32 %v1356, %v1424
        %v1457 = vadd.f32 %v1357, %v1425
        %v1458 = vadd.f32 %v1358, %v1426
        %v1459 = vadd.f32 %v1359, %v1427
        %v1460 = vadd.f32 %v1360, %v1428
        %v1461 = vadd.f32 %v1361, %v1429
        %v1462 = vadd.f32 %v1362, %v1430
        %v1463 = vadd.f32 %v1363, %v1431
        %v1464 = vadd.f32 %v1364, %v1432
        %v1465 = vadd.f32 %v1365, %v1433
        %v1466 = vadd.f32 %v1366, %v1434
        %v1467 = vadd.f32 %v1367, %v1435
        %v1468 = vadd.f32 %v1368, %v1436
        %v1469 = vadd.f32 %v1369, %v1437
        %v1470 = vadd.f32 %v1370, %v1438
        %v1471 = vadd.f32 %v1371, %v1439
        %v1472 = vadd.f32 %v1372, %v1440
        %v1473 = vadd.f32 %v1373, %v1441
        %v1474 = vadd.f32 %v1374, %v1442
        %v1475 = vadd.f32 %v1375, %v1443
        %v1476 = vadd.f32 %v1376, %v1444
        %v1477 = vadd.f32 %v1377, %v1445
        %v1478 = vadd.f32 %v1378, %v1446
        %v1479 = vadd.f32 %v1379, %v1447
        %v1480 = vadd.f32 %v1380, %v1448
        %v1481 = vadd.f32 %v1381, %v1449
        %v1482 = vadd.f32 %v1382, %v1450
        %v1483 = vadd.f32 %v1383, %v1451
        %v1484 = vadd.f32 %v1384, %v1452
        %v1485 = vadd.f32 %v1385, %v1453
        %v1486 = vadd.f32 %v1386, %v1454
        %v1487 = vadd.f32 %v1387, %v1455
        %v1488 = vld [vmem:[%s1287 + $0x2] sm:$0xff]
        %v1489 = vld [vmem:[%s1287 + $0xa] sm:$0xff]
        %v1490 = vld [vmem:[%s1287 + $0x1a] sm:$0xff]
        %v1491 = vld [vmem:[%s1287 + $0x22] sm:$0xff]
        %v1492 = vld [vmem:[%s1287 + $0x32] sm:$0xff]
        %v1493 = vld [vmem:[%s1287 + $0x3a] sm:$0xff]
        %v1494 = vld [vmem:[%s1287 + $0x4a] sm:$0xff]
        %v1495 = vld [vmem:[%s1287 + $0x52] sm:$0xff]
        %v1496 = vld [vmem:[%s1287 + $0x62] sm:$0xff]
        %v1497 = vld [vmem:[%s1287 + $0x6a] sm:$0xff]
        %v1498 = vld [vmem:[%s1287 + $0x7a] sm:$0xff]
        %v1499 = vld [vmem:[%s1287 + $0x82] sm:$0xff]
        %v1500 = vld [vmem:[%s1287 + $0x92] sm:$0xff]
        %v1501 = vld [vmem:[%s1287 + $0x9a] sm:$0xff]
        %v1502 = vld [vmem:[%s1287 + $0xaa] sm:$0xff]
        %v1503 = vld [vmem:[%s1287 + $0xb2] sm:$0xff]
        %v1504 = vld [vmem:[%s1287 + $0xc2] sm:$0xff]
        %v1505 = vld [vmem:[%s1287 + $0xca] sm:$0xff]
        %v1506 = vld [vmem:[%s1287 + $0xda] sm:$0xff]
        %v1507 = vld [vmem:[%s1287 + $0xe2] sm:$0xff]
        %v1508 = vld [vmem:[%s1287 + $0xf2] sm:$0xff]
        %v1509 = vld [vmem:[%s1287 + $0xfa] sm:$0xff]
        %v1510 = vld [vmem:[%s1287 + $0x10a] sm:$0xff]
        %v1511 = vld [vmem:[%s1287 + $0x112] sm:$0xff]
        %v1512 = vld [vmem:[%s1287 + $0x122] sm:$0xff]
        %v1513 = vld [vmem:[%s1287 + $0x12a] sm:$0xff]
        %v1514 = vld [vmem:[%s1287 + $0x13a] sm:$0xff]
        %v1515 = vld [vmem:[%s1287 + $0x142] sm:$0xff]
        %v1516 = vld [vmem:[%s1287 + $0x152] sm:$0xff]
        %v1517 = vld [vmem:[%s1287 + $0x15a] sm:$0xff]
        %v1518 = vld [vmem:[%s1287 + $0x16a] sm:$0xff]
        %v1519 = vld [vmem:[%s1287 + $0x172] sm:$0xff]
        %v1520 = vlaneseq
        %v1521 = vshrl.u32 %v1520, 7
        %v1522 = vsub.s32 0, %v1521
        %v1523 = vrot.slane %v718, %v1522
        %v1524 = vmul.f32 %v1488, %v1523
        %v1525 = vmul.f32 %v1489, %v1523
        %v1526 = vmul.f32 %v1490, %v1523
        %v1527 = vmul.f32 %v1491, %v1523
        %v1528 = vmul.f32 %v1492, %v1523
        %v1529 = vmul.f32 %v1493, %v1523
        %v1530 = vmul.f32 %v1494, %v1523
        %v1531 = vmul.f32 %v1495, %v1523
        %v1532 = vmul.f32 %v1496, %v1523
        %v1533 = vmul.f32 %v1497, %v1523
        %v1534 = vmul.f32 %v1498, %v1523
        %v1535 = vmul.f32 %v1499, %v1523
        %v1536 = vmul.f32 %v1500, %v1523
        %v1537 = vmul.f32 %v1501, %v1523
        %v1538 = vmul.f32 %v1502, %v1523
        %v1539 = vmul.f32 %v1503, %v1523
        %v1540 = vmul.f32 %v1504, %v1523
        %v1541 = vmul.f32 %v1505, %v1523
        %v1542 = vmul.f32 %v1506, %v1523
        %v1543 = vmul.f32 %v1507, %v1523
        %v1544 = vmul.f32 %v1508, %v1523
        %v1545 = vmul.f32 %v1509, %v1523
        %v1546 = vmul.f32 %v1510, %v1523
        %v1547 = vmul.f32 %v1511, %v1523
        %v1548 = vmul.f32 %v1512, %v1523
        %v1549 = vmul.f32 %v1513, %v1523
        %v1550 = vmul.f32 %v1514, %v1523
        %v1551 = vmul.f32 %v1515, %v1523
        %v1552 = vmul.f32 %v1516, %v1523
        %v1553 = vmul.f32 %v1517, %v1523
        %v1554 = vmul.f32 %v1518, %v1523
        %v1555 = vmul.f32 %v1519, %v1523
        %v1556 = vadd.f32 %v1456, %v1524
        %v1557 = vadd.f32 %v1457, %v1525
        %v1558 = vadd.f32 %v1458, %v1526
        %v1559 = vadd.f32 %v1459, %v1527
        %v1560 = vadd.f32 %v1460, %v1528
        %v1561 = vadd.f32 %v1461, %v1529
        %v1562 = vadd.f32 %v1462, %v1530
        %v1563 = vadd.f32 %v1463, %v1531
        %v1564 = vadd.f32 %v1464, %v1532
        %v1565 = vadd.f32 %v1465, %v1533
        %v1566 = vadd.f32 %v1466, %v1534
        %v1567 = vadd.f32 %v1467, %v1535
        %v1568 = vadd.f32 %v1468, %v1536
        %v1569 = vadd.f32 %v1469, %v1537
        %v1570 = vadd.f32 %v1470, %v1538
        %v1571 = vadd.f32 %v1471, %v1539
        %v1572 = vadd.f32 %v1472, %v1540
        %v1573 = vadd.f32 %v1473, %v1541
        %v1574 = vadd.f32 %v1474, %v1542
        %v1575 = vadd.f32 %v1475, %v1543
        %v1576 = vadd.f32 %v1476, %v1544
        %v1577 = vadd.f32 %v1477, %v1545
        %v1578 = vadd.f32 %v1478, %v1546
        %v1579 = vadd.f32 %v1479, %v1547
        %v1580 = vadd.f32 %v1480, %v1548
        %v1581 = vadd.f32 %v1481, %v1549
        %v1582 = vadd.f32 %v1482, %v1550
        %v1583 = vadd.f32 %v1483, %v1551
        %v1584 = vadd.f32 %v1484, %v1552
        %v1585 = vadd.f32 %v1485, %v1553
        %v1586 = vadd.f32 %v1486, %v1554
        %v1587 = vadd.f32 %v1487, %v1555
        %v1588 = vld [vmem:[%s4] sm:$0x1]
        %v1590 = vlaneseq
        %v1591 = vshrl.u32 %v1590, 7
        %v1592 = vsub.s32 0, %v1591
        %v1593 = vrot.slane %v1588, %v1592
        %v1595 = vadd.f32 %v1556, %v1593
        %v1596 = vadd.f32 %v1557, %v1593
        %v1597 = vadd.f32 %v1558, %v1593
        %v1598 = vadd.f32 %v1559, %v1593
        %v1599 = vadd.f32 %v1560, %v1593
        %v1600 = vadd.f32 %v1561, %v1593
        %v1601 = vadd.f32 %v1562, %v1593
        %v1602 = vadd.f32 %v1563, %v1593
        %v1603 = vadd.f32 %v1564, %v1593
        %v1604 = vadd.f32 %v1565, %v1593
        %v1605 = vadd.f32 %v1566, %v1593
        %v1606 = vadd.f32 %v1567, %v1593
        %v1607 = vadd.f32 %v1568, %v1593
        %v1608 = vadd.f32 %v1569, %v1593
        %v1609 = vadd.f32 %v1570, %v1593
        %v1610 = vadd.f32 %v1571, %v1593
        %v1611 = vadd.f32 %v1572, %v1593
        %v1612 = vadd.f32 %v1573, %v1593
        %v1613 = vadd.f32 %v1574, %v1593
        %v1614 = vadd.f32 %v1575, %v1593
        %v1615 = vadd.f32 %v1576, %v1593
        %v1616 = vadd.f32 %v1577, %v1593
        %v1617 = vadd.f32 %v1578, %v1593
        %v1618 = vadd.f32 %v1579, %v1593
        %v1619 = vadd.f32 %v1580, %v1593
        %v1620 = vadd.f32 %v1581, %v1593
        %v1621 = vadd.f32 %v1582, %v1593
        %v1622 = vadd.f32 %v1583, %v1593
        %v1623 = vadd.f32 %v1584, %v1593
        %v1624 = vadd.f32 %v1585, %v1593
        %v1625 = vadd.f32 %v1586, %v1593
        %v1626 = vadd.f32 %v1587, %v1593
        %v1627 = vmax.f32 %v1595, 0.0
        %v1628 = vmax.f32 %v1596, 0.0
        %v1629 = vmax.f32 %v1597, 0.0
        %v1630 = vmax.f32 %v1598, 0.0
        %v1631 = vmax.f32 %v1599, 0.0
        %v1632 = vmax.f32 %v1600, 0.0
        %v1633 = vmax.f32 %v1601, 0.0
        %v1634 = vmax.f32 %v1602, 0.0
        %v1635 = vmax.f32 %v1603, 0.0
        %v1636 = vmax.f32 %v1604, 0.0
        %v1637 = vmax.f32 %v1605, 0.0
        %v1638 = vmax.f32 %v1606, 0.0
        %v1639 = vmax.f32 %v1607, 0.0
        %v1640 = vmax.f32 %v1608, 0.0
        %v1641 = vmax.f32 %v1609, 0.0
        %v1642 = vmax.f32 %v1610, 0.0
        %v1643 = vmax.f32 %v1611, 0.0
        %v1644 = vmax.f32 %v1612, 0.0
        %v1645 = vmax.f32 %v1613, 0.0
        %v1646 = vmax.f32 %v1614, 0.0
        %v1647 = vmax.f32 %v1615, 0.0
        %v1648 = vmax.f32 %v1616, 0.0
        %v1649 = vmax.f32 %v1617, 0.0
        %v1650 = vmax.f32 %v1618, 0.0
        %v1651 = vmax.f32 %v1619, 0.0
        %v1652 = vmax.f32 %v1620, 0.0
        %v1653 = vmax.f32 %v1621, 0.0
        %v1654 = vmax.f32 %v1622, 0.0
        %v1655 = vmax.f32 %v1623, 0.0
        %v1656 = vmax.f32 %v1624, 0.0
        %v1657 = vmax.f32 %v1625, 0.0
        %v1658 = vmax.f32 %v1626, 0.0
        %v1659 = vmin.f32 %v1627, 6.0
        %v1660 = vmin.f32 %v1628, 6.0
        %v1661 = vmin.f32 %v1629, 6.0
        %v1662 = vmin.f32 %v1630, 6.0
        %v1663 = vmin.f32 %v1631, 6.0
        %v1664 = vmin.f32 %v1632, 6.0
        %v1665 = vmin.f32 %v1633, 6.0
        %v1666 = vmin.f32 %v1634, 6.0
        %v1667 = vmin.f32 %v1635, 6.0
        %v1668 = vmin.f32 %v1636, 6.0
        %v1669 = vmin.f32 %v1637, 6.0
        %v1670 = vmin.f32 %v1638, 6.0
        %v1671 = vmin.f32 %v1639, 6.0
        %v1672 = vmin.f32 %v1640, 6.0
        %v1673 = vmin.f32 %v1641, 6.0
        %v1674 = vmin.f32 %v1642, 6.0
        %v1675 = vmin.f32 %v1643, 6.0
        %v1676 = vmin.f32 %v1644, 6.0
        %v1677 = vmin.f32 %v1645, 6.0
        %v1678 = vmin.f32 %v1646, 6.0
        %v1679 = vmin.f32 %v1647, 6.0
        %v1680 = vmin.f32 %v1648, 6.0
        %v1681 = vmin.f32 %v1649, 6.0
        %v1682 = vmin.f32 %v1650, 6.0
        %v1683 = vmin.f32 %v1651, 6.0
        %v1684 = vmin.f32 %v1652, 6.0
        %v1685 = vmin.f32 %v1653, 6.0
        %v1686 = vmin.f32 %v1654, 6.0
        %v1687 = vmin.f32 %v1655, 6.0
        %v1688 = vmin.f32 %v1656, 6.0
        %v1689 = vmin.f32 %v1657, 6.0
        %v1690 = vmin.f32 %v1658, 6.0
        %v1691 = vpack.c.bf16 %v1660, %v1659
        %v1692 = vpack.c.bf16 %v1662, %v1661
        %v1693 = vpack.c.bf16 %v1664, %v1663
        %v1694 = vpack.c.bf16 %v1666, %v1665
        %v1695 = vpack.c.bf16 %v1668, %v1667
        %v1696 = vpack.c.bf16 %v1670, %v1669
        %v1697 = vpack.c.bf16 %v1672, %v1671
        %v1698 = vpack.c.bf16 %v1674, %v1673
        %v1699 = vpack.c.bf16 %v1676, %v1675
        %v1700 = vpack.c.bf16 %v1678, %v1677
        %v1701 = vpack.c.bf16 %v1680, %v1679
        %v1702 = vpack.c.bf16 %v1682, %v1681
        %v1703 = vpack.c.bf16 %v1684, %v1683
        %v1704 = vpack.c.bf16 %v1686, %v1685
        %v1705 = vpack.c.bf16 %v1688, %v1687
        %v1706 = vpack.c.bf16 %v1690, %v1689
        %v1707 = vld [vmem:[%s5] sm:$0xf]
        %v1708 = vld [vmem:[%s5 + $0x4] sm:$0xf]
        %v1709 = vld [vmem:[%s6] sm:$0x1]
        %v1711 = vlaneseq
        %v1712 = vshrl.u32 %v1711, 7
        %v1713 = vsub.s32 0, %v1712
        %v1714 = vrot.slane %v1709, %v1713
        %v1718 = vunpack.c.l.b16 %v1707
        %v1719 = vunpack.c.l.b16 %v1708
        %v1720 = vpack.c.b16 %v1719, %v1718
        %v1723 = vsel %vm642, %v1691, 0
        %v1726 = vsel %vm642, %v1692, 0
        %v1729 = vsel %vm642, %v1693, 0
        %v1732 = vsel %vm642, %v1694, 0
        %v1735 = vsel %vm642, %v1695, 0
        %v1738 = vsel %vm642, %v1696, 0
        %v1741 = vsel %vm642, %v1697, 0
        %v1744 = vsel %vm642, %v1698, 0
        %v1747 = vsel %vm642, %v1699, 0
        %v1750 = vsel %vm642, %v1700, 0
        %v1753 = vsel %vm642, %v1701, 0
        %v1756 = vsel %vm642, %v1702, 0
        %v1759 = vsel %vm642, %v1703, 0
        %v1762 = vsel %vm642, %v1704, 0
        %v1765 = vsel %vm642, %v1705, 0
        %v1768 = vsel %vm642, %v1706, 0
        %1770 = vmatprep.subr.bf16.mxu0 0
        %1771 = vmatpush1.bf16.msra.mxu0 0
        %1772 = vmatprep.subr.bf16.mxu0 0
        %1773 = vmatpush1.bf16.msra.mxu0 0
        %1774 = vmatprep.subr.bf16.mxu0 0
        %1775 = vmatpush1.bf16.msra.mxu0 0
        %1776 = vmatprep.subr.bf16.mxu0 0
        %1777 = vmatpush1.bf16.msra.mxu0 0
        %1778 = vmatprep.subr.bf16.mxu0 0
        %1779 = vmatpush1.bf16.msra.mxu0 0
        %1780 = vmatprep.subr.bf16.mxu0 0
        %1781 = vmatpush1.bf16.msra.mxu0 0
        %1782 = vmatprep.subr.bf16.mxu0 0
        %1783 = vmatpush1.bf16.msra.mxu0 0
        %1784 = vmatprep.subr.bf16.mxu0 0
        %1785 = vmatpush1.bf16.msra.mxu0 %v1720
        %1786 = vmatprep.subr.bf16.mxu0 0
        %1787 = vmatpush2.bf16.msra.mxu0 0
        %1788 = vmatprep.subr.bf16.mxu0 0
        %1789 = vmatpush2.bf16.msra.mxu0 0
        %1790 = vmatprep.subr.bf16.mxu0 0
        %1791 = vmatpush2.bf16.msra.mxu0 0
        %1792 = vmatprep.subr.bf16.mxu0 0
        %1793 = vmatpush2.bf16.msra.mxu0 0
        %1794 = vmatprep.subr.bf16.mxu0 0
        %1795 = vmatpush2.bf16.msra.mxu0 0
        %1796 = vmatprep.subr.bf16.mxu0 0
        %1797 = vmatpush2.bf16.msra.mxu0 0
        %1798 = vmatprep.subr.bf16.mxu0 0
        %1799 = vmatpush2.bf16.msra.mxu0 0
        %1800 = vmatprep.subr.bf16.mxu0 0
        %1801 = vmatpush2.bf16.msra.mxu0 0
        %1802 = vmatprep.mubr.bf16.mxu0 0
        %1803 = vmatmul.mubr.bf16.gmra.mxu0 %v1723
        %v1804 = vpop.f32.mrf.mxu0
        %v1805 = vadd.f32 %v1714, %v1804
        %v1806 = vpop.f32.mrf.mxu0
        %v1807 = vpop.f32.mrf.mxu0
        %v1808 = vadd.f32 %v1714, %v1807
        %v1809 = vpop.f32.mrf.mxu0
        %1810 = vmatprep.mubr.bf16.mxu0 0
        %1811 = vmatmul.mubr.bf16.gmra.mxu0 %v1726
        %v1812 = vpop.f32.mrf.mxu0
        %v1813 = vadd.f32 %v1714, %v1812
        %v1814 = vpop.f32.mrf.mxu0
        %v1815 = vpop.f32.mrf.mxu0
        %v1816 = vadd.f32 %v1714, %v1815
        %v1817 = vpop.f32.mrf.mxu0
        %1818 = vmatprep.mubr.bf16.mxu0 0
        %1819 = vmatmul.mubr.bf16.gmra.mxu0 %v1729
        %v1820 = vpop.f32.mrf.mxu0
        %v1821 = vadd.f32 %v1714, %v1820
        %v1822 = vpop.f32.mrf.mxu0
        %v1823 = vpop.f32.mrf.mxu0
        %v1824 = vadd.f32 %v1714, %v1823
        %v1825 = vpop.f32.mrf.mxu0
        %1826 = vmatprep.mubr.bf16.mxu0 0
        %1827 = vmatmul.mubr.bf16.gmra.mxu0 %v1732
        %v1828 = vpop.f32.mrf.mxu0
        %v1829 = vadd.f32 %v1714, %v1828
        %v1830 = vpop.f32.mrf.mxu0
        %v1831 = vpop.f32.mrf.mxu0
        %v1832 = vadd.f32 %v1714, %v1831
        %v1833 = vpop.f32.mrf.mxu0
        %1834 = vmatprep.mubr.bf16.mxu0 0
        %1835 = vmatmul.mubr.bf16.gmra.mxu0 %v1735
        %v1836 = vpop.f32.mrf.mxu0
        %v1837 = vadd.f32 %v1714, %v1836
        %v1838 = vpop.f32.mrf.mxu0
        %v1839 = vpop.f32.mrf.mxu0
        %v1840 = vadd.f32 %v1714, %v1839
        %v1841 = vpop.f32.mrf.mxu0
        %1842 = vmatprep.mubr.bf16.mxu0 0
        %1843 = vmatmul.mubr.bf16.gmra.mxu0 %v1738
        %v1844 = vpop.f32.mrf.mxu0
        %v1845 = vadd.f32 %v1714, %v1844
        %v1846 = vpop.f32.mrf.mxu0
        %v1847 = vpop.f32.mrf.mxu0
        %v1848 = vadd.f32 %v1714, %v1847
        %v1849 = vpop.f32.mrf.mxu0
        %1850 = vmatprep.mubr.bf16.mxu0 0
        %1851 = vmatmul.mubr.bf16.gmra.mxu0 %v1741
        %v1852 = vpop.f32.mrf.mxu0
        %v1853 = vadd.f32 %v1714, %v1852
        %v1854 = vpop.f32.mrf.mxu0
        %v1855 = vpop.f32.mrf.mxu0
        %v1856 = vadd.f32 %v1714, %v1855
        %v1857 = vpop.f32.mrf.mxu0
        %1858 = vmatprep.mubr.bf16.mxu0 0
        %1859 = vmatmul.mubr.bf16.gmra.mxu0 %v1744
        %v1860 = vpop.f32.mrf.mxu0
        %v1861 = vadd.f32 %v1714, %v1860
        %v1862 = vpop.f32.mrf.mxu0
        %v1863 = vpop.f32.mrf.mxu0
        %v1864 = vadd.f32 %v1714, %v1863
        %v1865 = vpop.f32.mrf.mxu0
        %1866 = vmatprep.mubr.bf16.mxu0 0
        %1867 = vmatmul.mubr.bf16.gmra.mxu0 %v1747
        %v1868 = vpop.f32.mrf.mxu0
        %v1869 = vadd.f32 %v1714, %v1868
        %v1870 = vpop.f32.mrf.mxu0
        %v1871 = vpop.f32.mrf.mxu0
        %v1872 = vadd.f32 %v1714, %v1871
        %v1873 = vpop.f32.mrf.mxu0
        %1874 = vmatprep.mubr.bf16.mxu0 0
        %1875 = vmatmul.mubr.bf16.gmra.mxu0 %v1750
        %v1876 = vpop.f32.mrf.mxu0
        %v1877 = vadd.f32 %v1714, %v1876
        %v1878 = vpop.f32.mrf.mxu0
        %v1879 = vpop.f32.mrf.mxu0
        %v1880 = vadd.f32 %v1714, %v1879
        %v1881 = vpop.f32.mrf.mxu0
        %1882 = vmatprep.mubr.bf16.mxu0 0
        %1883 = vmatmul.mubr.bf16.gmra.mxu0 %v1753
        %v1884 = vpop.f32.mrf.mxu0
        %v1885 = vadd.f32 %v1714, %v1884
        %v1886 = vpop.f32.mrf.mxu0
        %v1887 = vpop.f32.mrf.mxu0
        %v1888 = vadd.f32 %v1714, %v1887
        %v1889 = vpop.f32.mrf.mxu0
        %1890 = vmatprep.mubr.bf16.mxu0 0
        %1891 = vmatmul.mubr.bf16.gmra.mxu0 %v1756
        %v1892 = vpop.f32.mrf.mxu0
        %v1893 = vadd.f32 %v1714, %v1892
        %v1894 = vpop.f32.mrf.mxu0
        %v1895 = vpop.f32.mrf.mxu0
        %v1896 = vadd.f32 %v1714, %v1895
        %v1897 = vpop.f32.mrf.mxu0
        %1898 = vmatprep.mubr.bf16.mxu0 0
        %1899 = vmatmul.mubr.bf16.gmra.mxu0 %v1759
        %v1900 = vpop.f32.mrf.mxu0
        %v1901 = vadd.f32 %v1714, %v1900
        %v1902 = vpop.f32.mrf.mxu0
        %v1903 = vpop.f32.mrf.mxu0
        %v1904 = vadd.f32 %v1714, %v1903
        %v1905 = vpop.f32.mrf.mxu0
        %1906 = vmatprep.mubr.bf16.mxu0 0
        %1907 = vmatmul.mubr.bf16.gmra.mxu0 %v1762
        %v1908 = vpop.f32.mrf.mxu0
        %v1909 = vadd.f32 %v1714, %v1908
        %v1910 = vpop.f32.mrf.mxu0
        %v1911 = vpop.f32.mrf.mxu0
        %v1912 = vadd.f32 %v1714, %v1911
        %v1913 = vpop.f32.mrf.mxu0
        %1914 = vmatprep.mubr.bf16.mxu0 0
        %1915 = vmatmul.mubr.bf16.gmra.mxu0 %v1765
        %v1916 = vpop.f32.mrf.mxu0
        %v1917 = vadd.f32 %v1714, %v1916
        %v1918 = vpop.f32.mrf.mxu0
        %v1919 = vpop.f32.mrf.mxu0
        %v1920 = vadd.f32 %v1714, %v1919
        %v1921 = vpop.f32.mrf.mxu0
        %1922 = vmatprep.mubr.bf16.mxu0 0
        %1923 = vmatmul.mubr.bf16.gmra.mxu0 %v1768
        %v1924 = vpop.f32.mrf.mxu0
        %v1925 = vadd.f32 %v1714, %v1924
        %v1926 = vpop.f32.mrf.mxu0
        %v1927 = vpop.f32.mrf.mxu0
        %v1928 = vadd.f32 %v1714, %v1927
        %v1929 = vpop.f32.mrf.mxu0
        %1930 = vdwg.mxu0
        %v1931 = vadd.f32 %v1805, %v298
        %v1932 = vadd.f32 %v1808, %v299
        %v1933 = vadd.f32 %v1813, %v300
        %v1934 = vadd.f32 %v1816, %v301
        %v1935 = vadd.f32 %v1821, %v302
        %v1936 = vadd.f32 %v1824, %v303
        %v1937 = vadd.f32 %v1829, %v304
        %v1938 = vadd.f32 %v1832, %v305
        %v1939 = vadd.f32 %v1837, %v306
        %v1940 = vadd.f32 %v1840, %v307
        %v1941 = vadd.f32 %v1845, %v308
        %v1942 = vadd.f32 %v1848, %v309
        %v1943 = vadd.f32 %v1853, %v310
        %v1944 = vadd.f32 %v1856, %v311
        %v1945 = vadd.f32 %v1861, %v312
        %v1946 = vadd.f32 %v1864, %v313
        %v1947 = vadd.f32 %v1869, %v314
        %v1948 = vadd.f32 %v1872, %v315
        %v1949 = vadd.f32 %v1877, %v316
        %v1950 = vadd.f32 %v1880, %v317
        %v1951 = vadd.f32 %v1885, %v318
        %v1952 = vadd.f32 %v1888, %v319
        %v1953 = vadd.f32 %v1893, %v320
        %v1954 = vadd.f32 %v1896, %v321
        %v1955 = vadd.f32 %v1901, %v322
        %v1956 = vadd.f32 %v1904, %v323
        %v1957 = vadd.f32 %v1909, %v324
        %v1958 = vadd.f32 %v1912, %v325
        %v1959 = vadd.f32 %v1917, %v326
        %v1960 = vadd.f32 %v1920, %v327
        %v1961 = vadd.f32 %v1925, %v328
        %v1962 = vadd.f32 %v1928, %v329
        %1963 = vst [vmem:[%s296] sm:$0xff] %v1931
        %1964 = vst [vmem:[%s296 + $0x8] sm:$0xff] %v1932
        %1965 = vst [vmem:[%s296 + $0x10] sm:$0xff] %v1933
        %1966 = vst [vmem:[%s296 + $0x18] sm:$0xff] %v1934
        %1967 = vst [vmem:[%s296 + $0x20] sm:$0xff] %v1935
        %1968 = vst [vmem:[%s296 + $0x28] sm:$0xff] %v1936
        %1969 = vst [vmem:[%s296 + $0x30] sm:$0xff] %v1937
        %1970 = vst [vmem:[%s296 + $0x38] sm:$0xff] %v1938
        %1971 = vst [vmem:[%s296 + $0x40] sm:$0xff] %v1939
        %1972 = vst [vmem:[%s296 + $0x48] sm:$0xff] %v1940
        %1973 = vst [vmem:[%s296 + $0x50] sm:$0xff] %v1941
        %1974 = vst [vmem:[%s296 + $0x58] sm:$0xff] %v1942
        %1975 = vst [vmem:[%s296 + $0x60] sm:$0xff] %v1943
        %1976 = vst [vmem:[%s296 + $0x68] sm:$0xff] %v1944
        %1977 = vst [vmem:[%s296 + $0x70] sm:$0xff] %v1945
        %1978 = vst [vmem:[%s296 + $0x78] sm:$0xff] %v1946
        %1979 = vst [vmem:[%s296 + $0x80] sm:$0xff] %v1947
        %1980 = vst [vmem:[%s296 + $0x88] sm:$0xff] %v1948
        %1981 = vst [vmem:[%s296 + $0x90] sm:$0xff] %v1949
        %1982 = vst [vmem:[%s296 + $0x98] sm:$0xff] %v1950
        %1983 = vst [vmem:[%s296 + $0xa0] sm:$0xff] %v1951
        %1984 = vst [vmem:[%s296 + $0xa8] sm:$0xff] %v1952
        %1985 = vst [vmem:[%s296 + $0xb0] sm:$0xff] %v1953
        %1986 = vst [vmem:[%s296 + $0xb8] sm:$0xff] %v1954
        %1987 = vst [vmem:[%s296 + $0xc0] sm:$0xff] %v1955
        %1988 = vst [vmem:[%s296 + $0xc8] sm:$0xff] %v1956
        %1989 = vst [vmem:[%s296 + $0xd0] sm:$0xff] %v1957
        %1990 = vst [vmem:[%s296 + $0xd8] sm:$0xff] %v1958
        %1991 = vst [vmem:[%s296 + $0xe0] sm:$0xff] %v1959
        %1992 = vst [vmem:[%s296 + $0xe8] sm:$0xff] %v1960
        %1993 = vst [vmem:[%s296 + $0xf0] sm:$0xff] %v1961
        %1994 = vst [vmem:[%s296 + $0xf8] sm:$0xff] %v1962
        %s1995 = sand.u32 %s184, 1
        %s1996 = scalar_lea.sflag [#allocation5], %s1995
        %s1997 = sand.u32 %s184, 1
        %s1998 = smul.addr %s1997, 256
        %s1999 = scalar_lea.vmem [#allocation6], %s1998
        // Predicated region
        $region53: #{tpu_custom_call.1} parent=47 // pred_check
          %p2000 = pneg %p194
        $region54: #{tpu_custom_call.1} parent=47 // pred_check_branch
          %2002 = sbr.rel (%p2000) target = $region56
        $region55: #{tpu_custom_call.1} parent=47 // pred_region
          %s2004 = ssub.s32 4096, 4096
          %2005 = vsyncadd %s1996, %s2004
          %s2006 = smul.addr %s24, 32
          %s2007 = smul.addr %s2006, 128
          %s2008 = scalar_lea.hbm %s7, %s2007
          %s2009 = sshll.u32 %s1999, 4
          %s2010 = int_to_ptr.vmem [resolvable:$true] %s2009
          %2015 = dma.vmem_to_hbm [thread:$0]  %s2010, 4096, %s2008, %s1996, 128, 128, 8
        $region56: #{tpu_custom_call.1} parent=47 // pred_fallthru
          _
      $region48: #{tpu_custom_call.1} parent=5 // pred_fallthru
        _
      %p2016 = scmp.le.s32.totalorder 2, %s19
      // Predicated region
      $region57: #{tpu_custom_call.1} parent=5 // pred_check
        %p2017 = pneg %p2016
      $region58: #{tpu_custom_call.1} parent=5 // pred_check_branch
        %2019 = sbr.rel (%p2017) target = $region60
      $region59: #{tpu_custom_call.1} parent=5 // pred_region
        %s2020 = ssub.s32 %s19, 2
        // Predicated region
        $region61: #{tpu_custom_call.1} parent=59 // pred_check
          %p2021 = pneg %p200
        $region62: #{tpu_custom_call.1} parent=59 // pred_check_branch
          %2023 = sbr.rel (%p2021) target = $region64
        $region63: #{tpu_custom_call.1} parent=59 // pred_region
          %s2024 = sand.u32 %s185, 1
          %s2025 = scalar_lea.sflag [#allocation5], %s2024
          %s2026 = sand.u32 %s185, 1
          %s2027 = smul.addr %s2026, 256
          %s2028 = scalar_lea.vmem [#allocation6], %s2027
          %2029 = dma.done %s2025, 4096
        $region64: #{tpu_custom_call.1} parent=59 // pred_fallthru
          _
      $region60: #{tpu_custom_call.1} parent=5 // pred_fallthru
        _
    $region6: #{tpu_custom_call.1} parent=1 // loop_footer
      %s23 = sadd.s32 1, %s19
    $region7: #{tpu_custom_call.1} parent=1 // loop_footer_branch
      %18 = sbr.rel target = $region3
    $region8: #{tpu_custom_call.1} parent=1 // loop_exit
      _
    %2030 = vsyncpa [#allocation4], 1
    %s2031 = scalar_lea.sflag [#allocation4], 1
    %2032 = vsyncpa %s2031, 1
    %2033 = vsyncpa [#allocation5], 1
    %s2034 = scalar_lea.sflag [#allocation5], 1
    %2035 = vsyncpa %s2034, 1

// kernel: tpu_custom_call.1
$region0: #{tpu_custom_call.1}
  #allocation0 [shape = 'u32[]', space=smem, size = 0x4, offset = 0x4, fixed_abs, tag = 'smem constant byte address 0x4 - core index']
  #allocation1 [shape = 'u32[144,128]{1,0:T(1,128)}', space=vmem, size = 0x12000, scoped, tag = 'internal scratch']
  #allocation2 [shape = 'f32[1,18,18,16]{3,2,1,0:T(8,128)}', space=vmem, size = 0x36000, scoped, tag = 'scratch operand']
  %s0 = inlined_call_operand.hbm [shape: f32[2,16,16,128], index: 0, kind: input, shape index: {}]
  %s1 = inlined_call_operand.vmem [shape: bf16[128,16], index: 1, kind: input, shape index: {}]
  %s2 = inlined_call_operand.vmem [shape: f32[1,16], index: 2, kind: input, shape index: {}]
  %s3 = inlined_call_operand.vmem [shape: f32[9,16], index: 3, kind: input, shape index: {}]
  %s4 = inlined_call_operand.vmem [shape: f32[1,16], index: 4, kind: input, shape index: {}]
  %s5 = inlined_call_operand.vmem [shape: bf16[16,128], index: 5, kind: input, shape index: {}]
  %s6 = inlined_call_operand.vmem [shape: f32[1,128], index: 6, kind: input, shape index: {}]
  %s7 = inlined_call_operand.hbm [shape: f32[2,256,128], index: 7, kind: output, shape index: {}]
  %s8 = sld [smem:[#allocation0]]
  $region65: #{tpu_custom_call.1} parent=0
    _
  %s10 = ssub.s32 1, %s8
  %s11 = scalar_select 0, %s10, %s8
  $region1: #{tpu_custom_call.1} parent=0
    #allocation3 [shape = 'u8[262144]{0}', space=vmem, size = 0x40000, scoped, tag = 'input window, operand 0']
    #allocation4 [shape = 's32[2]{0}', space=sflag, size = 0x8, scoped, tag = 'scoped memory for tpu_custom_call.1']
    #allocation5 [shape = 's32[2]{0}', space=sflag, size = 0x8, scoped, tag = 'scoped memory for tpu_custom_call.1']
    #allocation6 [shape = 'u8[262144]{0}', space=vmem, size = 0x40000, scoped, tag = 'output window, operand 0']
    %12 = vsyncpa [#allocation4], 0
    %s13 = scalar_lea.sflag [#allocation4], 1
    %14 = vsyncpa %s13, 0
    %15 = vsyncpa [#allocation5], 0
    %s16 = scalar_lea.sflag [#allocation5], 1
    %17 = vsyncpa %s16, 0
    loop: start=0, step=1, limit=4
    $region2: #{tpu_custom_call.1} parent=1 // loop_pre_header
      _
    $region3: #{tpu_custom_call.1} parent=1 // loop_header
      %s19 = sphi 0, %s23
      %p20 = scmp.ge.s32.totalorder %s19, 4
      %s29 = sphi 0, %s31
      %s32 = sphi 0, %s29
      %s33 = sphi 0, %s32
      %s49 = sphi 0, %s33
      %s53 = sphi 0, %s53
      %s55 = sphi 0, %s53
      %s56 = sphi 0, %s55
      %s70 = sphi 0, %s56
      %s74 = sphi 0, %s74
      %s76 = sphi 0, %s74
      %s77 = sphi 0, %s76
      %s91 = sphi 0, %s77
      %s95 = sphi 0, %s95
      %s97 = sphi 0, %s95
      %s98 = sphi 0, %s97
      %s112 = sphi 0, %s98
      %s116 = sphi 0, %s116
      %s118 = sphi 0, %s116
      %s119 = sphi 0, %s118
      %s133 = sphi 0, %s119
      %s137 = sphi 0, %s137
      %s139 = sphi 0, %s137
      %s140 = sphi 0, %s139
      %s154 = sphi 0, %s140
      %s158 = sphi 0, %s158
      %s160 = sphi 0, %s158
      %s161 = sphi 0, %s160
      %s175 = sphi 0, %s161
      %s181 = sphi 0, %s183
      %s184 = sphi 0, %s181
      %s185 = sphi 0, %s184
      %s201 = sphi 0, %s185
    $region4: #{tpu_custom_call.1} parent=1 // loop_header_branch
      %22 = sbr.rel (%p20) target = $region8
    $region5: #{tpu_custom_call.1} parent=1 // loop_body
      %s24 = ssub.s32 %s19, 1
      %s25 = ssub.s32 %s19, 2
      %s26 = sadd.s32 %s19, 1
      %s27 = ssub.s32 %s19, %s26
      %p28 = scmp.eq.s32.totalorder %s27, 0
      %s30 = sadd.s32 %s29, 1
      %s31 = scalar_select %p28, %s29, %s30
      %p34 = pneg %p28
      %p35 = scmp.eq.s32.totalorder %s19, 1
      %p36 = por %p34, %p35
      %p37 = scmp.ne.s32.totalorder %s29, %s32
      %p38 = scmp.eq.s32.totalorder %s19, 0
      %p39 = por %p37, %p38
      %p40 = scmp.ne.s32.totalorder %s29, %s32
      %p41 = scmp.eq.s32.totalorder %s24, 1
      %p42 = por %p40, %p41
      %p43 = scmp.ne.s32.totalorder %s32, %s33
      %p44 = scmp.eq.s32.totalorder %s24, 0
      %p45 = por %p43, %p44
      %p46 = scmp.ne.s32.totalorder %s32, %s33
      %p47 = scmp.eq.s32.totalorder %s25, 1
      %p48 = por %p46, %p47
      %p50 = scmp.ne.s32.totalorder %s33, %s49
      %p51 = scmp.eq.s32.totalorder %s25, 0
      %p52 = por %p50, %p51
      %s54 = sadd.s32 %s53, 1
      %p57 = scmp.eq.s32.totalorder %s19, 1
      %p58 = scmp.ne.s32.totalorder %s53, %s55
      %p59 = scmp.eq.s32.totalorder %s19, 0
      %p60 = por %p58, %p59
      %p61 = scmp.ne.s32.totalorder %s53, %s55
      %p62 = scmp.eq.s32.totalorder %s24, 1
      %p63 = por %p61, %p62
      %p64 = scmp.ne.s32.totalorder %s55, %s56
      %p65 = scmp.eq.s32.totalorder %s24, 0
      %p66 = por %p64, %p65
      %p67 = scmp.ne.s32.totalorder %s55, %s56
      %p68 = scmp.eq.s32.totalorder %s25, 1
      %p69 = por %p67, %p68
      %p71 = scmp.ne.s32.totalorder %s56, %s70
      %p72 = scmp.eq.s32.totalorder %s25, 0
      %p73 = por %p71, %p72
      %s75 = sadd.s32 %s74, 1
      %p78 = scmp.eq.s32.totalorder %s19, 1
      %p79 = scmp.ne.s32.totalorder %s74, %s76
      %p80 = scmp.eq.s32.totalorder %s19, 0
      %p81 = por %p79, %p80
      %p82 = scmp.ne.s32.totalorder %s74, %s76
      %p83 = scmp.eq.s32.totalorder %s24, 1
      %p84 = por %p82, %p83
      %p85 = scmp.ne.s32.totalorder %s76, %s77
      %p86 = scmp.eq.s32.totalorder %s24, 0
      %p87 = por %p85, %p86
      %p88 = scmp.ne.s32.totalorder %s76, %s77
      %p89 = scmp.eq.s32.totalorder %s25, 1
      %p90 = por %p88, %p89
      %p92 = scmp.ne.s32.totalorder %s77, %s91
      %p93 = scmp.eq.s32.totalorder %s25, 0
      %p94 = por %p92, %p93
      %s96 = sadd.s32 %s95, 1
      %p99 = scmp.eq.s32.totalorder %s19, 1
      %p100 = scmp.ne.s32.totalorder %s95, %s97
      %p101 = scmp.eq.s32.totalorder %s19, 0
      %p102 = por %p100, %p101
      %p103 = scmp.ne.s32.totalorder %s95, %s97
      %p104 = scmp.eq.s32.totalorder %s24, 1
      %p105 = por %p103, %p104
      %p106 = scmp.ne.s32.totalorder %s97, %s98
      %p107 = scmp.eq.s32.totalorder %s24, 0
      %p108 = por %p106, %p107
      %p109 = scmp.ne.s32.totalorder %s97, %s98
      %p110 = scmp.eq.s32.totalorder %s25, 1
      %p111 = por %p109, %p110
      %p113 = scmp.ne.s32.totalorder %s98, %s112
      %p114 = scmp.eq.s32.totalorder %s25, 0
      %p115 = por %p113, %p114
      %s117 = sadd.s32 %s116, 1
      %p120 = scmp.eq.s32.totalorder %s19, 1
      %p121 = scmp.ne.s32.totalorder %s116, %s118
      %p122 = scmp.eq.s32.totalorder %s19, 0
      %p123 = por %p121, %p122
      %p124 = scmp.ne.s32.totalorder %s116, %s118
      %p125 = scmp.eq.s32.totalorder %s24, 1
      %p126 = por %p124, %p125
      %p127 = scmp.ne.s32.totalorder %s118, %s119
      %p128 = scmp.eq.s32.totalorder %s24, 0
      %p129 = por %p127, %p128
      %p130 = scmp.ne.s32.totalorder %s118, %s119
      %p131 = scmp.eq.s32.totalorder %s25, 1
      %p132 = por %p130, %p131
      %p134 = scmp.ne.s32.totalorder %s119, %s133
      %p135 = scmp.eq.s32.totalorder %s25, 0
      %p136 = por %p134, %p135
      %s138 = sadd.s32 %s137, 1
      %p141 = scmp.eq.s32.totalorder %s19, 1
      %p142 = scmp.ne.s32.totalorder %s137, %s139
      %p143 = scmp.eq.s32.totalorder %s19, 0
      %p144 = por %p142, %p143
      %p145 = scmp.ne.s32.totalorder %s137, %s139
      %p146 = scmp.eq.s32.totalorder %s24, 1
      %p147 = por %p145, %p146
      %p148 = scmp.ne.s32.totalorder %s139, %s140
      %p149 = scmp.eq.s32.totalorder %s24, 0
      %p150 = por %p148, %p149
      %p151 = scmp.ne.s32.totalorder %s139, %s140
      %p152 = scmp.eq.s32.totalorder %s25, 1
      %p153 = por %p151, %p152
      %p155 = scmp.ne.s32.totalorder %s140, %s154
      %p156 = scmp.eq.s32.totalorder %s25, 0
      %p157 = por %p155, %p156
      %s159 = sadd.s32 %s158, 1
      %p162 = scmp.eq.s32.totalorder %s19, 1
      %p163 = scmp.ne.s32.totalorder %s158, %s160
      %p164 = scmp.eq.s32.totalorder %s19, 0
      %p165 = por %p163, %p164
      %p166 = scmp.ne.s32.totalorder %s158, %s160
      %p167 = scmp.eq.s32.totalorder %s24, 1
      %p168 = por %p166, %p167
      %p169 = scmp.ne.s32.totalorder %s160, %s161
      %p170 = scmp.eq.s32.totalorder %s24, 0
      %p171 = por %p169, %p170
      %p172 = scmp.ne.s32.totalorder %s160, %s161
      %p173 = scmp.eq.s32.totalorder %s25, 1
      %p174 = por %p172, %p173
      %p176 = scmp.ne.s32.totalorder %s161, %s175
      %p177 = scmp.eq.s32.totalorder %s25, 0
      %p178 = por %p176, %p177
      %s179 = ssub.s32 %s19, %s26
      %p180 = scmp.eq.s32.totalorder %s179, 0
      %s182 = sadd.s32 %s181, 1
      %s183 = scalar_select %p180, %s181, %s182
      %p186 = pneg %p180
      %p187 = scmp.eq.s32.totalorder %s19, 1
      %p188 = por %p186, %p187
      %p189 = scmp.ne.s32.totalorder %s181, %s184
      %p190 = scmp.eq.s32.totalorder %s19, 0
      %p191 = por %p189, %p190
      %p192 = scmp.ne.s32.totalorder %s181, %s184
      %p193 = scmp.eq.s32.totalorder %s24, 1
      %p194 = por %p192, %p193
      %p195 = scmp.ne.s32.totalorder %s184, %s185
      %p196 = scmp.eq.s32.totalorder %s24, 0
      %p197 = por %p195, %p196
      %p198 = scmp.ne.s32.totalorder %s184, %s185
      %p199 = scmp.eq.s32.totalorder %s25, 1
      %p200 = por %p198, %p199
      %p202 = scmp.ne.s32.totalorder %s185, %s201
      %p203 = scmp.eq.s32.totalorder %s25, 0
      %p204 = por %p202, %p203
      %p205 = scmp.le.s32.totalorder 1, %s19
      %p206 = scmp.lt.s32.totalorder %s19, 3
      %p207 = pnand %p205, %p206
      %p208 = pneg %p207
      // Predicated region
      $region9: #{tpu_custom_call.1} parent=5 // pred_check
        _
      $region10: #{tpu_custom_call.1} parent=5 // pred_check_branch
        %210 = sbr.rel (%p207) target = $region12
      $region11: #{tpu_custom_call.1} parent=5 // pred_region
        %s211 = ssub.s32 %s19, 1
        // Predicated region
        $region13: #{tpu_custom_call.1} parent=11 // pred_check
          %p212 = pneg %p66
        $region14: #{tpu_custom_call.1} parent=11 // pred_check_branch
          %214 = sbr.rel (%p212) target = $region16
        $region15: #{tpu_custom_call.1} parent=11 // pred_region
          _
        $region16: #{tpu_custom_call.1} parent=11 // pred_fallthru
          _
        // Predicated region
        $region17: #{tpu_custom_call.1} parent=11 // pred_check
          %p215 = pneg %p87
        $region18: #{tpu_custom_call.1} parent=11 // pred_check_branch
          %217 = sbr.rel (%p215) target = $region20
        $region19: #{tpu_custom_call.1} parent=11 // pred_region
          _
        $region20: #{tpu_custom_call.1} parent=11 // pred_fallthru
          _
        // Predicated region
        $region21: #{tpu_custom_call.1} parent=11 // pred_check
          %p218 = pneg %p108
        $region22: #{tpu_custom_call.1} parent=11 // pred_check_branch
          %220 = sbr.rel (%p218) target = $region24
        $region23: #{tpu_custom_call.1} parent=11 // pred_region
          _
        $region24: #{tpu_custom_call.1} parent=11 // pred_fallthru
          _
        // Predicated region
        $region25: #{tpu_custom_call.1} parent=11 // pred_check
          %p221 = pneg %p129
        $region26: #{tpu_custom_call.1} parent=11 // pred_check_branch
          %223 = sbr.rel (%p221) target = $region28
        $region27: #{tpu_custom_call.1} parent=11 // pred_region
          _
        $region28: #{tpu_custom_call.1} parent=11 // pred_fallthru
          _
        // Predicated region
        $region29: #{tpu_custom_call.1} parent=11 // pred_check
          %p224 = pneg %p150
        $region30: #{tpu_custom_call.1} parent=11 // pred_check_branch
          %226 = sbr.rel (%p224) target = $region32
        $region31: #{tpu_custom_call.1} parent=11 // pred_region
          _
        $region32: #{tpu_custom_call.1} parent=11 // pred_fallthru
          _
        // Predicated region
        $region33: #{tpu_custom_call.1} parent=11 // pred_check
          %p227 = pneg %p171
        $region34: #{tpu_custom_call.1} parent=11 // pred_check_branch
          %229 = sbr.rel (%p227) target = $region36
        $region35: #{tpu_custom_call.1} parent=11 // pred_region
          _
        $region36: #{tpu_custom_call.1} parent=11 // pred_fallthru
          _
      $region12: #{tpu_custom_call.1} parent=5 // pred_fallthru
        _
      %p230 = scmp.lt.s32.totalorder %s19, 2
      // Predicated region
      $region37: #{tpu_custom_call.1} parent=5 // pred_check
        %p231 = pneg %p230
      $region38: #{tpu_custom_call.1} parent=5 // pred_check_branch
        %233 = sbr.rel (%p231) target = $region40
      $region39: #{tpu_custom_call.1} parent=5 // pred_region
        // Predicated region
        $region41: #{tpu_custom_call.1} parent=39 // pred_check
          %p234 = pneg %p39
        $region42: #{tpu_custom_call.1} parent=39 // pred_check_branch
          %236 = sbr.rel (%p234) target = $region44
        $region43: #{tpu_custom_call.1} parent=39 // pred_region
          %s237 = sand.u32 %s29, 1
          %s238 = scalar_lea.sflag [#allocation4], %s237
          %s239 = sand.u32 %s29, 1
          %s240 = smul.addr %s239, 256
          %s241 = scalar_lea.vmem [#allocation3], %s240
          %s243 = ssub.s32 4096, 4096
          %244 = vsyncadd %s238, %s243
          %s245 = smul.addr %s19, 32
          %s246 = smul.addr %s245, 128
          %s247 = scalar_lea.hbm %s0, %s246
          %s248 = sshll.u32 %s241, 4
          %s249 = int_to_ptr.vmem [resolvable:$true] %s248
          %254 = dma.hbm_to_vmem [thread:$0]  %s247, 4096, %s249, %s238, 128, 128, 8
        $region44: #{tpu_custom_call.1} parent=39 // pred_fallthru
          _
      $region40: #{tpu_custom_call.1} parent=5 // pred_fallthru
        _
      %p255 = scmp.le.s32.totalorder 1, %s19
      %p256 = scmp.lt.s32.totalorder %s19, 3
      %p257 = pnand %p255, %p256
      %p258 = pneg %p257
      // Predicated region
      $region45: #{tpu_custom_call.1} parent=5 // pred_check
        _
      $region46: #{tpu_custom_call.1} parent=5 // pred_check_branch
        %260 = sbr.rel (%p257) target = $region48
      $region47: #{tpu_custom_call.1} parent=5 // pred_region
        %s261 = ssub.s32 %s19, 1
        %s262 = sand.u32 %s32, 1
        %s263 = scalar_lea.sflag [#allocation4], %s262
        %s264 = sand.u32 %s32, 1
        %s265 = smul.addr %s264, 256
        %s266 = scalar_lea.vmem [#allocation3], %s265
        // Predicated region
        $region49: #{tpu_custom_call.1} parent=47 // pred_check
          %p267 = pneg %p45
        $region50: #{tpu_custom_call.1} parent=47 // pred_check_branch
          %269 = sbr.rel (%p267) target = $region52
        $region51: #{tpu_custom_call.1} parent=47 // pred_region
          %270 = dma.done %s263, 4096
        $region52: #{tpu_custom_call.1} parent=47 // pred_fallthru
          _
        %s271 = sand.u32 %s32, 1
        %s272 = scalar_lea.sflag [#allocation4], %s271
        %s273 = sand.u32 %s32, 1
        %s274 = smul.addr %s273, 256
        %s275 = scalar_lea.vmem [#allocation3], %s274
        %p276 = pneg %p45
        %p277 = pneg %p42
        %p278 = pneg %p66
        %p279 = pneg %p63
        %p280 = pneg %p87
        %p281 = pneg %p84
        %p282 = pneg %p108
        %p283 = pneg %p105
        %p284 = pneg %p129
        %p285 = pneg %p126
        %p286 = pneg %p150
        %p287 = pneg %p147
        %p288 = pneg %p171
        %p289 = pneg %p168
        %p290 = pneg %p197
        %p291 = pneg %p194
        %s292 = sand.u32 %s184, 1
        %s293 = scalar_lea.sflag [#allocation5], %s292
        %s294 = sand.u32 %s184, 1
        %s295 = smul.addr %s294, 256
        %s296 = scalar_lea.vmem [#allocation6], %s295
        %v298 = vld [vmem:[%s266] sm:$0xff]
        %v299 = vld [vmem:[%s266 + $0x8] sm:$0xff]
        %v300 = vld [vmem:[%s266 + $0x10] sm:$0xff]
        %v301 = vld [vmem:[%s266 + $0x18] sm:$0xff]
        %v302 = vld [vmem:[%s266 + $0x20] sm:$0xff]
        %v303 = vld [vmem:[%s266 + $0x28] sm:$0xff]
        %v304 = vld [vmem:[%s266 + $0x30] sm:$0xff]
        %v305 = vld [vmem:[%s266 + $0x38] sm:$0xff]
        %v306 = vld [vmem:[%s266 + $0x40] sm:$0xff]
        %v307 = vld [vmem:[%s266 + $0x48] sm:$0xff]
        %v308 = vld [vmem:[%s266 + $0x50] sm:$0xff]
        %v309 = vld [vmem:[%s266 + $0x58] sm:$0xff]
        %v310 = vld [vmem:[%s266 + $0x60] sm:$0xff]
        %v311 = vld [vmem:[%s266 + $0x68] sm:$0xff]
        %v312 = vld [vmem:[%s266 + $0x70] sm:$0xff]
        %v313 = vld [vmem:[%s266 + $0x78] sm:$0xff]
        %v314 = vld [vmem:[%s266 + $0x80] sm:$0xff]
        %v315 = vld [vmem:[%s266 + $0x88] sm:$0xff]
        %v316 = vld [vmem:[%s266 + $0x90] sm:$0xff]
        %v317 = vld [vmem:[%s266 + $0x98] sm:$0xff]
        %v318 = vld [vmem:[%s266 + $0xa0] sm:$0xff]
        %v319 = vld [vmem:[%s266 + $0xa8] sm:$0xff]
        %v320 = vld [vmem:[%s266 + $0xb0] sm:$0xff]
        %v321 = vld [vmem:[%s266 + $0xb8] sm:$0xff]
        %v322 = vld [vmem:[%s266 + $0xc0] sm:$0xff]
        %v323 = vld [vmem:[%s266 + $0xc8] sm:$0xff]
        %v324 = vld [vmem:[%s266 + $0xd0] sm:$0xff]
        %v325 = vld [vmem:[%s266 + $0xd8] sm:$0xff]
        %v326 = vld [vmem:[%s266 + $0xe0] sm:$0xff]
        %v327 = vld [vmem:[%s266 + $0xe8] sm:$0xff]
        %v328 = vld [vmem:[%s266 + $0xf0] sm:$0xff]
        %v329 = vld [vmem:[%s266 + $0xf8] sm:$0xff]
        %v330 = vpack.c.bf16 %v299, %v298
        %v331 = vpack.c.bf16 %v301, %v300
        %v332 = vpack.c.bf16 %v303, %v302
        %v333 = vpack.c.bf16 %v305, %v304
        %v334 = vpack.c.bf16 %v307, %v306
        %v335 = vpack.c.bf16 %v309, %v308
        %v336 = vpack.c.bf16 %v311, %v310
        %v337 = vpack.c.bf16 %v313, %v312
        %v338 = vpack.c.bf16 %v315, %v314
        %v339 = vpack.c.bf16 %v317, %v316
        %v340 = vpack.c.bf16 %v319, %v318
        %v341 = vpack.c.bf16 %v321, %v320
        %v342 = vpack.c.bf16 %v323, %v322
        %v343 = vpack.c.bf16 %v325, %v324
        %v344 = vpack.c.bf16 %v327, %v326
        %v345 = vpack.c.bf16 %v329, %v328
        %v346 = vld [vmem:[%s1] sm:$0xf]
        %v347 = vld [vmem:[%s1 + $0x4] sm:$0xf]
        %v348 = vld [vmem:[%s1 + $0x8] sm:$0xf]
        %v349 = vld [vmem:[%s1 + $0xc] sm:$0xf]
        %v350 = vld [vmem:[%s1 + $0x10] sm:$0xf]
        %v351 = vld [vmem:[%s1 + $0x14] sm:$0xf]
        %v352 = vld [vmem:[%s1 + $0x18] sm:$0xf]
        %v353 = vld [vmem:[%s1 + $0x1c] sm:$0xf]
        %v354 = vld [vmem:[%s1 + $0x20] sm:$0xf]
        %v355 = vld [vmem:[%s1 + $0x24] sm:$0xf]
        %v356 = vld [vmem:[%s1 + $0x28] sm:$0xf]
        %v357 = vld [vmem:[%s1 + $0x2c] sm:$0xf]
        %v358 = vld [vmem:[%s1 + $0x30] sm:$0xf]
        %v359 = vld [vmem:[%s1 + $0x34] sm:$0xf]
        %v360 = vld [vmem:[%s1 + $0x38] sm:$0xf]
        %v361 = vld [vmem:[%s1 + $0x3c] sm:$0xf]
        %v362 = vld [vmem:[%s2] sm:$0x1]
        %v364 = vlaneseq
        %v365 = vshrl.u32 %v364, 7
        %v366 = vsub.s32 0, %v365
        %v367 = vrot.slane %v362, %v366
        %v385 = vunpack.c.l.b16 %v346
        %v386 = vunpack.c.l.b16 %v347
        %v387 = vunpack.c.l.b16 %v348
        %v388 = vunpack.c.l.b16 %v349
        %v389 = vunpack.c.l.b16 %v350
        %v390 = vunpack.c.l.b16 %v351
        %v391 = vunpack.c.l.b16 %v352
        %v392 = vunpack.c.l.b16 %v353
        %v393 = vunpack.c.l.b16 %v354
        %v394 = vunpack.c.l.b16 %v355
        %v395 = vunpack.c.l.b16 %v356
        %v396 = vunpack.c.l.b16 %v357
        %v397 = vunpack.c.l.b16 %v358
        %v398 = vunpack.c.l.b16 %v359
        %v399 = vunpack.c.l.b16 %v360
        %v400 = vunpack.c.l.b16 %v361
        %v401 = vpack.c.b16 %v386, %v385
        %v402 = vpack.c.b16 %v388, %v387
        %v403 = vpack.c.b16 %v390, %v389
        %v404 = vpack.c.b16 %v392, %v391
        %v405 = vpack.c.b16 %v394, %v393
        %v406 = vpack.c.b16 %v396, %v395
        %v407 = vpack.c.b16 %v398, %v397
        %v408 = vpack.c.b16 %v400, %v399
        %417 = vmatprep.subr.bf16.mxu0 0
        %418 = vmatpush1.bf16.msra.mxu0 %v408
        %419 = vmatprep.subr.bf16.mxu0 0
        %420 = vmatpush1.bf16.msra.mxu0 %v407
        %421 = vmatprep.subr.bf16.mxu0 0
        %422 = vmatpush1.bf16.msra.mxu0 %v406
        %423 = vmatprep.subr.bf16.mxu0 0
        %424 = vmatpush1.bf16.msra.mxu0 %v405
        %425 = vmatprep.subr.bf16.mxu0 0
        %426 = vmatpush1.bf16.msra.mxu0 %v404
        %427 = vmatprep.subr.bf16.mxu0 0
        %428 = vmatpush1.bf16.msra.mxu0 %v403
        %429 = vmatprep.subr.bf16.mxu0 0
        %430 = vmatpush1.bf16.msra.mxu0 %v402
        %431 = vmatprep.subr.bf16.mxu0 0
        %432 = vmatpush1.bf16.msra.mxu0 %v401
        %433 = vmatprep.subr.bf16.mxu0 0
        %434 = vmatpush2.bf16.msra.mxu0 0
        %435 = vmatprep.subr.bf16.mxu0 0
        %436 = vmatpush2.bf16.msra.mxu0 0
        %437 = vmatprep.subr.bf16.mxu0 0
        %438 = vmatpush2.bf16.msra.mxu0 0
        %439 = vmatprep.subr.bf16.mxu0 0
        %440 = vmatpush2.bf16.msra.mxu0 0
        %441 = vmatprep.subr.bf16.mxu0 0
        %442 = vmatpush2.bf16.msra.mxu0 0
        %443 = vmatprep.subr.bf16.mxu0 0
        %444 = vmatpush2.bf16.msra.mxu0 0
        %445 = vmatprep.subr.bf16.mxu0 0
        %446 = vmatpush2.bf16.msra.mxu0 0
        %447 = vmatprep.subr.bf16.mxu0 0
        %448 = vmatpush2.bf16.msra.mxu0 0
        %449 = vmatprep.mubr.bf16.mxu0 0
        %450 = vmatmul.mubr.bf16.gmra.mxu0 %v330
        %v451 = vpop.f32.mrf.mxu0
        %v452 = vadd.f32 %v367, %v451
        %v453 = vpop.f32.mrf.mxu0
        %v454 = vpop.f32.mrf.mxu0
        %v455 = vadd.f32 %v367, %v454
        %v456 = vpop.f32.mrf.mxu0
        %457 = vmatprep.mubr.bf16.mxu0 0
        %458 = vmatmul.mubr.bf16.gmra.mxu0 %v331
        %v459 = vpop.f32.mrf.mxu0
        %v460 = vadd.f32 %v367, %v459
        %v461 = vpop.f32.mrf.mxu0
        %v462 = vpop.f32.mrf.mxu0
        %v463 = vadd.f32 %v367, %v462
        %v464 = vpop.f32.mrf.mxu0
        %465 = vmatprep.mubr.bf16.mxu0 0
        %466 = vmatmul.mubr.bf16.gmra.mxu0 %v332
        %v467 = vpop.f32.mrf.mxu0
        %v468 = vadd.f32 %v367, %v467
        %v469 = vpop.f32.mrf.mxu0
        %v470 = vpop.f32.mrf.mxu0
        %v471 = vadd.f32 %v367, %v470
        %v472 = vpop.f32.mrf.mxu0
        %473 = vmatprep.mubr.bf16.mxu0 0
        %474 = vmatmul.mubr.bf16.gmra.mxu0 %v333
        %v475 = vpop.f32.mrf.mxu0
        %v476 = vadd.f32 %v367, %v475
        %v477 = vpop.f32.mrf.mxu0
        %v478 = vpop.f32.mrf.mxu0
        %v479 = vadd.f32 %v367, %v478
        %v480 = vpop.f32.mrf.mxu0
        %481 = vmatprep.mubr.bf16.mxu0 0
        %482 = vmatmul.mubr.bf16.gmra.mxu0 %v334
        %v483 = vpop.f32.mrf.mxu0
        %v484 = vadd.f32 %v367, %v483
        %v485 = vpop.f32.mrf.mxu0
        %v486 = vpop.f32.mrf.mxu0
        %v487 = vadd.f32 %v367, %v486
        %v488 = vpop.f32.mrf.mxu0
        %489 = vmatprep.mubr.bf16.mxu0 0
        %490 = vmatmul.mubr.bf16.gmra.mxu0 %v335
        %v491 = vpop.f32.mrf.mxu0
        %v492 = vadd.f32 %v367, %v491
        %v493 = vpop.f32.mrf.mxu0
        %v494 = vpop.f32.mrf.mxu0
        %v495 = vadd.f32 %v367, %v494
        %v496 = vpop.f32.mrf.mxu0
        %497 = vmatprep.mubr.bf16.mxu0 0
        %498 = vmatmul.mubr.bf16.gmra.mxu0 %v336
        %v499 = vpop.f32.mrf.mxu0
        %v500 = vadd.f32 %v367, %v499
        %v501 = vpop.f32.mrf.mxu0
        %v502 = vpop.f32.mrf.mxu0
        %v503 = vadd.f32 %v367, %v502
        %v504 = vpop.f32.mrf.mxu0
        %505 = vmatprep.mubr.bf16.mxu0 0
        %506 = vmatmul.mubr.bf16.gmra.mxu0 %v337
        %v507 = vpop.f32.mrf.mxu0
        %v508 = vadd.f32 %v367, %v507
        %v509 = vpop.f32.mrf.mxu0
        %v510 = vpop.f32.mrf.mxu0
        %v511 = vadd.f32 %v367, %v510
        %v512 = vpop.f32.mrf.mxu0
        %513 = vmatprep.mubr.bf16.mxu0 0
        %514 = vmatmul.mubr.bf16.gmra.mxu0 %v338
        %v515 = vpop.f32.mrf.mxu0
        %v516 = vadd.f32 %v367, %v515
        %v517 = vpop.f32.mrf.mxu0
        %v518 = vpop.f32.mrf.mxu0
        %v519 = vadd.f32 %v367, %v518
        %v520 = vpop.f32.mrf.mxu0
        %521 = vmatprep.mubr.bf16.mxu0 0
        %522 = vmatmul.mubr.bf16.gmra.mxu0 %v339
        %v523 = vpop.f32.mrf.mxu0
        %v524 = vadd.f32 %v367, %v523
        %v525 = vpop.f32.mrf.mxu0
        %v526 = vpop.f32.mrf.mxu0
        %v527 = vadd.f32 %v367, %v526
        %v528 = vpop.f32.mrf.mxu0
        %529 = vmatprep.mubr.bf16.mxu0 0
        %530 = vmatmul.mubr.bf16.gmra.mxu0 %v340
        %v531 = vpop.f32.mrf.mxu0
        %v532 = vadd.f32 %v367, %v531
        %v533 = vpop.f32.mrf.mxu0
        %v534 = vpop.f32.mrf.mxu0
        %v535 = vadd.f32 %v367, %v534
        %v536 = vpop.f32.mrf.mxu0
        %537 = vmatprep.mubr.bf16.mxu0 0
        %538 = vmatmul.mubr.bf16.gmra.mxu0 %v341
        %v539 = vpop.f32.mrf.mxu0
        %v540 = vadd.f32 %v367, %v539
        %v541 = vpop.f32.mrf.mxu0
        %v542 = vpop.f32.mrf.mxu0
        %v543 = vadd.f32 %v367, %v542
        %v544 = vpop.f32.mrf.mxu0
        %545 = vmatprep.mubr.bf16.mxu0 0
        %546 = vmatmul.mubr.bf16.gmra.mxu0 %v342
        %v547 = vpop.f32.mrf.mxu0
        %v548 = vadd.f32 %v367, %v547
        %v549 = vpop.f32.mrf.mxu0
        %v550 = vpop.f32.mrf.mxu0
        %v551 = vadd.f32 %v367, %v550
        %v552 = vpop.f32.mrf.mxu0
        %553 = vmatprep.mubr.bf16.mxu0 0
        %554 = vmatmul.mubr.bf16.gmra.mxu0 %v343
        %v555 = vpop.f32.mrf.mxu0
        %v556 = vadd.f32 %v367, %v555
        %v557 = vpop.f32.mrf.mxu0
        %v558 = vpop.f32.mrf.mxu0
        %v559 = vadd.f32 %v367, %v558
        %v560 = vpop.f32.mrf.mxu0
        %561 = vmatprep.mubr.bf16.mxu0 0
        %562 = vmatmul.mubr.bf16.gmra.mxu0 %v344
        %v563 = vpop.f32.mrf.mxu0
        %v564 = vadd.f32 %v367, %v563
        %v565 = vpop.f32.mrf.mxu0
        %v566 = vpop.f32.mrf.mxu0
        %v567 = vadd.f32 %v367, %v566
        %v568 = vpop.f32.mrf.mxu0
        %569 = vmatprep.mubr.bf16.mxu0 0
        %570 = vmatmul.mubr.bf16.gmra.mxu0 %v345
        %v571 = vpop.f32.mrf.mxu0
        %v572 = vadd.f32 %v367, %v571
        %v573 = vpop.f32.mrf.mxu0
        %v574 = vpop.f32.mrf.mxu0
        %v575 = vadd.f32 %v367, %v574
        %v576 = vpop.f32.mrf.mxu0
        %577 = vdwg.mxu0
        %v578 = vmax.f32 %v452, 0.0
        %v579 = vmax.f32 %v455, 0.0
        %v580 = vmax.f32 %v460, 0.0
        %v581 = vmax.f32 %v463, 0.0
        %v582 = vmax.f32 %v468, 0.0
        %v583 = vmax.f32 %v471, 0.0
        %v584 = vmax.f32 %v476, 0.0
        %v585 = vmax.f32 %v479, 0.0
        %v586 = vmax.f32 %v484, 0.0
        %v587 = vmax.f32 %v487, 0.0
        %v588 = vmax.f32 %v492, 0.0
        %v589 = vmax.f32 %v495, 0.0
        %v590 = vmax.f32 %v500, 0.0
        %v591 = vmax.f32 %v503, 0.0
        %v592 = vmax.f32 %v508, 0.0
        %v593 = vmax.f32 %v511, 0.0
        %v594 = vmax.f32 %v516, 0.0
        %v595 = vmax.f32 %v519, 0.0
        %v596 = vmax.f32 %v524, 0.0
        %v597 = vmax.f32 %v527, 0.0
        %v598 = vmax.f32 %v532, 0.0
        %v599 = vmax.f32 %v535, 0.0
        %v600 = vmax.f32 %v540, 0.0
        %v601 = vmax.f32 %v543, 0.0
        %v602 = vmax.f32 %v548, 0.0
        %v603 = vmax.f32 %v551, 0.0
        %v604 = vmax.f32 %v556, 0.0
        %v605 = vmax.f32 %v559, 0.0
        %v606 = vmax.f32 %v564, 0.0
        %v607 = vmax.f32 %v567, 0.0
        %v608 = vmax.f32 %v572, 0.0
        %v609 = vmax.f32 %v575, 0.0
        %v610 = vmin.f32 %v578, 6.0
        %v611 = vmin.f32 %v579, 6.0
        %v612 = vmin.f32 %v580, 6.0
        %v613 = vmin.f32 %v581, 6.0
        %v614 = vmin.f32 %v582, 6.0
        %v615 = vmin.f32 %v583, 6.0
        %v616 = vmin.f32 %v584, 6.0
        %v617 = vmin.f32 %v585, 6.0
        %v618 = vmin.f32 %v586, 6.0
        %v619 = vmin.f32 %v587, 6.0
        %v620 = vmin.f32 %v588, 6.0
        %v621 = vmin.f32 %v589, 6.0
        %v622 = vmin.f32 %v590, 6.0
        %v623 = vmin.f32 %v591, 6.0
        %v624 = vmin.f32 %v592, 6.0
        %v625 = vmin.f32 %v593, 6.0
        %v626 = vmin.f32 %v594, 6.0
        %v627 = vmin.f32 %v595, 6.0
        %v628 = vmin.f32 %v596, 6.0
        %v629 = vmin.f32 %v597, 6.0
        %v630 = vmin.f32 %v598, 6.0
        %v631 = vmin.f32 %v599, 6.0
        %v632 = vmin.f32 %v600, 6.0
        %v633 = vmin.f32 %v601, 6.0
        %v634 = vmin.f32 %v602, 6.0
        %v635 = vmin.f32 %v603, 6.0
        %v636 = vmin.f32 %v604, 6.0
        %v637 = vmin.f32 %v605, 6.0
        %v638 = vmin.f32 %v606, 6.0
        %v639 = vmin.f32 %v607, 6.0
        %v640 = vmin.f32 %v608, 6.0
        %v641 = vmin.f32 %v609, 6.0
        %vm642 = vcmask 130048
        %643 = vst.msk [vmem:[#allocation2] sm:$0xff] %vm642, 0.0
        %644 = vst.msk [vmem:[#allocation2 + $0x8] sm:$0xff] %vm642, 0.0
        %vm645 = vcmask 123904
        %646 = vst.msk [vmem:[#allocation2 + $0x10] sm:$0x3] %vm645, 0.0
        %s647 = scalar_lea.vmem [#allocation2], 408
        %648 = vst.msk [vmem:[%s647] sm:$0xff] %vm642, 0.0
        %649 = vst.msk [vmem:[%s647 + $0x8] sm:$0xff] %vm642, 0.0
        %650 = vst.msk [vmem:[%s647 + $0x10] sm:$0x3] %vm645, 0.0
        %s651 = scalar_lea.vmem [#allocation2], 24
        %vm652 = vcmask 122880
        %653 = vst.msk [vmem:[%s651] sm:$0x1] %vm652, 0.0
        %654 = vst.msk [vmem:[%s651 + $0x18] sm:$0x1] %vm652, 0.0
        %655 = vst.msk [vmem:[%s651 + $0x30] sm:$0x1] %vm652, 0.0
        %656 = vst.msk [vmem:[%s651 + $0x48] sm:$0x1] %vm652, 0.0
        %657 = vst.msk [vmem:[%s651 + $0x60] sm:$0x1] %vm652, 0.0
        %658 = vst.msk [vmem:[%s651 + $0x78] sm:$0x1] %vm652, 0.0
        %659 = vst.msk [vmem:[%s651 + $0x90] sm:$0x1] %vm652, 0.0
        %660 = vst.msk [vmem:[%s651 + $0xa8] sm:$0x1] %vm652, 0.0
        %661 = vst.msk [vmem:[%s651 + $0xc0] sm:$0x1] %vm652, 0.0
        %662 = vst.msk [vmem:[%s651 + $0xd8] sm:$0x1] %vm652, 0.0
        %663 = vst.msk [vmem:[%s651 + $0xf0] sm:$0x1] %vm652, 0.0
        %664 = vst.msk [vmem:[%s651 + $0x108] sm:$0x1] %vm652, 0.0
        %665 = vst.msk [vmem:[%s651 + $0x120] sm:$0x1] %vm652, 0.0
        %666 = vst.msk [vmem:[%s651 + $0x138] sm:$0x1] %vm652, 0.0
        %667 = vst.msk [vmem:[%s651 + $0x150] sm:$0x1] %vm652, 0.0
        %668 = vst.msk [vmem:[%s651 + $0x168] sm:$0x1] %vm652, 0.0
        %669 = vst.msk [vmem:[%s651 + $0x11] sm:$0x1] %vm652, 0.0
        %670 = vst.msk [vmem:[%s651 + $0x29] sm:$0x1] %vm652, 0.0
        %671 = vst.msk [vmem:[%s651 + $0x41] sm:$0x1] %vm652, 0.0
        %672 = vst.msk [vmem:[%s651 + $0x59] sm:$0x1] %vm652, 0.0
        %673 = vst.msk [vmem:[%s651 + $0x71] sm:$0x1] %vm652, 0.0
        %674 = vst.msk [vmem:[%s651 + $0x89] sm:$0x1] %vm652, 0.0
        %675 = vst.msk [vmem:[%s651 + $0xa1] sm:$0x1] %vm652, 0.0
        %676 = vst.msk [vmem:[%s651 + $0xb9] sm:$0x1] %vm652, 0.0
        %677 = vst.msk [vmem:[%s651 + $0xd1] sm:$0x1] %vm652, 0.0
        %678 = vst.msk [vmem:[%s651 + $0xe9] sm:$0x1] %vm652, 0.0
        %679 = vst.msk [vmem:[%s651 + $0x101] sm:$0x1] %vm652, 0.0
        %680 = vst.msk [vmem:[%s651 + $0x119] sm:$0x1] %vm652, 0.0
        %681 = vst.msk [vmem:[%s651 + $0x131] sm:$0x1] %vm652, 0.0
        %682 = vst.msk [vmem:[%s651 + $0x149] sm:$0x1] %vm652, 0.0
        %683 = vst.msk [vmem:[%s651 + $0x161] sm:$0x1] %vm652, 0.0
        %684 = vst.msk [vmem:[%s651 + $0x179] sm:$0x1] %vm652, 0.0
        %685 = vst.msk [vmem:[%s651 + $0x1] sm:$0xff] %vm642, %v610
        %686 = vst.msk [vmem:[%s651 + $0x9] sm:$0xff] %vm642, %v611
        %687 = vst.msk [vmem:[%s651 + $0x19] sm:$0xff] %vm642, %v612
        %688 = vst.msk [vmem:[%s651 + $0x21] sm:$0xff] %vm642, %v613
        %689 = vst.msk [vmem:[%s651 + $0x31] sm:$0xff] %vm642, %v614
        %690 = vst.msk [vmem:[%s651 + $0x39] sm:$0xff] %vm642, %v615
        %691 = vst.msk [vmem:[%s651 + $0x49] sm:$0xff] %vm642, %v616
        %692 = vst.msk [vmem:[%s651 + $0x51] sm:$0xff] %vm642, %v617
        %693 = vst.msk [vmem:[%s651 + $0x61] sm:$0xff] %vm642, %v618
        %694 = vst.msk [vmem:[%s651 + $0x69] sm:$0xff] %vm642, %v619
        %695 = vst.msk [vmem:[%s651 + $0x79] sm:$0xff] %vm642, %v620
        %696 = vst.msk [vmem:[%s651 + $0x81] sm:$0xff] %vm642, %v621
        %697 = vst.msk [vmem:[%s651 + $0x91] sm:$0xff] %vm642, %v622
        %698 = vst.msk [vmem:[%s651 + $0x99] sm:$0xff] %vm642, %v623
        %699 = vst.msk [vmem:[%s651 + $0xa9] sm:$0xff] %vm642, %v624
        %700 = vst.msk [vmem:[%s651 + $0xb1] sm:$0xff] %vm642, %v625
        %701 = vst.msk [vmem:[%s651 + $0xc1] sm:$0xff] %vm642, %v626
        %702 = vst.msk [vmem:[%s651 + $0xc9] sm:$0xff] %vm642, %v627
        %703 = vst.msk [vmem:[%s651 + $0xd9] sm:$0xff] %vm642, %v628
        %704 = vst.msk [vmem:[%s651 + $0xe1] sm:$0xff] %vm642, %v629
        %705 = vst.msk [vmem:[%s651 + $0xf1] sm:$0xff] %vm642, %v630
        %706 = vst.msk [vmem:[%s651 + $0xf9] sm:$0xff] %vm642, %v631
        %707 = vst.msk [vmem:[%s651 + $0x109] sm:$0xff] %vm642, %v632
        %708 = vst.msk [vmem:[%s651 + $0x111] sm:$0xff] %vm642, %v633
        %709 = vst.msk [vmem:[%s651 + $0x121] sm:$0xff] %vm642, %v634
        %710 = vst.msk [vmem:[%s651 + $0x129] sm:$0xff] %vm642, %v635
        %711 = vst.msk [vmem:[%s651 + $0x139] sm:$0xff] %vm642, %v636
        %712 = vst.msk [vmem:[%s651 + $0x141] sm:$0xff] %vm642, %v637
        %713 = vst.msk [vmem:[%s651 + $0x151] sm:$0xff] %vm642, %v638
        %714 = vst.msk [vmem:[%s651 + $0x159] sm:$0xff] %vm642, %v639
        %715 = vst.msk [vmem:[%s651 + $0x169] sm:$0xff] %vm642, %v640
        %716 = vst.msk [vmem:[%s651 + $0x171] sm:$0xff] %vm642, %v641
        %v717 = vld [vmem:[%s3] sm:$0xff]
        %v718 = vld [vmem:[%s3 + $0x8] sm:$0x1]
        %v719 = vld [vmem:[#allocation2] sm:$0xff]
        %v720 = vld [vmem:[#allocation2 + $0x8] sm:$0xff]
        %v721 = vld [vmem:[#allocation2 + $0x18] sm:$0xff]
        %v722 = vld [vmem:[#allocation2 + $0x20] sm:$0xff]
        %v723 = vld [vmem:[#allocation2 + $0x30] sm:$0xff]
        %v724 = vld [vmem:[#allocation2 + $0x38] sm:$0xff]
        %v725 = vld [vmem:[#allocation2 + $0x48] sm:$0xff]
        %v726 = vld [vmem:[#allocation2 + $0x50] sm:$0xff]
        %v727 = vld [vmem:[#allocation2 + $0x60] sm:$0xff]
        %v728 = vld [vmem:[#allocation2 + $0x68] sm:$0xff]
        %v729 = vld [vmem:[#allocation2 + $0x78] sm:$0xff]
        %v730 = vld [vmem:[#allocation2 + $0x80] sm:$0xff]
        %v731 = vld [vmem:[#allocation2 + $0x90] sm:$0xff]
        %v732 = vld [vmem:[#allocation2 + $0x98] sm:$0xff]
        %v733 = vld [vmem:[#allocation2 + $0xa8] sm:$0xff]
        %v734 = vld [vmem:[#allocation2 + $0xb0] sm:$0xff]
        %v735 = vld [vmem:[#allocation2 + $0xc0] sm:$0xff]
        %v736 = vld [vmem:[#allocation2 + $0xc8] sm:$0xff]
        %v737 = vld [vmem:[#allocation2 + $0xd8] sm:$0xff]
        %v738 = vld [vmem:[#allocation2 + $0xe0] sm:$0xff]
        %v739 = vld [vmem:[#allocation2 + $0xf0] sm:$0xff]
        %v740 = vld [vmem:[#allocation2 + $0xf8] sm:$0xff]
        %v741 = vld [vmem:[#allocation2 + $0x108] sm:$0xff]
        %v742 = vld [vmem:[#allocation2 + $0x110] sm:$0xff]
        %v743 = vld [vmem:[#allocation2 + $0x120] sm:$0xff]
        %v744 = vld [vmem:[#allocation2 + $0x128] sm:$0xff]
        %v745 = vld [vmem:[#allocation2 + $0x138] sm:$0xff]
        %v746 = vld [vmem:[#allocation2 + $0x140] sm:$0xff]
        %v747 = vld [vmem:[#allocation2 + $0x150] sm:$0xff]
        %v748 = vld [vmem:[#allocation2 + $0x158] sm:$0xff]
        %v749 = vld [vmem:[#allocation2 + $0x168] sm:$0xff]
        %v750 = vld [vmem:[#allocation2 + $0x170] sm:$0xff]
        %v751 = vlaneseq
        %v752 = vshrl.u32 %v751, 7
        %v753 = vsub.s32 0, %v752
        %v754 = vrot.slane %v717, %v753
        %v755 = vmul.f32 %v719, %v754
        %v756 = vmul.f32 %v720, %v754
        %v757 = vmul.f32 %v721, %v754
        %v758 = vmul.f32 %v722, %v754
        %v759 = vmul.f32 %v723, %v754
        %v760 = vmul.f32 %v724, %v754
        %v761 = vmul.f32 %v725, %v754
        %v762 = vmul.f32 %v726, %v754
        %v763 = vmul.f32 %v727, %v754
        %v764 = vmul.f32 %v728, %v754
        %v765 = vmul.f32 %v729, %v754
        %v766 = vmul.f32 %v730, %v754
        %v767 = vmul.f32 %v731, %v754
        %v768 = vmul.f32 %v732, %v754
        %v769 = vmul.f32 %v733, %v754
        %v770 = vmul.f32 %v734, %v754
        %v771 = vmul.f32 %v735, %v754
        %v772 = vmul.f32 %v736, %v754
        %v773 = vmul.f32 %v737, %v754
        %v774 = vmul.f32 %v738, %v754
        %v775 = vmul.f32 %v739, %v754
        %v776 = vmul.f32 %v740, %v754
        %v777 = vmul.f32 %v741, %v754
        %v778 = vmul.f32 %v742, %v754
        %v779 = vmul.f32 %v743, %v754
        %v780 = vmul.f32 %v744, %v754
        %v781 = vmul.f32 %v745, %v754
        %v782 = vmul.f32 %v746, %v754
        %v783 = vmul.f32 %v747, %v754
        %v784 = vmul.f32 %v748, %v754
        %v785 = vmul.f32 %v749, %v754
        %v786 = vmul.f32 %v750, %v754
        %v787 = vld [vmem:[#allocation2 + $0x1] sm:$0xff]
        %v788 = vld [vmem:[#allocation2 + $0x9] sm:$0xff]
        %v789 = vld [vmem:[#allocation2 + $0x19] sm:$0xff]
        %v790 = vld [vmem:[#allocation2 + $0x21] sm:$0xff]
        %v791 = vld [vmem:[#allocation2 + $0x31] sm:$0xff]
        %v792 = vld [vmem:[#allocation2 + $0x39] sm:$0xff]
        %v793 = vld [vmem:[#allocation2 + $0x49] sm:$0xff]
        %v794 = vld [vmem:[#allocation2 + $0x51] sm:$0xff]
        %v795 = vld [vmem:[#allocation2 + $0x61] sm:$0xff]
        %v796 = vld [vmem:[#allocation2 + $0x69] sm:$0xff]
        %v797 = vld [vmem:[#allocation2 + $0x79] sm:$0xff]
        %v798 = vld [vmem:[#allocation2 + $0x81] sm:$0xff]
        %v799 = vld [vmem:[#allocation2 + $0x91] sm:$0xff]
        %v800 = vld [vmem:[#allocation2 + $0x99] sm:$0xff]
        %v801 = vld [vmem:[#allocation2 + $0xa9] sm:$0xff]
        %v802 = vld [vmem:[#allocation2 + $0xb1] sm:$0xff]
        %v803 = vld [vmem:[#allocation2 + $0xc1] sm:$0xff]
        %v804 = vld [vmem:[#allocation2 + $0xc9] sm:$0xff]
        %v805 = vld [vmem:[#allocation2 + $0xd9] sm:$0xff]
        %v806 = vld [vmem:[#allocation2 + $0xe1] sm:$0xff]
        %v807 = vld [vmem:[#allocation2 + $0xf1] sm:$0xff]
        %v808 = vld [vmem:[#allocation2 + $0xf9] sm:$0xff]
        %v809 = vld [vmem:[#allocation2 + $0x109] sm:$0xff]
        %v810 = vld [vmem:[#allocation2 + $0x111] sm:$0xff]
        %v811 = vld [vmem:[#allocation2 + $0x121] sm:$0xff]
        %v812 = vld [vmem:[#allocation2 + $0x129] sm:$0xff]
        %v813 = vld [vmem:[#allocation2 + $0x139] sm:$0xff]
        %v814 = vld [vmem:[#allocation2 + $0x141] sm:$0xff]
        %v815 = vld [vmem:[#allocation2 + $0x151] sm:$0xff]
        %v816 = vld [vmem:[#allocation2 + $0x159] sm:$0xff]
        %v817 = vld [vmem:[#allocation2 + $0x169] sm:$0xff]
        %v818 = vld [vmem:[#allocation2 + $0x171] sm:$0xff]
        %v819 = vlaneseq
        %v820 = vshrl.u32 %v819, 7
        %v821 = vsub.s32 1, %v820
        %v822 = vrot.slane %v717, %v821
        %v823 = vmul.f32 %v787, %v822
        %v824 = vmul.f32 %v788, %v822
        %v825 = vmul.f32 %v789, %v822
        %v826 = vmul.f32 %v790, %v822
        %v827 = vmul.f32 %v791, %v822
        %v828 = vmul.f32 %v792, %v822
        %v829 = vmul.f32 %v793, %v822
        %v830 = vmul.f32 %v794, %v822
        %v831 = vmul.f32 %v795, %v822
        %v832 = vmul.f32 %v796, %v822
        %v833 = vmul.f32 %v797, %v822
        %v834 = vmul.f32 %v798, %v822
        %v835 = vmul.f32 %v799, %v822
        %v836 = vmul.f32 %v800, %v822
        %v837 = vmul.f32 %v801, %v822
        %v838 = vmul.f32 %v802, %v822
        %v839 = vmul.f32 %v803, %v822
        %v840 = vmul.f32 %v804, %v822
        %v841 = vmul.f32 %v805, %v822
        %v842 = vmul.f32 %v806, %v822
        %v843 = vmul.f32 %v807, %v822
        %v844 = vmul.f32 %v808, %v822
        %v845 = vmul.f32 %v809, %v822
        %v846 = vmul.f32 %v810, %v822
        %v847 = vmul.f32 %v811, %v822
        %v848 = vmul.f32 %v812, %v822
        %v849 = vmul.f32 %v813, %v822
        %v850 = vmul.f32 %v814, %v822
        %v851 = vmul.f32 %v815, %v822
        %v852 = vmul.f32 %v816, %v822
        %v853 = vmul.f32 %v817, %v822
        %v854 = vmul.f32 %v818, %v822
        %v855 = vadd.f32 %v755, %v823
        %v856 = vadd.f32 %v756, %v824
        %v857 = vadd.f32 %v757, %v825
        %v858 = vadd.f32 %v758, %v826
        %v859 = vadd.f32 %v759, %v827
        %v860 = vadd.f32 %v760, %v828
        %v861 = vadd.f32 %v761, %v829
        %v862 = vadd.f32 %v762, %v830
        %v863 = vadd.f32 %v763, %v831
        %v864 = vadd.f32 %v764, %v832
        %v865 = vadd.f32 %v765, %v833
        %v866 = vadd.f32 %v766, %v834
        %v867 = vadd.f32 %v767, %v835
        %v868 = vadd.f32 %v768, %v836
        %v869 = vadd.f32 %v769, %v837
        %v870 = vadd.f32 %v770, %v838
        %v871 = vadd.f32 %v771, %v839
        %v872 = vadd.f32 %v772, %v840
        %v873 = vadd.f32 %v773, %v841
        %v874 = vadd.f32 %v774, %v842
        %v875 = vadd.f32 %v775, %v843
        %v876 = vadd.f32 %v776, %v844
        %v877 = vadd.f32 %v777, %v845
        %v878 = vadd.f32 %v778, %v846
        %v879 = vadd.f32 %v779, %v847
        %v880 = vadd.f32 %v780, %v848
        %v881 = vadd.f32 %v781, %v849
        %v882 = vadd.f32 %v782, %v850
        %v883 = vadd.f32 %v783, %v851
        %v884 = vadd.f32 %v784, %v852
        %v885 = vadd.f32 %v785, %v853
        %v886 = vadd.f32 %v786, %v854
        %v887 = vld [vmem:[#allocation2 + $0x2] sm:$0xff]
        %v888 = vld [vmem:[#allocation2 + $0xa] sm:$0xff]
        %v889 = vld [vmem:[#allocation2 + $0x1a] sm:$0xff]
        %v890 = vld [vmem:[#allocation2 + $0x22] sm:$0xff]
        %v891 = vld [vmem:[#allocation2 + $0x32] sm:$0xff]
        %v892 = vld [vmem:[#allocation2 + $0x3a] sm:$0xff]
        %v893 = vld [vmem:[#allocation2 + $0x4a] sm:$0xff]
        %v894 = vld [vmem:[#allocation2 + $0x52] sm:$0xff]
        %v895 = vld [vmem:[#allocation2 + $0x62] sm:$0xff]
        %v896 = vld [vmem:[#allocation2 + $0x6a] sm:$0xff]
        %v897 = vld [vmem:[#allocation2 + $0x7a] sm:$0xff]
        %v898 = vld [vmem:[#allocation2 + $0x82] sm:$0xff]
        %v899 = vld [vmem:[#allocation2 + $0x92] sm:$0xff]
        %v900 = vld [vmem:[#allocation2 + $0x9a] sm:$0xff]
        %v901 = vld [vmem:[#allocation2 + $0xaa] sm:$0xff]
        %v902 = vld [vmem:[#allocation2 + $0xb2] sm:$0xff]
        %v903 = vld [vmem:[#allocation2 + $0xc2] sm:$0xff]
        %v904 = vld [vmem:[#allocation2 + $0xca] sm:$0xff]
        %v905 = vld [vmem:[#allocation2 + $0xda] sm:$0xff]
        %v906 = vld [vmem:[#allocation2 + $0xe2] sm:$0xff]
        %v907 = vld [vmem:[#allocation2 + $0xf2] sm:$0xff]
        %v908 = vld [vmem:[#allocation2 + $0xfa] sm:$0xff]
        %v909 = vld [vmem:[#allocation2 + $0x10a] sm:$0xff]
        %v910 = vld [vmem:[#allocation2 + $0x112] sm:$0xff]
        %v911 = vld [vmem:[#allocation2 + $0x122] sm:$0xff]
        %v912 = vld [vmem:[#allocation2 + $0x12a] sm:$0xff]
        %v913 = vld [vmem:[#allocation2 + $0x13a] sm:$0xff]
        %v914 = vld [vmem:[#allocation2 + $0x142] sm:$0xff]
        %v915 = vld [vmem:[#allocation2 + $0x152] sm:$0xff]
        %v916 = vld [vmem:[#allocation2 + $0x15a] sm:$0xff]
        %v917 = vld [vmem:[#allocation2 + $0x16a] sm:$0xff]
        %v918 = vld [vmem:[#allocation2 + $0x172] sm:$0xff]
        %v919 = vlaneseq
        %v920 = vshrl.u32 %v919, 7
        %v921 = vsub.s32 2, %v920
        %v922 = vrot.slane %v717, %v921
        %v923 = vmul.f32 %v887, %v922
        %v924 = vmul.f32 %v888, %v922
        %v925 = vmul.f32 %v889, %v922
        %v926 = vmul.f32 %v890, %v922
        %v927 = vmul.f32 %v891, %v922
        %v928 = vmul.f32 %v892, %v922
        %v929 = vmul.f32 %v893, %v922
        %v930 = vmul.f32 %v894, %v922
        %v931 = vmul.f32 %v895, %v922
        %v932 = vmul.f32 %v896, %v922
        %v933 = vmul.f32 %v897, %v922
        %v934 = vmul.f32 %v898, %v922
        %v935 = vmul.f32 %v899, %v922
        %v936 = vmul.f32 %v900, %v922
        %v937 = vmul.f32 %v901, %v922
        %v938 = vmul.f32 %v902, %v922
        %v939 = vmul.f32 %v903, %v922
        %v940 = vmul.f32 %v904, %v922
        %v941 = vmul.f32 %v905, %v922
        %v942 = vmul.f32 %v906, %v922
        %v943 = vmul.f32 %v907, %v922
        %v944 = vmul.f32 %v908, %v922
        %v945 = vmul.f32 %v909, %v922
        %v946 = vmul.f32 %v910, %v922
        %v947 = vmul.f32 %v911, %v922
        %v948 = vmul.f32 %v912, %v922
        %v949 = vmul.f32 %v913, %v922
        %v950 = vmul.f32 %v914, %v922
        %v951 = vmul.f32 %v915, %v922
        %v952 = vmul.f32 %v916, %v922
        %v953 = vmul.f32 %v917, %v922
        %v954 = vmul.f32 %v918, %v922
        %v955 = vadd.f32 %v855, %v923
        %v956 = vadd.f32 %v856, %v924
        %v957 = vadd.f32 %v857, %v925
        %v958 = vadd.f32 %v858, %v926
        %v959 = vadd.f32 %v859, %v927
        %v960 = vadd.f32 %v860, %v928
        %v961 = vadd.f32 %v861, %v929
        %v962 = vadd.f32 %v862, %v930
        %v963 = vadd.f32 %v863, %v931
        %v964 = vadd.f32 %v864, %v932
        %v965 = vadd.f32 %v865, %v933
        %v966 = vadd.f32 %v866, %v934
        %v967 = vadd.f32 %v867, %v935
        %v968 = vadd.f32 %v868, %v936
        %v969 = vadd.f32 %v869, %v937
        %v970 = vadd.f32 %v870, %v938
        %v971 = vadd.f32 %v871, %v939
        %v972 = vadd.f32 %v872, %v940
        %v973 = vadd.f32 %v873, %v941
        %v974 = vadd.f32 %v874, %v942
        %v975 = vadd.f32 %v875, %v943
        %v976 = vadd.f32 %v876, %v944
        %v977 = vadd.f32 %v877, %v945
        %v978 = vadd.f32 %v878, %v946
        %v979 = vadd.f32 %v879, %v947
        %v980 = vadd.f32 %v880, %v948
        %v981 = vadd.f32 %v881, %v949
        %v982 = vadd.f32 %v882, %v950
        %v983 = vadd.f32 %v883, %v951
        %v984 = vadd.f32 %v884, %v952
        %v985 = vadd.f32 %v885, %v953
        %v986 = vadd.f32 %v886, %v954
        %v987 = vld [vmem:[%s651] sm:$0xff]
        %v988 = vld [vmem:[%s651 + $0x8] sm:$0xff]
        %v989 = vld [vmem:[%s651 + $0x18] sm:$0xff]
        %v990 = vld [vmem:[%s651 + $0x20] sm:$0xff]
        %v991 = vld [vmem:[%s651 + $0x30] sm:$0xff]
        %v992 = vld [vmem:[%s651 + $0x38] sm:$0xff]
        %v993 = vld [vmem:[%s651 + $0x48] sm:$0xff]
        %v994 = vld [vmem:[%s651 + $0x50] sm:$0xff]
        %v995 = vld [vmem:[%s651 + $0x60] sm:$0xff]
        %v996 = vld [vmem:[%s651 + $0x68] sm:$0xff]
        %v997 = vld [vmem:[%s651 + $0x78] sm:$0xff]
        %v998 = vld [vmem:[%s651 + $0x80] sm:$0xff]
        %v999 = vld [vmem:[%s651 + $0x90] sm:$0xff]
        %v1000 = vld [vmem:[%s651 + $0x98] sm:$0xff]
        %v1001 = vld [vmem:[%s651 + $0xa8] sm:$0xff]
        %v1002 = vld [vmem:[%s651 + $0xb0] sm:$0xff]
        %v1003 = vld [vmem:[%s651 + $0xc0] sm:$0xff]
        %v1004 = vld [vmem:[%s651 + $0xc8] sm:$0xff]
        %v1005 = vld [vmem:[%s651 + $0xd8] sm:$0xff]
        %v1006 = vld [vmem:[%s651 + $0xe0] sm:$0xff]
        %v1007 = vld [vmem:[%s651 + $0xf0] sm:$0xff]
        %v1008 = vld [vmem:[%s651 + $0xf8] sm:$0xff]
        %v1009 = vld [vmem:[%s651 + $0x108] sm:$0xff]
        %v1010 = vld [vmem:[%s651 + $0x110] sm:$0xff]
        %v1011 = vld [vmem:[%s651 + $0x120] sm:$0xff]
        %v1012 = vld [vmem:[%s651 + $0x128] sm:$0xff]
        %v1013 = vld [vmem:[%s651 + $0x138] sm:$0xff]
        %v1014 = vld [vmem:[%s651 + $0x140] sm:$0xff]
        %v1015 = vld [vmem:[%s651 + $0x150] sm:$0xff]
        %v1016 = vld [vmem:[%s651 + $0x158] sm:$0xff]
        %v1017 = vld [vmem:[%s651 + $0x168] sm:$0xff]
        %v1018 = vld [vmem:[%s651 + $0x170] sm:$0xff]
        %v1019 = vlaneseq
        %v1020 = vshrl.u32 %v1019, 7
        %v1021 = vsub.s32 3, %v1020
        %v1022 = vrot.slane %v717, %v1021
        %v1023 = vmul.f32 %v987, %v1022
        %v1024 = vmul.f32 %v988, %v1022
        %v1025 = vmul.f32 %v989, %v1022
        %v1026 = vmul.f32 %v990, %v1022
        %v1027 = vmul.f32 %v991, %v1022
        %v1028 = vmul.f32 %v992, %v1022
        %v1029 = vmul.f32 %v993, %v1022
        %v1030 = vmul.f32 %v994, %v1022
        %v1031 = vmul.f32 %v995, %v1022
        %v1032 = vmul.f32 %v996, %v1022
        %v1033 = vmul.f32 %v997, %v1022
        %v1034 = vmul.f32 %v998, %v1022
        %v1035 = vmul.f32 %v999, %v1022
        %v1036 = vmul.f32 %v1000, %v1022
        %v1037 = vmul.f32 %v1001, %v1022
        %v1038 = vmul.f32 %v1002, %v1022
        %v1039 = vmul.f32 %v1003, %v1022
        %v1040 = vmul.f32 %v1004, %v1022
        %v1041 = vmul.f32 %v1005, %v1022
        %v1042 = vmul.f32 %v1006, %v1022
        %v1043 = vmul.f32 %v1007, %v1022
        %v1044 = vmul.f32 %v1008, %v1022
        %v1045 = vmul.f32 %v1009, %v1022
        %v1046 = vmul.f32 %v1010, %v1022
        %v1047 = vmul.f32 %v1011, %v1022
        %v1048 = vmul.f32 %v1012, %v1022
        %v1049 = vmul.f32 %v1013, %v1022
        %v1050 = vmul.f32 %v1014, %v1022
        %v1051 = vmul.f32 %v1015, %v1022
        %v1052 = vmul.f32 %v1016, %v1022
        %v1053 = vmul.f32 %v1017, %v1022
        %v1054 = vmul.f32 %v1018, %v1022
        %v1055 = vadd.f32 %v955, %v1023
        %v1056 = vadd.f32 %v956, %v1024
        %v1057 = vadd.f32 %v957, %v1025
        %v1058 = vadd.f32 %v958, %v1026
        %v1059 = vadd.f32 %v959, %v1027
        %v1060 = vadd.f32 %v960, %v1028
        %v1061 = vadd.f32 %v961, %v1029
        %v1062 = vadd.f32 %v962, %v1030
        %v1063 = vadd.f32 %v963, %v1031
        %v1064 = vadd.f32 %v964, %v1032
        %v1065 = vadd.f32 %v965, %v1033
        %v1066 = vadd.f32 %v966, %v1034
        %v1067 = vadd.f32 %v967, %v1035
        %v1068 = vadd.f32 %v968, %v1036
        %v1069 = vadd.f32 %v969, %v1037
        %v1070 = vadd.f32 %v970, %v1038
        %v1071 = vadd.f32 %v971, %v1039
        %v1072 = vadd.f32 %v972, %v1040
        %v1073 = vadd.f32 %v973, %v1041
        %v1074 = vadd.f32 %v974, %v1042
        %v1075 = vadd.f32 %v975, %v1043
        %v1076 = vadd.f32 %v976, %v1044
        %v1077 = vadd.f32 %v977, %v1045
        %v1078 = vadd.f32 %v978, %v1046
        %v1079 = vadd.f32 %v979, %v1047
        %v1080 = vadd.f32 %v980, %v1048
        %v1081 = vadd.f32 %v981, %v1049
        %v1082 = vadd.f32 %v982, %v1050
        %v1083 = vadd.f32 %v983, %v1051
        %v1084 = vadd.f32 %v984, %v1052
        %v1085 = vadd.f32 %v985, %v1053
        %v1086 = vadd.f32 %v986, %v1054
        %v1087 = vld [vmem:[%s651 + $0x1] sm:$0xff]
        %v1088 = vld [vmem:[%s651 + $0x9] sm:$0xff]
        %v1089 = vld [vmem:[%s651 + $0x19] sm:$0xff]
        %v1090 = vld [vmem:[%s651 + $0x21] sm:$0xff]
        %v1091 = vld [vmem:[%s651 + $0x31] sm:$0xff]
        %v1092 = vld [vmem:[%s651 + $0x39] sm:$0xff]
        %v1093 = vld [vmem:[%s651 + $0x49] sm:$0xff]
        %v1094 = vld [vmem:[%s651 + $0x51] sm:$0xff]
        %v1095 = vld [vmem:[%s651 + $0x61] sm:$0xff]
        %v1096 = vld [vmem:[%s651 + $0x69] sm:$0xff]
        %v1097 = vld [vmem:[%s651 + $0x79] sm:$0xff]
        %v1098 = vld [vmem:[%s651 + $0x81] sm:$0xff]
        %v1099 = vld [vmem:[%s651 + $0x91] sm:$0xff]
        %v1100 = vld [vmem:[%s651 + $0x99] sm:$0xff]
        %v1101 = vld [vmem:[%s651 + $0xa9] sm:$0xff]
        %v1102 = vld [vmem:[%s651 + $0xb1] sm:$0xff]
        %v1103 = vld [vmem:[%s651 + $0xc1] sm:$0xff]
        %v1104 = vld [vmem:[%s651 + $0xc9] sm:$0xff]
        %v1105 = vld [vmem:[%s651 + $0xd9] sm:$0xff]
        %v1106 = vld [vmem:[%s651 + $0xe1] sm:$0xff]
        %v1107 = vld [vmem:[%s651 + $0xf1] sm:$0xff]
        %v1108 = vld [vmem:[%s651 + $0xf9] sm:$0xff]
        %v1109 = vld [vmem:[%s651 + $0x109] sm:$0xff]
        %v1110 = vld [vmem:[%s651 + $0x111] sm:$0xff]
        %v1111 = vld [vmem:[%s651 + $0x121] sm:$0xff]
        %v1112 = vld [vmem:[%s651 + $0x129] sm:$0xff]
        %v1113 = vld [vmem:[%s651 + $0x139] sm:$0xff]
        %v1114 = vld [vmem:[%s651 + $0x141] sm:$0xff]
        %v1115 = vld [vmem:[%s651 + $0x151] sm:$0xff]
        %v1116 = vld [vmem:[%s651 + $0x159] sm:$0xff]
        %v1117 = vld [vmem:[%s651 + $0x169] sm:$0xff]
        %v1118 = vld [vmem:[%s651 + $0x171] sm:$0xff]
        %v1119 = vlaneseq
        %v1120 = vshrl.u32 %v1119, 7
        %v1121 = vsub.s32 4, %v1120
        %v1122 = vrot.slane %v717, %v1121
        %v1123 = vmul.f32 %v1087, %v1122
        %v1124 = vmul.f32 %v1088, %v1122
        %v1125 = vmul.f32 %v1089, %v1122
        %v1126 = vmul.f32 %v1090, %v1122
        %v1127 = vmul.f32 %v1091, %v1122
        %v1128 = vmul.f32 %v1092, %v1122
        %v1129 = vmul.f32 %v1093, %v1122
        %v1130 = vmul.f32 %v1094, %v1122
        %v1131 = vmul.f32 %v1095, %v1122
        %v1132 = vmul.f32 %v1096, %v1122
        %v1133 = vmul.f32 %v1097, %v1122
        %v1134 = vmul.f32 %v1098, %v1122
        %v1135 = vmul.f32 %v1099, %v1122
        %v1136 = vmul.f32 %v1100, %v1122
        %v1137 = vmul.f32 %v1101, %v1122
        %v1138 = vmul.f32 %v1102, %v1122
        %v1139 = vmul.f32 %v1103, %v1122
        %v1140 = vmul.f32 %v1104, %v1122
        %v1141 = vmul.f32 %v1105, %v1122
        %v1142 = vmul.f32 %v1106, %v1122
        %v1143 = vmul.f32 %v1107, %v1122
        %v1144 = vmul.f32 %v1108, %v1122
        %v1145 = vmul.f32 %v1109, %v1122
        %v1146 = vmul.f32 %v1110, %v1122
        %v1147 = vmul.f32 %v1111, %v1122
        %v1148 = vmul.f32 %v1112, %v1122
        %v1149 = vmul.f32 %v1113, %v1122
        %v1150 = vmul.f32 %v1114, %v1122
        %v1151 = vmul.f32 %v1115, %v1122
        %v1152 = vmul.f32 %v1116, %v1122
        %v1153 = vmul.f32 %v1117, %v1122
        %v1154 = vmul.f32 %v1118, %v1122
        %v1155 = vadd.f32 %v1055, %v1123
        %v1156 = vadd.f32 %v1056, %v1124
        %v1157 = vadd.f32 %v1057, %v1125
        %v1158 = vadd.f32 %v1058, %v1126
        %v1159 = vadd.f32 %v1059, %v1127
        %v1160 = vadd.f32 %v1060, %v1128
        %v1161 = vadd.f32 %v1061, %v1129
        %v1162 = vadd.f32 %v1062, %v1130
        %v1163 = vadd.f32 %v1063, %v1131
        %v1164 = vadd.f32 %v1064, %v1132
        %v1165 = vadd.f32 %v1065, %v1133
        %v1166 = vadd.f32 %v1066, %v1134
        %v1167 = vadd.f32 %v1067, %v1135
        %v1168 = vadd.f32 %v1068, %v1136
        %v1169 = vadd.f32 %v1069, %v1137
        %v1170 = vadd.f32 %v1070, %v1138
        %v1171 = vadd.f32 %v1071, %v1139
        %v1172 = vadd.f32 %v1072, %v1140
        %v1173 = vadd.f32 %v1073, %v1141
        %v1174 = vadd.f32 %v1074, %v1142
        %v1175 = vadd.f32 %v1075, %v1143
        %v1176 = vadd.f32 %v1076, %v1144
        %v1177 = vadd.f32 %v1077, %v1145
        %v1178 = vadd.f32 %v1078, %v1146
        %v1179 = vadd.f32 %v1079, %v1147
        %v1180 = vadd.f32 %v1080, %v1148
        %v1181 = vadd.f32 %v1081, %v1149
        %v1182 = vadd.f32 %v1082, %v1150
        %v1183 = vadd.f32 %v1083, %v1151
        %v1184 = vadd.f32 %v1084, %v1152
        %v1185 = vadd.f32 %v1085, %v1153
        %v1186 = vadd.f32 %v1086, %v1154
        %v1187 = vld [vmem:[%s651 + $0x2] sm:$0xff]
        %v1188 = vld [vmem:[%s651 + $0xa] sm:$0xff]
        %v1189 = vld [vmem:[%s651 + $0x1a] sm:$0xff]
        %v1190 = vld [vmem:[%s651 + $0x22] sm:$0xff]
        %v1191 = vld [vmem:[%s651 + $0x32] sm:$0xff]
        %v1192 = vld [vmem:[%s651 + $0x3a] sm:$0xff]
        %v1193 = vld [vmem:[%s651 + $0x4a] sm:$0xff]
        %v1194 = vld [vmem:[%s651 + $0x52] sm:$0xff]
        %v1195 = vld [vmem:[%s651 + $0x62] sm:$0xff]
        %v1196 = vld [vmem:[%s651 + $0x6a] sm:$0xff]
        %v1197 = vld [vmem:[%s651 + $0x7a] sm:$0xff]
        %v1198 = vld [vmem:[%s651 + $0x82] sm:$0xff]
        %v1199 = vld [vmem:[%s651 + $0x92] sm:$0xff]
        %v1200 = vld [vmem:[%s651 + $0x9a] sm:$0xff]
        %v1201 = vld [vmem:[%s651 + $0xaa] sm:$0xff]
        %v1202 = vld [vmem:[%s651 + $0xb2] sm:$0xff]
        %v1203 = vld [vmem:[%s651 + $0xc2] sm:$0xff]
        %v1204 = vld [vmem:[%s651 + $0xca] sm:$0xff]
        %v1205 = vld [vmem:[%s651 + $0xda] sm:$0xff]
        %v1206 = vld [vmem:[%s651 + $0xe2] sm:$0xff]
        %v1207 = vld [vmem:[%s651 + $0xf2] sm:$0xff]
        %v1208 = vld [vmem:[%s651 + $0xfa] sm:$0xff]
        %v1209 = vld [vmem:[%s651 + $0x10a] sm:$0xff]
        %v1210 = vld [vmem:[%s651 + $0x112] sm:$0xff]
        %v1211 = vld [vmem:[%s651 + $0x122] sm:$0xff]
        %v1212 = vld [vmem:[%s651 + $0x12a] sm:$0xff]
        %v1213 = vld [vmem:[%s651 + $0x13a] sm:$0xff]
        %v1214 = vld [vmem:[%s651 + $0x142] sm:$0xff]
        %v1215 = vld [vmem:[%s651 + $0x152] sm:$0xff]
        %v1216 = vld [vmem:[%s651 + $0x15a] sm:$0xff]
        %v1217 = vld [vmem:[%s651 + $0x16a] sm:$0xff]
        %v1218 = vld [vmem:[%s651 + $0x172] sm:$0xff]
        %v1219 = vlaneseq
        %v1220 = vshrl.u32 %v1219, 7
        %v1221 = vsub.s32 5, %v1220
        %v1222 = vrot.slane %v717, %v1221
        %v1223 = vmul.f32 %v1187, %v1222
        %v1224 = vmul.f32 %v1188, %v1222
        %v1225 = vmul.f32 %v1189, %v1222
        %v1226 = vmul.f32 %v1190, %v1222
        %v1227 = vmul.f32 %v1191, %v1222
        %v1228 = vmul.f32 %v1192, %v1222
        %v1229 = vmul.f32 %v1193, %v1222
        %v1230 = vmul.f32 %v1194, %v1222
        %v1231 = vmul.f32 %v1195, %v1222
        %v1232 = vmul.f32 %v1196, %v1222
        %v1233 = vmul.f32 %v1197, %v1222
        %v1234 = vmul.f32 %v1198, %v1222
        %v1235 = vmul.f32 %v1199, %v1222
        %v1236 = vmul.f32 %v1200, %v1222
        %v1237 = vmul.f32 %v1201, %v1222
        %v1238 = vmul.f32 %v1202, %v1222
        %v1239 = vmul.f32 %v1203, %v1222
        %v1240 = vmul.f32 %v1204, %v1222
        %v1241 = vmul.f32 %v1205, %v1222
        %v1242 = vmul.f32 %v1206, %v1222
        %v1243 = vmul.f32 %v1207, %v1222
        %v1244 = vmul.f32 %v1208, %v1222
        %v1245 = vmul.f32 %v1209, %v1222
        %v1246 = vmul.f32 %v1210, %v1222
        %v1247 = vmul.f32 %v1211, %v1222
        %v1248 = vmul.f32 %v1212, %v1222
        %v1249 = vmul.f32 %v1213, %v1222
        %v1250 = vmul.f32 %v1214, %v1222
        %v1251 = vmul.f32 %v1215, %v1222
        %v1252 = vmul.f32 %v1216, %v1222
        %v1253 = vmul.f32 %v1217, %v1222
        %v1254 = vmul.f32 %v1218, %v1222
        %v1255 = vadd.f32 %v1155, %v1223
        %v1256 = vadd.f32 %v1156, %v1224
        %v1257 = vadd.f32 %v1157, %v1225
        %v1258 = vadd.f32 %v1158, %v1226
        %v1259 = vadd.f32 %v1159, %v1227
        %v1260 = vadd.f32 %v1160, %v1228
        %v1261 = vadd.f32 %v1161, %v1229
        %v1262 = vadd.f32 %v1162, %v1230
        %v1263 = vadd.f32 %v1163, %v1231
        %v1264 = vadd.f32 %v1164, %v1232
        %v1265 = vadd.f32 %v1165, %v1233
        %v1266 = vadd.f32 %v1166, %v1234
        %v1267 = vadd.f32 %v1167, %v1235
        %v1268 = vadd.f32 %v1168, %v1236
        %v1269 = vadd.f32 %v1169, %v1237
        %v1270 = vadd.f32 %v1170, %v1238
        %v1271 = vadd.f32 %v1171, %v1239
        %v1272 = vadd.f32 %v1172, %v1240
        %v1273 = vadd.f32 %v1173, %v1241
        %v1274 = vadd.f32 %v1174, %v1242
        %v1275 = vadd.f32 %v1175, %v1243
        %v1276 = vadd.f32 %v1176, %v1244
        %v1277 = vadd.f32 %v1177, %v1245
        %v1278 = vadd.f32 %v1178, %v1246
        %v1279 = vadd.f32 %v1179, %v1247
        %v1280 = vadd.f32 %v1180, %v1248
        %v1281 = vadd.f32 %v1181, %v1249
        %v1282 = vadd.f32 %v1182, %v1250
        %v1283 = vadd.f32 %v1183, %v1251
        %v1284 = vadd.f32 %v1184, %v1252
        %v1285 = vadd.f32 %v1185, %v1253
        %v1286 = vadd.f32 %v1186, %v1254
        %s1287 = scalar_lea.vmem [#allocation2], 48
        %v1288 = vld [vmem:[%s1287] sm:$0xff]
        %v1289 = vld [vmem:[%s1287 + $0x8] sm:$0xff]
        %v1290 = vld [vmem:[%s1287 + $0x18] sm:$0xff]
        %v1291 = vld [vmem:[%s1287 + $0x20] sm:$0xff]
        %v1292 = vld [vmem:[%s1287 + $0x30] sm:$0xff]
        %v1293 = vld [vmem:[%s1287 + $0x38] sm:$0xff]
        %v1294 = vld [vmem:[%s1287 + $0x48] sm:$0xff]
        %v1295 = vld [vmem:[%s1287 + $0x50] sm:$0xff]
        %v1296 = vld [vmem:[%s1287 + $0x60] sm:$0xff]
        %v1297 = vld [vmem:[%s1287 + $0x68] sm:$0xff]
        %v1298 = vld [vmem:[%s1287 + $0x78] sm:$0xff]
        %v1299 = vld [vmem:[%s1287 + $0x80] sm:$0xff]
        %v1300 = vld [vmem:[%s1287 + $0x90] sm:$0xff]
        %v1301 = vld [vmem:[%s1287 + $0x98] sm:$0xff]
        %v1302 = vld [vmem:[%s1287 + $0xa8] sm:$0xff]
        %v1303 = vld [vmem:[%s1287 + $0xb0] sm:$0xff]
        %v1304 = vld [vmem:[%s1287 + $0xc0] sm:$0xff]
        %v1305 = vld [vmem:[%s1287 + $0xc8] sm:$0xff]
        %v1306 = vld [vmem:[%s1287 + $0xd8] sm:$0xff]
        %v1307 = vld [vmem:[%s1287 + $0xe0] sm:$0xff]
        %v1308 = vld [vmem:[%s1287 + $0xf0] sm:$0xff]
        %v1309 = vld [vmem:[%s1287 + $0xf8] sm:$0xff]
        %v1310 = vld [vmem:[%s1287 + $0x108] sm:$0xff]
        %v1311 = vld [vmem:[%s1287 + $0x110] sm:$0xff]
        %v1312 = vld [vmem:[%s1287 + $0x120] sm:$0xff]
        %v1313 = vld [vmem:[%s1287 + $0x128] sm:$0xff]
        %v1314 = vld [vmem:[%s1287 + $0x138] sm:$0xff]
        %v1315 = vld [vmem:[%s1287 + $0x140] sm:$0xff]
        %v1316 = vld [vmem:[%s1287 + $0x150] sm:$0xff]
        %v1317 = vld [vmem:[%s1287 + $0x158] sm:$0xff]
        %v1318 = vld [vmem:[%s1287 + $0x168] sm:$0xff]
        %v1319 = vld [vmem:[%s1287 + $0x170] sm:$0xff]
        %v1320 = vlaneseq
        %v1321 = vshrl.u32 %v1320, 7
        %v1322 = vsub.s32 6, %v1321
        %v1323 = vrot.slane %v717, %v1322
        %v1324 = vmul.f32 %v1288, %v1323
        %v1325 = vmul.f32 %v1289, %v1323
        %v1326 = vmul.f32 %v1290, %v1323
        %v1327 = vmul.f32 %v1291, %v1323
        %v1328 = vmul.f32 %v1292, %v1323
        %v1329 = vmul.f32 %v1293, %v1323
        %v1330 = vmul.f32 %v1294, %v1323
        %v1331 = vmul.f32 %v1295, %v1323
        %v1332 = vmul.f32 %v1296, %v1323
        %v1333 = vmul.f32 %v1297, %v1323
        %v1334 = vmul.f32 %v1298, %v1323
        %v1335 = vmul.f32 %v1299, %v1323
        %v1336 = vmul.f32 %v1300, %v1323
        %v1337 = vmul.f32 %v1301, %v1323
        %v1338 = vmul.f32 %v1302, %v1323
        %v1339 = vmul.f32 %v1303, %v1323
        %v1340 = vmul.f32 %v1304, %v1323
        %v1341 = vmul.f32 %v1305, %v1323
        %v1342 = vmul.f32 %v1306, %v1323
        %v1343 = vmul.f32 %v1307, %v1323
        %v1344 = vmul.f32 %v1308, %v1323
        %v1345 = vmul.f32 %v1309, %v1323
        %v1346 = vmul.f32 %v1310, %v1323
        %v1347 = vmul.f32 %v1311, %v1323
        %v1348 = vmul.f32 %v1312, %v1323
        %v1349 = vmul.f32 %v1313, %v1323
        %v1350 = vmul.f32 %v1314, %v1323
        %v1351 = vmul.f32 %v1315, %v1323
        %v1352 = vmul.f32 %v1316, %v1323
        %v1353 = vmul.f32 %v1317, %v1323
        %v1354 = vmul.f32 %v1318, %v1323
        %v1355 = vmul.f32 %v1319, %v1323
        %v1356 = vadd.f32 %v1255, %v1324
        %v1357 = vadd.f32 %v1256, %v1325
        %v1358 = vadd.f32 %v1257, %v1326
        %v1359 = vadd.f32 %v1258, %v1327
        %v1360 = vadd.f32 %v1259, %v1328
        %v1361 = vadd.f32 %v1260, %v1329
        %v1362 = vadd.f32 %v1261, %v1330
        %v1363 = vadd.f32 %v1262, %v1331
        %v1364 = vadd.f32 %v1263, %v1332
        %v1365 = vadd.f32 %v1264, %v1333
        %v1366 = vadd.f32 %v1265, %v1334
        %v1367 = vadd.f32 %v1266, %v1335
        %v1368 = vadd.f32 %v1267, %v1336
        %v1369 = vadd.f32 %v1268, %v1337
        %v1370 = vadd.f32 %v1269, %v1338
        %v1371 = vadd.f32 %v1270, %v1339
        %v1372 = vadd.f32 %v1271, %v1340
        %v1373 = vadd.f32 %v1272, %v1341
        %v1374 = vadd.f32 %v1273, %v1342
        %v1375 = vadd.f32 %v1274, %v1343
        %v1376 = vadd.f32 %v1275, %v1344
        %v1377 = vadd.f32 %v1276, %v1345
        %v1378 = vadd.f32 %v1277, %v1346
        %v1379 = vadd.f32 %v1278, %v1347
        %v1380 = vadd.f32 %v1279, %v1348
        %v1381 = vadd.f32 %v1280, %v1349
        %v1382 = vadd.f32 %v1281, %v1350
        %v1383 = vadd.f32 %v1282, %v1351
        %v1384 = vadd.f32 %v1283, %v1352
        %v1385 = vadd.f32 %v1284, %v1353
        %v1386 = vadd.f32 %v1285, %v1354
        %v1387 = vadd.f32 %v1286, %v1355
        %v1388 = vld [vmem:[%s1287 + $0x1] sm:$0xff]
        %v1389 = vld [vmem:[%s1287 + $0x9] sm:$0xff]
        %v1390 = vld [vmem:[%s1287 + $0x19] sm:$0xff]
        %v1391 = vld [vmem:[%s1287 + $0x21] sm:$0xff]
        %v1392 = vld [vmem:[%s1287 + $0x31] sm:$0xff]
        %v1393 = vld [vmem:[%s1287 + $0x39] sm:$0xff]
        %v1394 = vld [vmem:[%s1287 + $0x49] sm:$0xff]
        %v1395 = vld [vmem:[%s1287 + $0x51] sm:$0xff]
        %v1396 = vld [vmem:[%s1287 + $0x61] sm:$0xff]
        %v1397 = vld [vmem:[%s1287 + $0x69] sm:$0xff]
        %v1398 = vld [vmem:[%s1287 + $0x79] sm:$0xff]
        %v1399 = vld [vmem:[%s1287 + $0x81] sm:$0xff]
        %v1400 = vld [vmem:[%s1287 + $0x91] sm:$0xff]
        %v1401 = vld [vmem:[%s1287 + $0x99] sm:$0xff]
        %v1402 = vld [vmem:[%s1287 + $0xa9] sm:$0xff]
        %v1403 = vld [vmem:[%s1287 + $0xb1] sm:$0xff]
        %v1404 = vld [vmem:[%s1287 + $0xc1] sm:$0xff]
        %v1405 = vld [vmem:[%s1287 + $0xc9] sm:$0xff]
        %v1406 = vld [vmem:[%s1287 + $0xd9] sm:$0xff]
        %v1407 = vld [vmem:[%s1287 + $0xe1] sm:$0xff]
        %v1408 = vld [vmem:[%s1287 + $0xf1] sm:$0xff]
        %v1409 = vld [vmem:[%s1287 + $0xf9] sm:$0xff]
        %v1410 = vld [vmem:[%s1287 + $0x109] sm:$0xff]
        %v1411 = vld [vmem:[%s1287 + $0x111] sm:$0xff]
        %v1412 = vld [vmem:[%s1287 + $0x121] sm:$0xff]
        %v1413 = vld [vmem:[%s1287 + $0x129] sm:$0xff]
        %v1414 = vld [vmem:[%s1287 + $0x139] sm:$0xff]
        %v1415 = vld [vmem:[%s1287 + $0x141] sm:$0xff]
        %v1416 = vld [vmem:[%s1287 + $0x151] sm:$0xff]
        %v1417 = vld [vmem:[%s1287 + $0x159] sm:$0xff]
        %v1418 = vld [vmem:[%s1287 + $0x169] sm:$0xff]
        %v1419 = vld [vmem:[%s1287 + $0x171] sm:$0xff]
        %v1420 = vlaneseq
        %v1421 = vshrl.u32 %v1420, 7
        %v1422 = vsub.s32 7, %v1421
        %v1423 = vrot.slane %v717, %v1422
        %v1424 = vmul.f32 %v1388, %v1423
        %v1425 = vmul.f32 %v1389, %v1423
        %v1426 = vmul.f32 %v1390, %v1423
        %v1427 = vmul.f32 %v1391, %v1423
        %v1428 = vmul.f32 %v1392, %v1423
        %v1429 = vmul.f32 %v1393, %v1423
        %v1430 = vmul.f32 %v1394, %v1423
        %v1431 = vmul.f32 %v1395, %v1423
        %v1432 = vmul.f32 %v1396, %v1423
        %v1433 = vmul.f32 %v1397, %v1423
        %v1434 = vmul.f32 %v1398, %v1423
        %v1435 = vmul.f32 %v1399, %v1423
        %v1436 = vmul.f32 %v1400, %v1423
        %v1437 = vmul.f32 %v1401, %v1423
        %v1438 = vmul.f32 %v1402, %v1423
        %v1439 = vmul.f32 %v1403, %v1423
        %v1440 = vmul.f32 %v1404, %v1423
        %v1441 = vmul.f32 %v1405, %v1423
        %v1442 = vmul.f32 %v1406, %v1423
        %v1443 = vmul.f32 %v1407, %v1423
        %v1444 = vmul.f32 %v1408, %v1423
        %v1445 = vmul.f32 %v1409, %v1423
        %v1446 = vmul.f32 %v1410, %v1423
        %v1447 = vmul.f32 %v1411, %v1423
        %v1448 = vmul.f32 %v1412, %v1423
        %v1449 = vmul.f32 %v1413, %v1423
        %v1450 = vmul.f32 %v1414, %v1423
        %v1451 = vmul.f32 %v1415, %v1423
        %v1452 = vmul.f32 %v1416, %v1423
        %v1453 = vmul.f32 %v1417, %v1423
        %v1454 = vmul.f32 %v1418, %v1423
        %v1455 = vmul.f32 %v1419, %v1423
        %v1456 = vadd.f32 %v1356, %v1424
        %v1457 = vadd.f32 %v1357, %v1425
        %v1458 = vadd.f32 %v1358, %v1426
        %v1459 = vadd.f32 %v1359, %v1427
        %v1460 = vadd.f32 %v1360, %v1428
        %v1461 = vadd.f32 %v1361, %v1429
        %v1462 = vadd.f32 %v1362, %v1430
        %v1463 = vadd.f32 %v1363, %v1431
        %v1464 = vadd.f32 %v1364, %v1432
        %v1465 = vadd.f32 %v1365, %v1433
        %v1466 = vadd.f32 %v1366, %v1434
        %v1467 = vadd.f32 %v1367, %v1435
        %v1468 = vadd.f32 %v1368, %v1436
        %v1469 = vadd.f32 %v1369, %v1437
        %v1470 = vadd.f32 %v1370, %v1438
        %v1471 = vadd.f32 %v1371, %v1439
        %v1472 = vadd.f32 %v1372, %v1440
        %v1473 = vadd.f32 %v1373, %v1441
        %v1474 = vadd.f32 %v1374, %v1442
        %v1475 = vadd.f32 %v1375, %v1443
        %v1476 = vadd.f32 %v1376, %v1444
        %v1477 = vadd.f32 %v1377, %v1445
        %v1478 = vadd.f32 %v1378, %v1446
        %v1479 = vadd.f32 %v1379, %v1447
        %v1480 = vadd.f32 %v1380, %v1448
        %v1481 = vadd.f32 %v1381, %v1449
        %v1482 = vadd.f32 %v1382, %v1450
        %v1483 = vadd.f32 %v1383, %v1451
        %v1484 = vadd.f32 %v1384, %v1452
        %v1485 = vadd.f32 %v1385, %v1453
        %v1486 = vadd.f32 %v1386, %v1454
        %v1487 = vadd.f32 %v1387, %v1455
        %v1488 = vld [vmem:[%s1287 + $0x2] sm:$0xff]
        %v1489 = vld [vmem:[%s1287 + $0xa] sm:$0xff]
        %v1490 = vld [vmem:[%s1287 + $0x1a] sm:$0xff]
        %v1491 = vld [vmem:[%s1287 + $0x22] sm:$0xff]
        %v1492 = vld [vmem:[%s1287 + $0x32] sm:$0xff]
        %v1493 = vld [vmem:[%s1287 + $0x3a] sm:$0xff]
        %v1494 = vld [vmem:[%s1287 + $0x4a] sm:$0xff]
        %v1495 = vld [vmem:[%s1287 + $0x52] sm:$0xff]
        %v1496 = vld [vmem:[%s1287 + $0x62] sm:$0xff]
        %v1497 = vld [vmem:[%s1287 + $0x6a] sm:$0xff]
        %v1498 = vld [vmem:[%s1287 + $0x7a] sm:$0xff]
        %v1499 = vld [vmem:[%s1287 + $0x82] sm:$0xff]
        %v1500 = vld [vmem:[%s1287 + $0x92] sm:$0xff]
        %v1501 = vld [vmem:[%s1287 + $0x9a] sm:$0xff]
        %v1502 = vld [vmem:[%s1287 + $0xaa] sm:$0xff]
        %v1503 = vld [vmem:[%s1287 + $0xb2] sm:$0xff]
        %v1504 = vld [vmem:[%s1287 + $0xc2] sm:$0xff]
        %v1505 = vld [vmem:[%s1287 + $0xca] sm:$0xff]
        %v1506 = vld [vmem:[%s1287 + $0xda] sm:$0xff]
        %v1507 = vld [vmem:[%s1287 + $0xe2] sm:$0xff]
        %v1508 = vld [vmem:[%s1287 + $0xf2] sm:$0xff]
        %v1509 = vld [vmem:[%s1287 + $0xfa] sm:$0xff]
        %v1510 = vld [vmem:[%s1287 + $0x10a] sm:$0xff]
        %v1511 = vld [vmem:[%s1287 + $0x112] sm:$0xff]
        %v1512 = vld [vmem:[%s1287 + $0x122] sm:$0xff]
        %v1513 = vld [vmem:[%s1287 + $0x12a] sm:$0xff]
        %v1514 = vld [vmem:[%s1287 + $0x13a] sm:$0xff]
        %v1515 = vld [vmem:[%s1287 + $0x142] sm:$0xff]
        %v1516 = vld [vmem:[%s1287 + $0x152] sm:$0xff]
        %v1517 = vld [vmem:[%s1287 + $0x15a] sm:$0xff]
        %v1518 = vld [vmem:[%s1287 + $0x16a] sm:$0xff]
        %v1519 = vld [vmem:[%s1287 + $0x172] sm:$0xff]
        %v1520 = vlaneseq
        %v1521 = vshrl.u32 %v1520, 7
        %v1522 = vsub.s32 0, %v1521
        %v1523 = vrot.slane %v718, %v1522
        %v1524 = vmul.f32 %v1488, %v1523
        %v1525 = vmul.f32 %v1489, %v1523
        %v1526 = vmul.f32 %v1490, %v1523
        %v1527 = vmul.f32 %v1491, %v1523
        %v1528 = vmul.f32 %v1492, %v1523
        %v1529 = vmul.f32 %v1493, %v1523
        %v1530 = vmul.f32 %v1494, %v1523
        %v1531 = vmul.f32 %v1495, %v1523
        %v1532 = vmul.f32 %v1496, %v1523
        %v1533 = vmul.f32 %v1497, %v1523
        %v1534 = vmul.f32 %v1498, %v1523
        %v1535 = vmul.f32 %v1499, %v1523
        %v1536 = vmul.f32 %v1500, %v1523
        %v1537 = vmul.f32 %v1501, %v1523
        %v1538 = vmul.f32 %v1502, %v1523
        %v1539 = vmul.f32 %v1503, %v1523
        %v1540 = vmul.f32 %v1504, %v1523
        %v1541 = vmul.f32 %v1505, %v1523
        %v1542 = vmul.f32 %v1506, %v1523
        %v1543 = vmul.f32 %v1507, %v1523
        %v1544 = vmul.f32 %v1508, %v1523
        %v1545 = vmul.f32 %v1509, %v1523
        %v1546 = vmul.f32 %v1510, %v1523
        %v1547 = vmul.f32 %v1511, %v1523
        %v1548 = vmul.f32 %v1512, %v1523
        %v1549 = vmul.f32 %v1513, %v1523
        %v1550 = vmul.f32 %v1514, %v1523
        %v1551 = vmul.f32 %v1515, %v1523
        %v1552 = vmul.f32 %v1516, %v1523
        %v1553 = vmul.f32 %v1517, %v1523
        %v1554 = vmul.f32 %v1518, %v1523
        %v1555 = vmul.f32 %v1519, %v1523
        %v1556 = vadd.f32 %v1456, %v1524
        %v1557 = vadd.f32 %v1457, %v1525
        %v1558 = vadd.f32 %v1458, %v1526
        %v1559 = vadd.f32 %v1459, %v1527
        %v1560 = vadd.f32 %v1460, %v1528
        %v1561 = vadd.f32 %v1461, %v1529
        %v1562 = vadd.f32 %v1462, %v1530
        %v1563 = vadd.f32 %v1463, %v1531
        %v1564 = vadd.f32 %v1464, %v1532
        %v1565 = vadd.f32 %v1465, %v1533
        %v1566 = vadd.f32 %v1466, %v1534
        %v1567 = vadd.f32 %v1467, %v1535
        %v1568 = vadd.f32 %v1468, %v1536
        %v1569 = vadd.f32 %v1469, %v1537
        %v1570 = vadd.f32 %v1470, %v1538
        %v1571 = vadd.f32 %v1471, %v1539
        %v1572 = vadd.f32 %v1472, %v1540
        %v1573 = vadd.f32 %v1473, %v1541
        %v1574 = vadd.f32 %v1474, %v1542
        %v1575 = vadd.f32 %v1475, %v1543
        %v1576 = vadd.f32 %v1476, %v1544
        %v1577 = vadd.f32 %v1477, %v1545
        %v1578 = vadd.f32 %v1478, %v1546
        %v1579 = vadd.f32 %v1479, %v1547
        %v1580 = vadd.f32 %v1480, %v1548
        %v1581 = vadd.f32 %v1481, %v1549
        %v1582 = vadd.f32 %v1482, %v1550
        %v1583 = vadd.f32 %v1483, %v1551
        %v1584 = vadd.f32 %v1484, %v1552
        %v1585 = vadd.f32 %v1485, %v1553
        %v1586 = vadd.f32 %v1486, %v1554
        %v1587 = vadd.f32 %v1487, %v1555
        %v1588 = vld [vmem:[%s4] sm:$0x1]
        %v1590 = vlaneseq
        %v1591 = vshrl.u32 %v1590, 7
        %v1592 = vsub.s32 0, %v1591
        %v1593 = vrot.slane %v1588, %v1592
        %v1595 = vadd.f32 %v1556, %v1593
        %v1596 = vadd.f32 %v1557, %v1593
        %v1597 = vadd.f32 %v1558, %v1593
        %v1598 = vadd.f32 %v1559, %v1593
        %v1599 = vadd.f32 %v1560, %v1593
        %v1600 = vadd.f32 %v1561, %v1593
        %v1601 = vadd.f32 %v1562, %v1593
        %v1602 = vadd.f32 %v1563, %v1593
        %v1603 = vadd.f32 %v1564, %v1593
        %v1604 = vadd.f32 %v1565, %v1593
        %v1605 = vadd.f32 %v1566, %v1593
        %v1606 = vadd.f32 %v1567, %v1593
        %v1607 = vadd.f32 %v1568, %v1593
        %v1608 = vadd.f32 %v1569, %v1593
        %v1609 = vadd.f32 %v1570, %v1593
        %v1610 = vadd.f32 %v1571, %v1593
        %v1611 = vadd.f32 %v1572, %v1593
        %v1612 = vadd.f32 %v1573, %v1593
        %v1613 = vadd.f32 %v1574, %v1593
        %v1614 = vadd.f32 %v1575, %v1593
        %v1615 = vadd.f32 %v1576, %v1593
        %v1616 = vadd.f32 %v1577, %v1593
        %v1617 = vadd.f32 %v1578, %v1593
        %v1618 = vadd.f32 %v1579, %v1593
        %v1619 = vadd.f32 %v1580, %v1593
        %v1620 = vadd.f32 %v1581, %v1593
        %v1621 = vadd.f32 %v1582, %v1593
        %v1622 = vadd.f32 %v1583, %v1593
        %v1623 = vadd.f32 %v1584, %v1593
        %v1624 = vadd.f32 %v1585, %v1593
        %v1625 = vadd.f32 %v1586, %v1593
        %v1626 = vadd.f32 %v1587, %v1593
        %v1627 = vmax.f32 %v1595, 0.0
        %v1628 = vmax.f32 %v1596, 0.0
        %v1629 = vmax.f32 %v1597, 0.0
        %v1630 = vmax.f32 %v1598, 0.0
        %v1631 = vmax.f32 %v1599, 0.0
        %v1632 = vmax.f32 %v1600, 0.0
        %v1633 = vmax.f32 %v1601, 0.0
        %v1634 = vmax.f32 %v1602, 0.0
        %v1635 = vmax.f32 %v1603, 0.0
        %v1636 = vmax.f32 %v1604, 0.0
        %v1637 = vmax.f32 %v1605, 0.0
        %v1638 = vmax.f32 %v1606, 0.0
        %v1639 = vmax.f32 %v1607, 0.0
        %v1640 = vmax.f32 %v1608, 0.0
        %v1641 = vmax.f32 %v1609, 0.0
        %v1642 = vmax.f32 %v1610, 0.0
        %v1643 = vmax.f32 %v1611, 0.0
        %v1644 = vmax.f32 %v1612, 0.0
        %v1645 = vmax.f32 %v1613, 0.0
        %v1646 = vmax.f32 %v1614, 0.0
        %v1647 = vmax.f32 %v1615, 0.0
        %v1648 = vmax.f32 %v1616, 0.0
        %v1649 = vmax.f32 %v1617, 0.0
        %v1650 = vmax.f32 %v1618, 0.0
        %v1651 = vmax.f32 %v1619, 0.0
        %v1652 = vmax.f32 %v1620, 0.0
        %v1653 = vmax.f32 %v1621, 0.0
        %v1654 = vmax.f32 %v1622, 0.0
        %v1655 = vmax.f32 %v1623, 0.0
        %v1656 = vmax.f32 %v1624, 0.0
        %v1657 = vmax.f32 %v1625, 0.0
        %v1658 = vmax.f32 %v1626, 0.0
        %v1659 = vmin.f32 %v1627, 6.0
        %v1660 = vmin.f32 %v1628, 6.0
        %v1661 = vmin.f32 %v1629, 6.0
        %v1662 = vmin.f32 %v1630, 6.0
        %v1663 = vmin.f32 %v1631, 6.0
        %v1664 = vmin.f32 %v1632, 6.0
        %v1665 = vmin.f32 %v1633, 6.0
        %v1666 = vmin.f32 %v1634, 6.0
        %v1667 = vmin.f32 %v1635, 6.0
        %v1668 = vmin.f32 %v1636, 6.0
        %v1669 = vmin.f32 %v1637, 6.0
        %v1670 = vmin.f32 %v1638, 6.0
        %v1671 = vmin.f32 %v1639, 6.0
        %v1672 = vmin.f32 %v1640, 6.0
        %v1673 = vmin.f32 %v1641, 6.0
        %v1674 = vmin.f32 %v1642, 6.0
        %v1675 = vmin.f32 %v1643, 6.0
        %v1676 = vmin.f32 %v1644, 6.0
        %v1677 = vmin.f32 %v1645, 6.0
        %v1678 = vmin.f32 %v1646, 6.0
        %v1679 = vmin.f32 %v1647, 6.0
        %v1680 = vmin.f32 %v1648, 6.0
        %v1681 = vmin.f32 %v1649, 6.0
        %v1682 = vmin.f32 %v1650, 6.0
        %v1683 = vmin.f32 %v1651, 6.0
        %v1684 = vmin.f32 %v1652, 6.0
        %v1685 = vmin.f32 %v1653, 6.0
        %v1686 = vmin.f32 %v1654, 6.0
        %v1687 = vmin.f32 %v1655, 6.0
        %v1688 = vmin.f32 %v1656, 6.0
        %v1689 = vmin.f32 %v1657, 6.0
        %v1690 = vmin.f32 %v1658, 6.0
        %v1691 = vpack.c.bf16 %v1660, %v1659
        %v1692 = vpack.c.bf16 %v1662, %v1661
        %v1693 = vpack.c.bf16 %v1664, %v1663
        %v1694 = vpack.c.bf16 %v1666, %v1665
        %v1695 = vpack.c.bf16 %v1668, %v1667
        %v1696 = vpack.c.bf16 %v1670, %v1669
        %v1697 = vpack.c.bf16 %v1672, %v1671
        %v1698 = vpack.c.bf16 %v1674, %v1673
        %v1699 = vpack.c.bf16 %v1676, %v1675
        %v1700 = vpack.c.bf16 %v1678, %v1677
        %v1701 = vpack.c.bf16 %v1680, %v1679
        %v1702 = vpack.c.bf16 %v1682, %v1681
        %v1703 = vpack.c.bf16 %v1684, %v1683
        %v1704 = vpack.c.bf16 %v1686, %v1685
        %v1705 = vpack.c.bf16 %v1688, %v1687
        %v1706 = vpack.c.bf16 %v1690, %v1689
        %v1707 = vld [vmem:[%s5] sm:$0xf]
        %v1708 = vld [vmem:[%s5 + $0x4] sm:$0xf]
        %v1709 = vld [vmem:[%s6] sm:$0x1]
        %v1711 = vlaneseq
        %v1712 = vshrl.u32 %v1711, 7
        %v1713 = vsub.s32 0, %v1712
        %v1714 = vrot.slane %v1709, %v1713
        %v1718 = vunpack.c.l.b16 %v1707
        %v1719 = vunpack.c.l.b16 %v1708
        %v1720 = vpack.c.b16 %v1719, %v1718
        %v1723 = vsel %vm642, %v1691, 0
        %v1726 = vsel %vm642, %v1692, 0
        %v1729 = vsel %vm642, %v1693, 0
        %v1732 = vsel %vm642, %v1694, 0
        %v1735 = vsel %vm642, %v1695, 0
        %v1738 = vsel %vm642, %v1696, 0
        %v1741 = vsel %vm642, %v1697, 0
        %v1744 = vsel %vm642, %v1698, 0
        %v1747 = vsel %vm642, %v1699, 0
        %v1750 = vsel %vm642, %v1700, 0
        %v1753 = vsel %vm642, %v1701, 0
        %v1756 = vsel %vm642, %v1702, 0
        %v1759 = vsel %vm642, %v1703, 0
        %v1762 = vsel %vm642, %v1704, 0
        %v1765 = vsel %vm642, %v1705, 0
        %v1768 = vsel %vm642, %v1706, 0
        %1770 = vmatprep.subr.bf16.mxu0 0
        %1771 = vmatpush1.bf16.msra.mxu0 0
        %1772 = vmatprep.subr.bf16.mxu0 0
        %1773 = vmatpush1.bf16.msra.mxu0 0
        %1774 = vmatprep.subr.bf16.mxu0 0
        %1775 = vmatpush1.bf16.msra.mxu0 0
        %1776 = vmatprep.subr.bf16.mxu0 0
        %1777 = vmatpush1.bf16.msra.mxu0 0
        %1778 = vmatprep.subr.bf16.mxu0 0
        %1779 = vmatpush1.bf16.msra.mxu0 0
        %1780 = vmatprep.subr.bf16.mxu0 0
        %1781 = vmatpush1.bf16.msra.mxu0 0
        %1782 = vmatprep.subr.bf16.mxu0 0
        %1783 = vmatpush1.bf16.msra.mxu0 0
        %1784 = vmatprep.subr.bf16.mxu0 0
        %1785 = vmatpush1.bf16.msra.mxu0 %v1720
        %1786 = vmatprep.subr.bf16.mxu0 0
        %1787 = vmatpush2.bf16.msra.mxu0 0
        %1788 = vmatprep.subr.bf16.mxu0 0
        %1789 = vmatpush2.bf16.msra.mxu0 0
        %1790 = vmatprep.subr.bf16.mxu0 0
        %1791 = vmatpush2.bf16.msra.mxu0 0
        %1792 = vmatprep.subr.bf16.mxu0 0
        %1793 = vmatpush2.bf16.msra.mxu0 0
        %1794 = vmatprep.subr.bf16.mxu0 0
        %1795 = vmatpush2.bf16.msra.mxu0 0
        %1796 = vmatprep.subr.bf16.mxu0 0
        %1797 = vmatpush2.bf16.msra.mxu0 0
        %1798 = vmatprep.subr.bf16.mxu0 0
        %1799 = vmatpush2.bf16.msra.mxu0 0
        %1800 = vmatprep.subr.bf16.mxu0 0
        %1801 = vmatpush2.bf16.msra.mxu0 0
        %1802 = vmatprep.mubr.bf16.mxu0 0
        %1803 = vmatmul.mubr.bf16.gmra.mxu0 %v1723
        %v1804 = vpop.f32.mrf.mxu0
        %v1805 = vadd.f32 %v1714, %v1804
        %v1806 = vpop.f32.mrf.mxu0
        %v1807 = vpop.f32.mrf.mxu0
        %v1808 = vadd.f32 %v1714, %v1807
        %v1809 = vpop.f32.mrf.mxu0
        %1810 = vmatprep.mubr.bf16.mxu0 0
        %1811 = vmatmul.mubr.bf16.gmra.mxu0 %v1726
        %v1812 = vpop.f32.mrf.mxu0
        %v1813 = vadd.f32 %v1714, %v1812
        %v1814 = vpop.f32.mrf.mxu0
        %v1815 = vpop.f32.mrf.mxu0
        %v1816 = vadd.f32 %v1714, %v1815
        %v1817 = vpop.f32.mrf.mxu0
        %1818 = vmatprep.mubr.bf16.mxu0 0
        %1819 = vmatmul.mubr.bf16.gmra.mxu0 %v1729
        %v1820 = vpop.f32.mrf.mxu0
        %v1821 = vadd.f32 %v1714, %v1820
        %v1822 = vpop.f32.mrf.mxu0
        %v1823 = vpop.f32.mrf.mxu0
        %v1824 = vadd.f32 %v1714, %v1823
        %v1825 = vpop.f32.mrf.mxu0
        %1826 = vmatprep.mubr.bf16.mxu0 0
        %1827 = vmatmul.mubr.bf16.gmra.mxu0 %v1732
        %v1828 = vpop.f32.mrf.mxu0
        %v1829 = vadd.f32 %v1714, %v1828
        %v1830 = vpop.f32.mrf.mxu0
        %v1831 = vpop.f32.mrf.mxu0
        %v1832 = vadd.f32 %v1714, %v1831
        %v1833 = vpop.f32.mrf.mxu0
        %1834 = vmatprep.mubr.bf16.mxu0 0
        %1835 = vmatmul.mubr.bf16.gmra.mxu0 %v1735
        %v1836 = vpop.f32.mrf.mxu0
        %v1837 = vadd.f32 %v1714, %v1836
        %v1838 = vpop.f32.mrf.mxu0
        %v1839 = vpop.f32.mrf.mxu0
        %v1840 = vadd.f32 %v1714, %v1839
        %v1841 = vpop.f32.mrf.mxu0
        %1842 = vmatprep.mubr.bf16.mxu0 0
        %1843 = vmatmul.mubr.bf16.gmra.mxu0 %v1738
        %v1844 = vpop.f32.mrf.mxu0
        %v1845 = vadd.f32 %v1714, %v1844
        %v1846 = vpop.f32.mrf.mxu0
        %v1847 = vpop.f32.mrf.mxu0
        %v1848 = vadd.f32 %v1714, %v1847
        %v1849 = vpop.f32.mrf.mxu0
        %1850 = vmatprep.mubr.bf16.mxu0 0
        %1851 = vmatmul.mubr.bf16.gmra.mxu0 %v1741
        %v1852 = vpop.f32.mrf.mxu0
        %v1853 = vadd.f32 %v1714, %v1852
        %v1854 = vpop.f32.mrf.mxu0
        %v1855 = vpop.f32.mrf.mxu0
        %v1856 = vadd.f32 %v1714, %v1855
        %v1857 = vpop.f32.mrf.mxu0
        %1858 = vmatprep.mubr.bf16.mxu0 0
        %1859 = vmatmul.mubr.bf16.gmra.mxu0 %v1744
        %v1860 = vpop.f32.mrf.mxu0
        %v1861 = vadd.f32 %v1714, %v1860
        %v1862 = vpop.f32.mrf.mxu0
        %v1863 = vpop.f32.mrf.mxu0
        %v1864 = vadd.f32 %v1714, %v1863
        %v1865 = vpop.f32.mrf.mxu0
        %1866 = vmatprep.mubr.bf16.mxu0 0
        %1867 = vmatmul.mubr.bf16.gmra.mxu0 %v1747
        %v1868 = vpop.f32.mrf.mxu0
        %v1869 = vadd.f32 %v1714, %v1868
        %v1870 = vpop.f32.mrf.mxu0
        %v1871 = vpop.f32.mrf.mxu0
        %v1872 = vadd.f32 %v1714, %v1871
        %v1873 = vpop.f32.mrf.mxu0
        %1874 = vmatprep.mubr.bf16.mxu0 0
        %1875 = vmatmul.mubr.bf16.gmra.mxu0 %v1750
        %v1876 = vpop.f32.mrf.mxu0
        %v1877 = vadd.f32 %v1714, %v1876
        %v1878 = vpop.f32.mrf.mxu0
        %v1879 = vpop.f32.mrf.mxu0
        %v1880 = vadd.f32 %v1714, %v1879
        %v1881 = vpop.f32.mrf.mxu0
        %1882 = vmatprep.mubr.bf16.mxu0 0
        %1883 = vmatmul.mubr.bf16.gmra.mxu0 %v1753
        %v1884 = vpop.f32.mrf.mxu0
        %v1885 = vadd.f32 %v1714, %v1884
        %v1886 = vpop.f32.mrf.mxu0
        %v1887 = vpop.f32.mrf.mxu0
        %v1888 = vadd.f32 %v1714, %v1887
        %v1889 = vpop.f32.mrf.mxu0
        %1890 = vmatprep.mubr.bf16.mxu0 0
        %1891 = vmatmul.mubr.bf16.gmra.mxu0 %v1756
        %v1892 = vpop.f32.mrf.mxu0
        %v1893 = vadd.f32 %v1714, %v1892
        %v1894 = vpop.f32.mrf.mxu0
        %v1895 = vpop.f32.mrf.mxu0
        %v1896 = vadd.f32 %v1714, %v1895
        %v1897 = vpop.f32.mrf.mxu0
        %1898 = vmatprep.mubr.bf16.mxu0 0
        %1899 = vmatmul.mubr.bf16.gmra.mxu0 %v1759
        %v1900 = vpop.f32.mrf.mxu0
        %v1901 = vadd.f32 %v1714, %v1900
        %v1902 = vpop.f32.mrf.mxu0
        %v1903 = vpop.f32.mrf.mxu0
        %v1904 = vadd.f32 %v1714, %v1903
        %v1905 = vpop.f32.mrf.mxu0
        %1906 = vmatprep.mubr.bf16.mxu0 0
        %1907 = vmatmul.mubr.bf16.gmra.mxu0 %v1762
        %v1908 = vpop.f32.mrf.mxu0
        %v1909 = vadd.f32 %v1714, %v1908
        %v1910 = vpop.f32.mrf.mxu0
        %v1911 = vpop.f32.mrf.mxu0
        %v1912 = vadd.f32 %v1714, %v1911
        %v1913 = vpop.f32.mrf.mxu0
        %1914 = vmatprep.mubr.bf16.mxu0 0
        %1915 = vmatmul.mubr.bf16.gmra.mxu0 %v1765
        %v1916 = vpop.f32.mrf.mxu0
        %v1917 = vadd.f32 %v1714, %v1916
        %v1918 = vpop.f32.mrf.mxu0
        %v1919 = vpop.f32.mrf.mxu0
        %v1920 = vadd.f32 %v1714, %v1919
        %v1921 = vpop.f32.mrf.mxu0
        %1922 = vmatprep.mubr.bf16.mxu0 0
        %1923 = vmatmul.mubr.bf16.gmra.mxu0 %v1768
        %v1924 = vpop.f32.mrf.mxu0
        %v1925 = vadd.f32 %v1714, %v1924
        %v1926 = vpop.f32.mrf.mxu0
        %v1927 = vpop.f32.mrf.mxu0
        %v1928 = vadd.f32 %v1714, %v1927
        %v1929 = vpop.f32.mrf.mxu0
        %1930 = vdwg.mxu0
        %v1931 = vadd.f32 %v1805, %v298
        %v1932 = vadd.f32 %v1808, %v299
        %v1933 = vadd.f32 %v1813, %v300
        %v1934 = vadd.f32 %v1816, %v301
        %v1935 = vadd.f32 %v1821, %v302
        %v1936 = vadd.f32 %v1824, %v303
        %v1937 = vadd.f32 %v1829, %v304
        %v1938 = vadd.f32 %v1832, %v305
        %v1939 = vadd.f32 %v1837, %v306
        %v1940 = vadd.f32 %v1840, %v307
        %v1941 = vadd.f32 %v1845, %v308
        %v1942 = vadd.f32 %v1848, %v309
        %v1943 = vadd.f32 %v1853, %v310
        %v1944 = vadd.f32 %v1856, %v311
        %v1945 = vadd.f32 %v1861, %v312
        %v1946 = vadd.f32 %v1864, %v313
        %v1947 = vadd.f32 %v1869, %v314
        %v1948 = vadd.f32 %v1872, %v315
        %v1949 = vadd.f32 %v1877, %v316
        %v1950 = vadd.f32 %v1880, %v317
        %v1951 = vadd.f32 %v1885, %v318
        %v1952 = vadd.f32 %v1888, %v319
        %v1953 = vadd.f32 %v1893, %v320
        %v1954 = vadd.f32 %v1896, %v321
        %v1955 = vadd.f32 %v1901, %v322
        %v1956 = vadd.f32 %v1904, %v323
        %v1957 = vadd.f32 %v1909, %v324
        %v1958 = vadd.f32 %v1912, %v325
        %v1959 = vadd.f32 %v1917, %v326
        %v1960 = vadd.f32 %v1920, %v327
        %v1961 = vadd.f32 %v1925, %v328
        %v1962 = vadd.f32 %v1928, %v329
        %1963 = vst [vmem:[%s296] sm:$0xff] %v1931
        %1964 = vst [vmem:[%s296 + $0x8] sm:$0xff] %v1932
        %1965 = vst [vmem:[%s296 + $0x10] sm:$0xff] %v1933
        %1966 = vst [vmem:[%s296 + $0x18] sm:$0xff] %v1934
        %1967 = vst [vmem:[%s296 + $0x20] sm:$0xff] %v1935
        %1968 = vst [vmem:[%s296 + $0x28] sm:$0xff] %v1936
        %1969 = vst [vmem:[%s296 + $0x30] sm:$0xff] %v1937
        %1970 = vst [vmem:[%s296 + $0x38] sm:$0xff] %v1938
        %1971 = vst [vmem:[%s296 + $0x40] sm:$0xff] %v1939
        %1972 = vst [vmem:[%s296 + $0x48] sm:$0xff] %v1940
        %1973 = vst [vmem:[%s296 + $0x50] sm:$0xff] %v1941
        %1974 = vst [vmem:[%s296 + $0x58] sm:$0xff] %v1942
        %1975 = vst [vmem:[%s296 + $0x60] sm:$0xff] %v1943
        %1976 = vst [vmem:[%s296 + $0x68] sm:$0xff] %v1944
        %1977 = vst [vmem:[%s296 + $0x70] sm:$0xff] %v1945
        %1978 = vst [vmem:[%s296 + $0x78] sm:$0xff] %v1946
        %1979 = vst [vmem:[%s296 + $0x80] sm:$0xff] %v1947
        %1980 = vst [vmem:[%s296 + $0x88] sm:$0xff] %v1948
        %1981 = vst [vmem:[%s296 + $0x90] sm:$0xff] %v1949
        %1982 = vst [vmem:[%s296 + $0x98] sm:$0xff] %v1950
        %1983 = vst [vmem:[%s296 + $0xa0] sm:$0xff] %v1951
        %1984 = vst [vmem:[%s296 + $0xa8] sm:$0xff] %v1952
        %1985 = vst [vmem:[%s296 + $0xb0] sm:$0xff] %v1953
        %1986 = vst [vmem:[%s296 + $0xb8] sm:$0xff] %v1954
        %1987 = vst [vmem:[%s296 + $0xc0] sm:$0xff] %v1955
        %1988 = vst [vmem:[%s296 + $0xc8] sm:$0xff] %v1956
        %1989 = vst [vmem:[%s296 + $0xd0] sm:$0xff] %v1957
        %1990 = vst [vmem:[%s296 + $0xd8] sm:$0xff] %v1958
        %1991 = vst [vmem:[%s296 + $0xe0] sm:$0xff] %v1959
        %1992 = vst [vmem:[%s296 + $0xe8] sm:$0xff] %v1960
        %1993 = vst [vmem:[%s296 + $0xf0] sm:$0xff] %v1961
        %1994 = vst [vmem:[%s296 + $0xf8] sm:$0xff] %v1962
        %s1995 = sand.u32 %s184, 1
        %s1996 = scalar_lea.sflag [#allocation5], %s1995
        %s1997 = sand.u32 %s184, 1
        %s1998 = smul.addr %s1997, 256
        %s1999 = scalar_lea.vmem [#allocation6], %s1998
        // Predicated region
        $region53: #{tpu_custom_call.1} parent=47 // pred_check
          %p2000 = pneg %p194
        $region54: #{tpu_custom_call.1} parent=47 // pred_check_branch
          %2002 = sbr.rel (%p2000) target = $region56
        $region55: #{tpu_custom_call.1} parent=47 // pred_region
          %s2004 = ssub.s32 4096, 4096
          %2005 = vsyncadd %s1996, %s2004
          %s2006 = smul.addr %s24, 32
          %s2007 = smul.addr %s2006, 128
          %s2008 = scalar_lea.hbm %s7, %s2007
          %s2009 = sshll.u32 %s1999, 4
          %s2010 = int_to_ptr.vmem [resolvable:$true] %s2009
          %2015 = dma.vmem_to_hbm [thread:$0]  %s2010, 4096, %s2008, %s1996, 128, 128, 8
        $region56: #{tpu_custom_call.1} parent=47 // pred_fallthru
          _
      $region48: #{tpu_custom_call.1} parent=5 // pred_fallthru
        _
      %p2016 = scmp.le.s32.totalorder 2, %s19
      // Predicated region
      $region57: #{tpu_custom_call.1} parent=5 // pred_check
        %p2017 = pneg %p2016
      $region58: #{tpu_custom_call.1} parent=5 // pred_check_branch
        %2019 = sbr.rel (%p2017) target = $region60
      $region59: #{tpu_custom_call.1} parent=5 // pred_region
        %s2020 = ssub.s32 %s19, 2
        // Predicated region
        $region61: #{tpu_custom_call.1} parent=59 // pred_check
          %p2021 = pneg %p200
        $region62: #{tpu_custom_call.1} parent=59 // pred_check_branch
          %2023 = sbr.rel (%p2021) target = $region64
        $region63: #{tpu_custom_call.1} parent=59 // pred_region
          %s2024 = sand.u32 %s185, 1
          %s2025 = scalar_lea.sflag [#allocation5], %s2024
          %s2026 = sand.u32 %s185, 1
          %s2027 = smul.addr %s2026, 256
          %s2028 = scalar_lea.vmem [#allocation6], %s2027
          %2029 = dma.done %s2025, 4096
        $region64: #{tpu_custom_call.1} parent=59 // pred_fallthru
          _
      $region60: #{tpu_custom_call.1} parent=5 // pred_fallthru
        _
    $region6: #{tpu_custom_call.1} parent=1 // loop_footer
      %s23 = sadd.s32 1, %s19
    $region7: #{tpu_custom_call.1} parent=1 // loop_footer_branch
      %18 = sbr.rel target = $region3
    $region8: #{tpu_custom_call.1} parent=1 // loop_exit
      _
    %2030 = vsyncpa [#allocation4], 1
    %s2031 = scalar_lea.sflag [#allocation4], 1
    %2032 = vsyncpa %s2031, 1
    %2033 = vsyncpa [#allocation5], 1
    %s2034 = scalar_lea.sflag [#allocation5], 1
    %2035 = vsyncpa %s2034, 1

</llo_original>
